<compile_context>
chip_gen: v6e
topology: v6e:2x2x1
jax: 0.10.0
libtpu: 0.0.40
codegen_flags: <defaults>
</compile_context>

<pallas_src>
import functools

import jax
import jax.numpy as jnp
from jax import lax
from jax.experimental import pallas as pl
from jax.experimental.pallas import tpu as pltpu


# ----------------------------------------------------------------------------
# helpers
# ----------------------------------------------------------------------------
def _pick_tile(dim, candidates):
    for c in candidates:
        if dim % c == 0:
            return c
    return dim


def _compiler_params(dimension_semantics):
    kwargs = dict(dimension_semantics=dimension_semantics)
    try:
        cap = pltpu.get_tpu_info().vmem_capacity_bytes
        kwargs["vmem_limit_bytes"] = int(cap * 3 // 4)   # ~96MiB v5e/v6e, ~48MiB v7x
    except Exception:
        pass                                             # fall back to default limit
    return pltpu.CompilerParams(**kwargs)


# ----------------------------------------------------------------------------
# Kernel 1: hoisted input projection  gates = sum_i x_i @ w_i + bias  (bf16 out)
# ----------------------------------------------------------------------------
def _proj_kernel(n_in, *refs):
    x_refs = refs[:n_in]
    w_refs = refs[n_in:2 * n_in]
    b_ref = refs[2 * n_in]
    o_ref = refs[2 * n_in + 1]
    acc = jnp.dot(x_refs[0][...], w_refs[0][...],
                  preferred_element_type=jnp.float32)
    for xr, wr in zip(x_refs[1:], w_refs[1:]):
        acc = acc + jnp.dot(xr[...], wr[...], preferred_element_type=jnp.float32)
    o_ref[...] = (acc + b_ref[...]).astype(o_ref.dtype)


def input_projection(xs, ws, bias):
    """Tiled (tm, tn) grid; biases folded; bf16 gate pre-activations to HBM."""
    M = xs[0].shape[0]
    N = ws[0].shape[1]
    tm = _pick_tile(M, (512, 256, 128, 64, 32, 16, 8))
    tn = _pick_tile(N, (512, 256, 128))
    n_in = len(xs)
    in_specs = (
        [pl.BlockSpec((tm, x.shape[1]), lambda i, j: (i, 0)) for x in xs]
        + [pl.BlockSpec((w.shape[0], tn), lambda i, j: (0, j)) for w in ws]
        + [pl.BlockSpec((1, tn), lambda i, j: (0, j))])
    return pl.pallas_call(
        functools.partial(_proj_kernel, n_in),
        out_shape=jax.ShapeDtypeStruct((M, N), jnp.bfloat16),
        grid=(M // tm, N // tn),
        in_specs=in_specs,
        out_specs=pl.BlockSpec((tm, tn), lambda i, j: (i, j)),
        compiler_params=_compiler_params(("parallel", "parallel")),
    )(*xs, *ws, bias)


# ----------------------------------------------------------------------------
# Kernel 2: bidirectional LSTM recurrence, grid over time
# ----------------------------------------------------------------------------
def _rev_block(t, ml_ref):
    # Reverse-direction block index: maxlen-1-t for the real steps; for
    # t >= maxlen fall back to t so every output block is visited exactly once
    # (those blocks are zero-filled by the kernel).
    rev = ml_ref[0] - 1 - t
    return jnp.where(rev >= 0, rev, t)


def _bilstm_rec_kernel(ml_ref, lens_ref, xf_ref, xb_ref, wh_ref,
                       out_f_ref, out_b_ref, h_sc, c_sc):
    """One grid step = one timestep for BOTH directions.

    ml_ref   : (1,)      int32 SMEM  max(lengths)            (scalar prefetch)
    lens_ref : (Bp, 1)   int32 VMEM  per-example lengths     (resident)
    xf_ref   : (Bp, 4H)  bf16        fwd gate pre-acts at time t
    xb_ref   : (Bp, 4H)  bf16        bwd gate pre-acts at time maxlen-1-t
    wh_ref   : (H, 8H)   bf16        [Whh_fwd | Whh_bwd]     (resident)
    out_f/b  : (Bp, H)   bf16        per-direction outputs (lane-dense)
    h_sc/c_sc: (2Bp, H)  f32         carries, rows [:Bp]=fwd, [Bp:]=bwd
    """
    t = pl.program_id(0)
    maxlen = ml_ref[0]
    B, H4 = xf_ref.shape
    H = H4 // 4
    # NOTE: pick H as a multiple of 128 at production sizes so gate slices and
    # the H-wide stores fall on lane-tile boundaries.

    @pl.when(t == 0)
    def _init():
        h_sc[...] = jnp.zeros_like(h_sc)
        c_sc[...] = jnp.zeros_like(c_sc)

    @pl.when(t < maxlen)
    def _step():
        lens = lens_ref[...]                                      # (B, 1)
        h_all = h_sc[...]                                         # (2B, H) f32
        c_all = c_sc[...]
        # single fused recurrent matmul for both directions (one MXU issue)
        g_rec = jnp.dot(h_all.astype(jnp.bfloat16), wh_ref[...],
                        preferred_element_type=jnp.float32)       # (2B, 8H)
        gf = xf_ref[...].astype(jnp.float32) + g_rec[0:B, 0:H4]
        gb = xb_ref[...].astype(jnp.float32) + g_rec[B:2 * B, H4:2 * H4]
        g = jnp.concatenate([gf, gb], axis=0)                     # (2B, 4H)

        i_g = jax.nn.sigmoid(g[:, 0:H])
        f_g = jax.nn.sigmoid(g[:, H:2 * H])
        g_g = jnp.tanh(g[:, 2 * H:3 * H])
        o_g = jax.nn.sigmoid(g[:, 3 * H:4 * H])
        c_new = f_g * c_all + i_g * g_g
        h_new = o_g * jnp.tanh(c_new)

        tb = maxlen - 1 - t
        mf = t < lens                                             # (B, 1) bool
        mb = tb < lens
        m = jnp.concatenate([mf, mb], axis=0)                     # (2B, 1)

        h_sc[...] = jnp.where(m, h_new, h_all)                    # packed-seq freeze
        c_sc[...] = jnp.where(m, c_new, c_all)
        out_f_ref[...] = jnp.where(mf, h_new[0:B], 0.0).astype(out_f_ref.dtype)
        out_b_ref[...] = jnp.where(mb, h_new[B:2 * B], 0.0).astype(out_b_ref.dtype)

    @pl.when(t >= maxlen)
    def _pad():
        out_f_ref[...] = jnp.zeros_like(out_f_ref)
        out_b_ref[...] = jnp.zeros_like(out_b_ref)


def bilstm_recurrence(xg, lens_b1, maxlen_1, whfb):
    # TODO(synk): for v7x megacore, split the batch (or fwd/bwd) across the two
    #             TensorCores via core_map; the time axis itself is sequential.
    # TODO(synk): time-chunked blocks (Ct timesteps per grid step) would
    #             amortize the ~0.35us/step grid overhead further.
    TB = xg.shape[0]
    Bp = lens_b1.shape[0]
    T = TB // Bp
    H = whfb.shape[0]
    grid_spec = pltpu.PrefetchScalarGridSpec(
        num_scalar_prefetch=1,
        grid=(T,),
        in_specs=[
            pl.BlockSpec((Bp, 1), lambda t, ml: (0, 0)),                 # lengths
            pl.BlockSpec((Bp, 4 * H), lambda t, ml: (t, 0)),             # fwd gates
            pl.BlockSpec((Bp, 4 * H), lambda t, ml: (_rev_block(t, ml), 1)),  # bwd
            pl.BlockSpec((H, 8 * H), lambda t, ml: (0, 0)),              # Whh (res.)
        ],
        out_specs=[
            pl.BlockSpec((Bp, H), lambda t, ml: (t, 0)),                 # fwd out
            pl.BlockSpec((Bp, H), lambda t, ml: (_rev_block(t, ml), 0)),  # bwd out
        ],
        scratch_shapes=[pltpu.VMEM((2 * Bp, H), jnp.float32),
                        pltpu.VMEM((2 * Bp, H), jnp.float32)],
    )
    return pl.pallas_call(
        _bilstm_rec_kernel,
        grid_spec=grid_spec,
        out_shape=(jax.ShapeDtypeStruct((TB, H), jnp.bfloat16),
                   jax.ShapeDtypeStruct((TB, H), jnp.bfloat16)),
        compiler_params=_compiler_params(("arbitrary",)),
    )(maxlen_1, lens_b1, xg, xg, whfb)


# ----------------------------------------------------------------------------
# Kernel 3: attention (T-tiled online softmax) + folded-BN MLP head
# ----------------------------------------------------------------------------
def _head_kernel(ml_ref, of_ref, ob_ref, waf_ref, wab_ref, ba_ref,
                 w1f_ref, w1b_ref, b1_ref, w2_ref, b2_ref,
                 o_ref, m_sc, l_sc, cf_sc, cb_sc):
    tau = pl.program_id(0)
    n_tiles = pl.num_programs(0)
    Tt, B, H = of_ref.shape
    maxlen = ml_ref[0]

    @pl.when(tau == 0)
    def _init():
        m_sc[...] = jnp.full_like(m_sc, -1e30)
        l_sc[...] = jnp.zeros_like(l_sc)
        cf_sc[...] = jnp.zeros_like(cf_sc)
        cb_sc[...] = jnp.zeros_like(cb_sc)

    @pl.when(tau * Tt < maxlen)                     # skip tiles fully past maxlen
    def _accumulate():
        of = of_ref[...].astype(jnp.float32)        # (Tt, B, H)
        ob = ob_ref[...].astype(jnp.float32)
        waf = waf_ref[...].reshape(1, 1, H)
        wab = wab_ref[...].reshape(1, 1, H)
        # attention scores (f32), bias-only at padded-but-valid positions
        s = (jnp.sum(of * waf, axis=-1) + jnp.sum(ob * wab, axis=-1)
             + ba_ref[...])                         # (Tt, B)
        t_idx = tau * Tt + lax.broadcasted_iota(jnp.int32, (Tt, B), 0)
        s = jnp.where(t_idx < maxlen, s, -1e30)     # softmax only over maxlen steps

        m_old = m_sc[...]                           # (1, B)
        blk_max = jnp.max(s, axis=0, keepdims=True)
        m_new = jnp.maximum(m_old, blk_max)
        alpha = jnp.exp(m_old - m_new)              # (1, B)
        p = jnp.exp(s - m_new)                      # (Tt, B)
        l_sc[...] = alpha * l_sc[...] + jnp.sum(p, axis=0, keepdims=True)
        a_col = jnp.transpose(alpha)                # (B, 1)
        pw = p[:, :, None]
        cf_sc[...] = a_col * cf_sc[...] + jnp.sum(pw * of, axis=0)
        cb_sc[...] = a_col * cb_sc[...] + jnp.sum(pw * ob, axis=0)
        m_sc[...] = m_new

    @pl.when(tau == n_tiles - 1)
    def _finalize():
        inv_l = jnp.transpose(1.0 / l_sc[...])      # exact softmax normalization
        ctx_f = cf_sc[...] * inv_l                  # (B, H)
        ctx_b = cb_sc[...] * inv_l
        # bn1 folded into w1/b1; bn2 folded into w2/b2 (eval-mode running stats)
        h1 = (jnp.dot(ctx_f, w1f_ref[...], preferred_element_type=jnp.float32)
              + jnp.dot(ctx_b, w1b_ref[...], preferred_element_type=jnp.float32)
              + b1_ref[...])
        h1 = jnp.maximum(h1, 0.0)
        o_ref[...] = (jnp.dot(h1, w2_ref[...], preferred_element_type=jnp.float32)
                      + b2_ref[...])


def attention_head(out_f3, out_b3, maxlen_1, watt_f, watt_b, batt,
                   w1f, w1b, b1, w2, b2):
    T, Bp, H = out_f3.shape
    O = w2.shape[1]
    Tt = _pick_tile(T, (128, 64, 32, 16, 8, 4, 2, 1))
    c2 = lambda t, ml: (0, 0)
    grid_spec = pltpu.PrefetchScalarGridSpec(
        num_scalar_prefetch=1,
        grid=(T // Tt,),
        in_specs=[
            pl.BlockSpec((Tt, Bp, H), lambda t, ml: (t, 0, 0)),
            pl.BlockSpec((Tt, Bp, H), lambda t, ml: (t, 0, 0)),
            pl.BlockSpec((1, H), c2),
            pl.BlockSpec((1, H), c2),
            pl.BlockSpec((1, 1), c2),
            pl.BlockSpec((H, H), c2),
            pl.BlockSpec((H, H), c2),
            pl.BlockSpec((1, H), c2),
            pl.BlockSpec((H, O), c2),
            pl.BlockSpec((1, O), c2),
        ],
        out_specs=pl.BlockSpec((Bp, O), c2),
        scratch_shapes=[pltpu.VMEM((1, Bp), jnp.float32),   # running max
                        pltpu.VMEM((1, Bp), jnp.float32),   # running denom
                        pltpu.VMEM((Bp, H), jnp.float32),   # fwd context acc
                        pltpu.VMEM((Bp, H), jnp.float32)],  # bwd context acc
    )
    return pl.pallas_call(
        _head_kernel,
        grid_spec=grid_spec,
        out_shape=jax.ShapeDtypeStruct((Bp, O), jnp.float32),
        compiler_params=_compiler_params(("arbitrary",)),
    )(maxlen_1, out_f3, out_b3, watt_f, watt_b, batt, w1f, w1b, b1, w2, b2)


# ----------------------------------------------------------------------------
# Parameter init (deterministic, PyTorch-equivalent shapes, pre-transposed;
# LSTM weights & embedding stored bf16 for the MXU; biases/BN/head in f32)
# ----------------------------------------------------------------------------
def init_params(key, vocab_size, embed_dim, hidden_dim, pad_idx, output_dim):
    keys = iter(jax.random.split(key, 48))

    def nrm(shape, scale=0.1):
        return (scale * jax.random.normal(next(keys), shape)).astype(jnp.float32)

    H = hidden_dim
    emb = nrm((vocab_size, embed_dim)).at[pad_idx].set(0.0).astype(jnp.bfloat16)

    def lstm_dir(in_dim):
        w_ih = nrm((4 * H, in_dim))                 # torch weight_ih
        w_hh = nrm((4 * H, H))                      # torch weight_hh
        b = nrm((4 * H,)) + nrm((4 * H,))           # b_ih + b_hh
        return jnp.transpose(w_ih), jnp.transpose(w_hh), b

    def layer_params(in_dim, split_input):
        wif, whf, bf = lstm_dir(in_dim)
        wib, whb, bb = lstm_dir(in_dim)
        wih = jnp.concatenate([wif, wib], axis=1).astype(jnp.bfloat16)   # (Din,8H)
        whfb = jnp.concatenate([whf, whb], axis=1).astype(jnp.bfloat16)  # (H, 8H)
        bias = jnp.concatenate([bf, bb]).reshape(1, 8 * H)               # f32
        d = dict(whfb=whfb, bias=bias)
        if split_input:   # layer-1 input is [fwd | bwd]; split rows, no concat pass
            d["wih_f"] = wih[:in_dim // 2]
            d["wih_b"] = wih[in_dim // 2:]
        else:
            d["wih"] = wih
        return d

    lstm0 = layer_params(embed_dim, split_input=False)
    lstm1 = layer_params(2 * H, split_input=True)

    headp = dict(
        watt=nrm((1, 2 * H)), batt=nrm((1, 1)),
        g1=1.0 + nrm((2 * H,)), be1=nrm((2 * H,)),
        m1=nrm((2 * H,)), v1=jnp.abs(nrm((2 * H,))) + 1.0,
        w1=nrm((2 * H, H)), b1=nrm((H,)),
        g2=1.0 + nrm((H,)), be2=nrm((H,)),
        m2=nrm((H,)), v2=jnp.abs(nrm((H,))) + 1.0,
        w2=nrm((H, output_dim)), b2=nrm((output_dim,)),
    )
    return dict(embedding=emb, lstm0=lstm0, lstm1=lstm1, head=headp)


# ----------------------------------------------------------------------------
# Full forward
# ----------------------------------------------------------------------------
@jax.jit
def improved_bilstm_forward(text, lengths, params):
    B, T = text.shape
    Bp = ((B + 15) // 16) * 16                    # 16-row bf16 sublane packing
    if Bp != B:
        text = jnp.pad(text, ((0, Bp - B), (0, 0)))   # padded rows: length 0
        lengths = jnp.pad(lengths, (0, Bp - B))

    H = params["lstm0"]["whfb"].shape[0]

    # time-major bf16 embedding gather (tiny int transpose first); dropout=id
    tokens_tm = jnp.transpose(text)                              # (T, Bp) int32
    emb = jnp.take(params["embedding"], tokens_tm, axis=0)       # (T, Bp, E) bf16
    x2d = emb.reshape(T * Bp, -1)                                # row = t*Bp + b

    lens_b1 = lengths.astype(jnp.int32).reshape(Bp, 1)
    maxlen_1 = jnp.max(lengths).astype(jnp.int32).reshape(1,)

    # layer 0
    p0 = params["lstm0"]
    xg0 = input_projection([x2d], [p0["wih"]], p0["bias"])       # (T*Bp, 8H) bf16
    f0, b0 = bilstm_recurrence(xg0, lens_b1, maxlen_1, p0["whfb"])

    # layer 1 (inter-layer dropout = identity in eval mode)
    # TODO(synk): fuse the layer handoff / head into one pallas_call when the
    #             working set fits VMEM to save the HBM round trips.
    p1 = params["lstm1"]
    xg1 = input_projection([f0, b0], [p1["wih_f"], p1["wih_b"]], p1["bias"])
    f1, b1 = bilstm_recurrence(xg1, lens_b1, maxlen_1, p1["whfb"])

    # fold eval-mode BatchNorms into the adjacent Linears (exact eval math)
    hp = params["head"]
    eps = 1e-5
    s1 = hp["g1"] * lax.rsqrt(hp["v1"] + eps)
    t1 = hp["be1"] - hp["m1"] * s1
    w1_eff = hp["w1"] * s1[:, None]
    b1_eff = (hp["b1"] + t1 @ hp["w1"]).reshape(1, H)
    s2 = hp["g2"] * lax.rsqrt(hp["v2"] + eps)
    t2 = hp["be2"] - hp["m2"] * s2
    w2_eff = hp["w2"] * s2[:, None]
    b2_eff = (hp["b2"] + t2 @ hp["w2"]).reshape(1, -1)

    logits = attention_head(
        f1.reshape(T, Bp, H), b1.reshape(T, Bp, H), maxlen_1,
        hp["watt"][:, :H], hp["watt"][:, H:], hp["batt"],
        w1_eff[:H], w1_eff[H:], b1_eff, w2_eff, b2_eff)
    return logits[:B]


if __name__ == "__main__":
    vocab_size, embed_dim, hidden_dim, pad_idx, output_dim = 50, 32, 32, 0, 4
    B, T = 2, 8

    key = jax.random.PRNGKey(0)
    k_par, k_txt = jax.random.split(key)

    params = init_params(k_par, vocab_size, embed_dim, hidden_dim, pad_idx,
                         output_dim)

    lengths = jnp.array([8, 5], dtype=jnp.int32)                 # max(lengths) == T
    text = jax.random.randint(k_txt, (B, T), 1, vocab_size, dtype=jnp.int32)
    t_idx = jnp.arange(T)[None, :]
    text = jnp.where(t_idx < lengths[:, None], text, pad_idx)    # pad tail tokens

    logits = improved_bilstm_forward(text, lengths, params)
    jax.block_until_ready(logits)

    assert logits.shape == (B, output_dim)
    assert bool(jnp.all(jnp.isfinite(logits)))
    print("KERNEL_OK")
</pallas_src>

<mosaic_0001>
module attributes {stable_mosaic.version = 11 : i64} {
  func.func @_proj_kernel(%arg0: i32, %arg1: i32, %arg2: memref<128x32xbf16, #tpu.memory_space<vmem>>, %arg3: memref<32x256xbf16, #tpu.memory_space<vmem>>, %arg4: memref<1x256xf32, #tpu.memory_space<vmem>>, %arg5: memref<128x256xbf16, #tpu.memory_space<vmem>>) attributes {dimension_semantics = [#tpu.dimension_semantics<parallel>, #tpu.dimension_semantics<parallel>], iteration_bounds = array<i64: 1, 1>, scalar_prefetch = 0 : i64, scratch_operands = 0 : i64, tpu.core_type = #tpu.core_type<tc>, window_params = [{transform_indices = @transform_0, window_bounds = array<i64: 128, 32>}, {transform_indices = @transform_1, window_bounds = array<i64: 32, 256>}, {transform_indices = @transform_2, window_bounds = array<i64: 1, 256>}, {transform_indices = @transform_3, window_bounds = array<i64: 128, 256>}]} {
    %c0 = arith.constant 0 : index
    %c0_0 = arith.constant 0 : index
    %0 = vector.load %arg2[%c0, %c0_0] : memref<128x32xbf16, #tpu.memory_space<vmem>>, vector<128x32xbf16>
    %c0_1 = arith.constant 0 : index
    %c0_2 = arith.constant 0 : index
    %1 = vector.load %arg3[%c0_1, %c0_2] : memref<32x256xbf16, #tpu.memory_space<vmem>>, vector<32x256xbf16>
    %cst = arith.constant dense<0.000000e+00> : vector<128x256xf32>
    %2 = tpu.matmul %0, %1, %cst {dimension_numbers = #tpu.dot_dimension_numbers<[1], [0], [0], [1], [0, 0, 1, 1], [], []>} : vector<128x32xbf16>, vector<32x256xbf16>, vector<128x256xf32> -> vector<128x256xf32>
    %c0_3 = arith.constant 0 : index
    %c0_4 = arith.constant 0 : index
    %3 = vector.load %arg4[%c0_3, %c0_4] : memref<1x256xf32, #tpu.memory_space<vmem>>, vector<1x256xf32>
    %4 = vector.broadcast %3 : vector<1x256xf32> to vector<128x256xf32>
    %5 = arith.addf %2, %4 : vector<128x256xf32>
    %6 = arith.truncf %5 : vector<128x256xf32> to vector<128x256xbf16>
    %c0_5 = arith.constant 0 : index
    %c0_6 = arith.constant 0 : index
    %7 = vector.load %arg5[%c0_5, %c0_6] : memref<128x256xbf16, #tpu.memory_space<vmem>>, vector<128x256xbf16>
    tpu.vector_store %arg5[%c0_5, %c0_6], %6 {strides = array<i32>} : memref<128x256xbf16, #tpu.memory_space<vmem>>, vector<128x256xbf16>,
    return
  }
  func.func @transform_0(%arg0: i32, %arg1: i32) -> (i32, i32) {
    %c0_i32 = arith.constant 0 : i32
    %c0_i32_0 = arith.constant 0 : i32
    return %arg0, %c0_i32 : i32, i32
  }
  func.func @transform_1(%arg0: i32, %arg1: i32) -> (i32, i32) {
    %c0_i32 = arith.constant 0 : i32
    %c0_i32_0 = arith.constant 0 : i32
    return %c0_i32, %arg1 : i32, i32
  }
  func.func @transform_2(%arg0: i32, %arg1: i32) -> (i32, i32) {
    %c0_i32 = arith.constant 0 : i32
    %c0_i32_0 = arith.constant 0 : i32
    return %c0_i32, %arg1 : i32, i32
  }
  func.func @transform_3(%arg0: i32, %arg1: i32) -> (i32, i32) {
    %c0_i32 = arith.constant 0 : i32
    return %arg0, %arg1 : i32, i32
  }
}

module attributes {stable_mosaic.version = 11 : i64} {
  func.func @_bilstm_rec_kernel(%arg0: i32, %arg1: memref<1xi32, #tpu.memory_space<smem>>, %arg2: memref<16x1xi32, #tpu.memory_space<vmem>>, %arg3: memref<16x128xbf16, #tpu.memory_space<vmem>>, %arg4: memref<16x128xbf16, #tpu.memory_space<vmem>>, %arg5: memref<32x256xbf16, #tpu.memory_space<vmem>>, %arg6: memref<16x32xbf16, #tpu.memory_space<vmem>>, %arg7: memref<16x32xbf16, #tpu.memory_space<vmem>>, %arg8: memref<32x32xf32, #tpu.memory_space<vmem>>, %arg9: memref<32x32xf32, #tpu.memory_space<vmem>>) attributes {dimension_semantics = [#tpu.dimension_semantics<arbitrary>], iteration_bounds = array<i64: 8>, scalar_prefetch = 1 : i64, scratch_operands = 2 : i64, tpu.core_type = #tpu.core_type<tc>, window_params = [{pipeline_mode = #tpu.pipeline_mode<synchronous>, transform_indices = @transform_0, window_bounds = array<i64: 16, 1>}, {transform_indices = @transform_1, window_bounds = array<i64: 16, 128>}, {transform_indices = @transform_2, window_bounds = array<i64: 16, 128>}, {pipeline_mode = #tpu.pipeline_mode<synchronous>, transform_indices = @transform_3, window_bounds = array<i64: 32, 256>}, {transform_indices = @transform_4, window_bounds = array<i64: 16, 32>}, {transform_indices = @transform_5, window_bounds = array<i64: 16, 32>}]} {
    %c0 = arith.constant 0 : index
    %0 = memref.load %arg1[%c0] : memref<1xi32, #tpu.memory_space<smem>>
    %c0_i32 = arith.constant 0 : i32
    %1 = arith.cmpi eq, %arg0, %c0_i32 : i32
    %2 = arith.extui %1 : i1 to i32
    %c0_i32_0 = arith.constant 0 : i32
    %3 = arith.cmpi ne, %2, %c0_i32_0 : i32
    scf.if %3 {
      %cst = arith.constant 0.000000e+00 : f32
      %10 = vector.broadcast %cst : f32 to vector<32x32xf32>
      %c0_3 = arith.constant 0 : index
      %c0_4 = arith.constant 0 : index
      %11 = vector.load %arg8[%c0_3, %c0_4] : memref<32x32xf32, #tpu.memory_space<vmem>>, vector<32x32xf32>
      tpu.vector_store %arg8[%c0_3, %c0_4], %10 {strides = array<i32>} : memref<32x32xf32, #tpu.memory_space<vmem>>, vector<32x32xf32>,
      %cst_5 = arith.constant 0.000000e+00 : f32
      %12 = vector.broadcast %cst_5 : f32 to vector<32x32xf32>
      %c0_6 = arith.constant 0 : index
      %c0_7 = arith.constant 0 : index
      %13 = vector.load %arg9[%c0_6, %c0_7] : memref<32x32xf32, #tpu.memory_space<vmem>>, vector<32x32xf32>
      tpu.vector_store %arg9[%c0_6, %c0_7], %12 {strides = array<i32>} : memref<32x32xf32, #tpu.memory_space<vmem>>, vector<32x32xf32>,
    } else {
    }
    %4 = arith.cmpi slt, %arg0, %0 : i32
    %5 = arith.extui %4 : i1 to i32
    %c0_i32_1 = arith.constant 0 : i32
    %6 = arith.cmpi ne, %5, %c0_i32_1 : i32
    scf.if %6 {
      %c0_3 = arith.constant 0 : index
      %c0_4 = arith.constant 0 : index
      %10 = vector.load %arg2[%c0_3, %c0_4] : memref<16x1xi32, #tpu.memory_space<vmem>>, vector<16x1xi32>
      %c0_5 = arith.constant 0 : index
      %c0_6 = arith.constant 0 : index
      %11 = vector.load %arg8[%c0_5, %c0_6] : memref<32x32xf32, #tpu.memory_space<vmem>>, vector<32x32xf32>
      %c0_7 = arith.constant 0 : index
      %c0_8 = arith.constant 0 : index
      %12 = vector.load %arg9[%c0_7, %c0_8] : memref<32x32xf32, #tpu.memory_space<vmem>>, vector<32x32xf32>
      %13 = arith.truncf %11 : vector<32x32xf32> to vector<32x32xbf16>
      %c0_9 = arith.constant 0 : index
      %c0_10 = arith.constant 0 : index
      %14 = vector.load %arg5[%c0_9, %c0_10] : memref<32x256xbf16, #tpu.memory_space<vmem>>, vector<32x256xbf16>
      %cst = arith.constant dense<0.000000e+00> : vector<32x256xf32>
      %15 = tpu.matmul %13, %14, %cst {dimension_numbers = #tpu.dot_dimension_numbers<[1], [0], [0], [1], [0, 0, 1, 1], [], []>} : vector<32x32xbf16>, vector<32x256xbf16>, vector<32x256xf32> -> vector<32x256xf32>
      %c0_11 = arith.constant 0 : index
      %c0_12 = arith.constant 0 : index
      %16 = vector.load %arg3[%c0_11, %c0_12] : memref<16x128xbf16, #tpu.memory_space<vmem>>, vector<16x128xbf16>
      %17 = arith.extf %16 : vector<16x128xbf16> to vector<16x128xf32>
      %18 = vector.extract_strided_slice %15 {offsets = [0, 0], sizes = [16, 128], strides = [1, 1]} : vector<32x256xf32> to vector<16x128xf32>
      %19 = arith.addf %17, %18 : vector<16x128xf32>
      %c0_13 = arith.constant 0 : index
      %c0_14 = arith.constant 0 : index
      %20 = vector.load %arg4[%c0_13, %c0_14] : memref<16x128xbf16, #tpu.memory_space<vmem>>, vector<16x128xbf16>
      %21 = arith.extf %20 : vector<16x128xbf16> to vector<16x128xf32>
      %22 = vector.extract_strided_slice %15 {offsets = [16, 128], sizes = [16, 128], strides = [1, 1]} : vector<32x256xf32> to vector<16x128xf32>
      %23 = arith.addf %21, %22 : vector<16x128xf32>
      %24 = tpu.concatenate %19, %23 in 0 : vector<16x128xf32>, vector<16x128xf32> -> vector<32x128xf32>
      %25 = vector.extract_strided_slice %24 {offsets = [0, 0], sizes = [32, 32], strides = [1, 1]} : vector<32x128xf32> to vector<32x32xf32>
      %26 = arith.negf %25 : vector<32x32xf32>
      %27 = math.exp %26 : vector<32x32xf32>
      %cst_15 = arith.constant 1.000000e+00 : f32
      %28 = vector.broadcast %cst_15 : f32 to vector<32x32xf32>
      %29 = arith.addf %28, %27 : vector<32x32xf32>
      %30 = arith.divf %28, %29 : vector<32x32xf32>
      %31 = vector.extract_strided_slice %24 {offsets = [0, 32], sizes = [32, 32], strides = [1, 1]} : vector<32x128xf32> to vector<32x32xf32>
      %32 = arith.negf %31 : vector<32x32xf32>
      %33 = math.exp %32 : vector<32x32xf32>
      %cst_16 = arith.constant 1.000000e+00 : f32
      %34 = vector.broadcast %cst_16 : f32 to vector<32x32xf32>
      %35 = arith.addf %34, %33 : vector<32x32xf32>
      %36 = arith.divf %34, %35 : vector<32x32xf32>
      %37 = vector.extract_strided_slice %24 {offsets = [0, 64], sizes = [32, 32], strides = [1, 1]} : vector<32x128xf32> to vector<32x32xf32>
      %38 = math.tanh %37 : vector<32x32xf32>
      %39 = vector.extract_strided_slice %24 {offsets = [0, 96], sizes = [32, 32], strides = [1, 1]} : vector<32x128xf32> to vector<32x32xf32>
      %40 = arith.negf %39 : vector<32x32xf32>
      %41 = math.exp %40 : vector<32x32xf32>
      %cst_17 = arith.constant 1.000000e+00 : f32
      %42 = vector.broadcast %cst_17 : f32 to vector<32x32xf32>
      %43 = arith.addf %42, %41 : vector<32x32xf32>
      %44 = arith.divf %42, %43 : vector<32x32xf32>
      %45 = arith.mulf %36, %12 : vector<32x32xf32>
      %46 = arith.mulf %30, %38 : vector<32x32xf32>
      %47 = arith.addf %45, %46 : vector<32x32xf32>
      %48 = math.tanh %47 : vector<32x32xf32>
      %49 = arith.mulf %44, %48 : vector<32x32xf32>
      %c1_i32 = arith.constant 1 : i32
      %50 = arith.subi %0, %c1_i32 : i32
      %51 = arith.subi %50, %arg0 : i32
      %52 = vector.broadcast %arg0 : i32 to vector<16x1xi32>
      %53 = arith.cmpi slt, %52, %10 : vector<16x1xi32>
      %54 = vector.broadcast %51 : i32 to vector<16x1xi32>
      %55 = arith.cmpi slt, %54, %10 : vector<16x1xi32>
      %56 = tpu.concatenate %53, %55 in 0 : vector<16x1xi1>, vector<16x1xi1> -> vector<32x1xi1>
      %57 = vector.shape_cast %56 : vector<32x1xi1> to vector<32x1xi1>
      %58 = vector.broadcast %57 : vector<32x1xi1> to vector<32x32xi1>
      %59 = arith.select %58, %49, %11 : vector<32x32xi1>, vector<32x32xf32>
      %c0_18 = arith.constant 0 : index
      %c0_19 = arith.constant 0 : index
      %60 = vector.load %arg8[%c0_18, %c0_19] : memref<32x32xf32, #tpu.memory_space<vmem>>, vector<32x32xf32>
      tpu.vector_store %arg8[%c0_18, %c0_19], %59 {strides = array<i32>} : memref<32x32xf32, #tpu.memory_space<vmem>>, vector<32x32xf32>,
      %61 = vector.shape_cast %56 : vector<32x1xi1> to vector<32x1xi1>
      %62 = vector.broadcast %61 : vector<32x1xi1> to vector<32x32xi1>
      %63 = arith.select %62, %47, %12 : vector<32x32xi1>, vector<32x32xf32>
      %c0_20 = arith.constant 0 : index
      %c0_21 = arith.constant 0 : index
      %64 = vector.load %arg9[%c0_20, %c0_21] : memref<32x32xf32, #tpu.memory_space<vmem>>, vector<32x32xf32>
      tpu.vector_store %arg9[%c0_20, %c0_21], %63 {strides = array<i32>} : memref<32x32xf32, #tpu.memory_space<vmem>>, vector<32x32xf32>,
      %65 = vector.extract_strided_slice %49 {offsets = [0, 0], sizes = [16, 32], strides = [1, 1]} : vector<32x32xf32> to vector<16x32xf32>
      %cst_22 = arith.constant 0.000000e+00 : f32
      %66 = vector.shape_cast %53 : vector<16x1xi1> to vector<16x1xi1>
      %67 = vector.broadcast %66 : vector<16x1xi1> to vector<16x32xi1>
      %68 = vector.broadcast %cst_22 : f32 to vector<16x32xf32>
      %69 = arith.select %67, %65, %68 : vector<16x32xi1>, vector<16x32xf32>
      %70 = arith.truncf %69 : vector<16x32xf32> to vector<16x32xbf16>
      %c0_23 = arith.constant 0 : index
      %c0_24 = arith.constant 0 : index
      %71 = vector.load %arg6[%c0_23, %c0_24] : memref<16x32xbf16, #tpu.memory_space<vmem>>, vector<16x32xbf16>
      tpu.vector_store %arg6[%c0_23, %c0_24], %70 {strides = array<i32>} : memref<16x32xbf16, #tpu.memory_space<vmem>>, vector<16x32xbf16>,
      %72 = vector.extract_strided_slice %49 {offsets = [16, 0], sizes = [16, 32], strides = [1, 1]} : vector<32x32xf32> to vector<16x32xf32>
      %cst_25 = arith.constant 0.000000e+00 : f32
      %73 = vector.shape_cast %55 : vector<16x1xi1> to vector<16x1xi1>
      %74 = vector.broadcast %73 : vector<16x1xi1> to vector<16x32xi1>
      %75 = vector.broadcast %cst_25 : f32 to vector<16x32xf32>
      %76 = arith.select %74, %72, %75 : vector<16x32xi1>, vector<16x32xf32>
      %77 = arith.truncf %76 : vector<16x32xf32> to vector<16x32xbf16>
      %c0_26 = arith.constant 0 : index
      %c0_27 = arith.constant 0 : index
      %78 = vector.load %arg7[%c0_26, %c0_27] : memref<16x32xbf16, #tpu.memory_space<vmem>>, vector<16x32xbf16>
      tpu.vector_store %arg7[%c0_26, %c0_27], %77 {strides = array<i32>} : memref<16x32xbf16, #tpu.memory_space<vmem>>, vector<16x32xbf16>,
    } else {
    }
    %7 = arith.cmpi sge, %arg0, %0 : i32
    %8 = arith.extui %7 : i1 to i32
    %c0_i32_2 = arith.constant 0 : i32
    %9 = arith.cmpi ne, %8, %c0_i32_2 : i32
    scf.if %9 {
      %cst = arith.constant 0.000000e+00 : bf16
      %10 = vector.broadcast %cst : bf16 to vector<16x32xbf16>
      %c0_3 = arith.constant 0 : index
      %c0_4 = arith.constant 0 : index
      %11 = vector.load %arg6[%c0_3, %c0_4] : memref<16x32xbf16, #tpu.memory_space<vmem>>, vector<16x32xbf16>
      tpu.vector_store %arg6[%c0_3, %c0_4], %10 {strides = array<i32>} : memref<16x32xbf16, #tpu.memory_space<vmem>>, vector<16x32xbf16>,
      %cst_5 = arith.constant 0.000000e+00 : bf16
      %12 = vector.broadcast %cst_5 : bf16 to vector<16x32xbf16>
      %c0_6 = arith.constant 0 : index
      %c0_7 = arith.constant 0 : index
      %13 = vector.load %arg7[%c0_6, %c0_7] : memref<16x32xbf16, #tpu.memory_space<vmem>>, vector<16x32xbf16>
      tpu.vector_store %arg7[%c0_6, %c0_7], %12 {strides = array<i32>} : memref<16x32xbf16, #tpu.memory_space<vmem>>, vector<16x32xbf16>,
    } else {
    }
    return
  }
  func.func @transform_0(%arg0: i32, %arg1: memref<1xi32, #tpu.memory_space<smem>>) -> (i32, i32) {
    %c0_i32 = arith.constant 0 : i32
    %c0_i32_0 = arith.constant 0 : i32
    %c0_i32_1 = arith.constant 0 : i32
    return %c0_i32, %c0_i32_0 : i32, i32
  }
  func.func @transform_1(%arg0: i32, %arg1: memref<1xi32, #tpu.memory_space<smem>>) -> (i32, i32) {
    %c0_i32 = arith.constant 0 : i32
    %c0_i32_0 = arith.constant 0 : i32
    return %arg0, %c0_i32 : i32, i32
  }
  func.func @transform_2(%arg0: i32, %arg1: memref<1xi32, #tpu.memory_space<smem>>) -> (i32, i32) {
    %c0 = arith.constant 0 : index
    %0 = memref.load %arg1[%c0] : memref<1xi32, #tpu.memory_space<smem>>
    %c1_i32 = arith.constant 1 : i32
    %1 = arith.subi %0, %c1_i32 : i32
    %2 = arith.subi %1, %arg0 : i32
    %c0_i32 = arith.constant 0 : i32
    %3 = arith.cmpi sge, %2, %c0_i32 : i32
    %4 = arith.select %3, %2, %arg0 : i32
    %c1_i32_0 = arith.constant 1 : i32
    %c0_i32_1 = arith.constant 0 : i32
    return %4, %c1_i32_0 : i32, i32
  }
  func.func @transform_3(%arg0: i32, %arg1: memref<1xi32, #tpu.memory_space<smem>>) -> (i32, i32) {
    %c0_i32 = arith.constant 0 : i32
    %c0_i32_0 = arith.constant 0 : i32
    %c0_i32_1 = arith.constant 0 : i32
    return %c0_i32, %c0_i32_0 : i32, i32
  }
  func.func @transform_4(%arg0: i32, %arg1: memref<1xi32, #tpu.memory_space<smem>>) -> (i32, i32) {
    %c0_i32 = arith.constant 0 : i32
    %c0_i32_0 = arith.constant 0 : i32
    return %arg0, %c0_i32 : i32, i32
  }
  func.func @transform_5(%arg0: i32, %arg1: memref<1xi32, #tpu.memory_space<smem>>) -> (i32, i32) {
    %c0 = arith.constant 0 : index
    %0 = memref.load %arg1[%c0] : memref<1xi32, #tpu.memory_space<smem>>
    %c1_i32 = arith.constant 1 : i32
    %1 = arith.subi %0, %c1_i32 : i32
    %2 = arith.subi %1, %arg0 : i32
    %c0_i32 = arith.constant 0 : i32
    %3 = arith.cmpi sge, %2, %c0_i32 : i32
    %4 = arith.select %3, %2, %arg0 : i32
    %c0_i32_0 = arith.constant 0 : i32
    %c0_i32_1 = arith.constant 0 : i32
    return %4, %c0_i32_0 : i32, i32
  }
}

module attributes {stable_mosaic.version = 11 : i64} {
  func.func @_proj_kernel(%arg0: i32, %arg1: i32, %arg2: memref<128x32xbf16, #tpu.memory_space<vmem>>, %arg3: memref<128x32xbf16, #tpu.memory_space<vmem>>, %arg4: memref<32x256xbf16, #tpu.memory_space<vmem>>, %arg5: memref<32x256xbf16, #tpu.memory_space<vmem>>, %arg6: memref<1x256xf32, #tpu.memory_space<vmem>>, %arg7: memref<128x256xbf16, #tpu.memory_space<vmem>>) attributes {dimension_semantics = [#tpu.dimension_semantics<parallel>, #tpu.dimension_semantics<parallel>], iteration_bounds = array<i64: 1, 1>, scalar_prefetch = 0 : i64, scratch_operands = 0 : i64, tpu.core_type = #tpu.core_type<tc>, window_params = [{transform_indices = @transform_0, window_bounds = array<i64: 128, 32>}, {transform_indices = @transform_1, window_bounds = array<i64: 128, 32>}, {transform_indices = @transform_2, window_bounds = array<i64: 32, 256>}, {transform_indices = @transform_3, window_bounds = array<i64: 32, 256>}, {transform_indices = @transform_4, window_bounds = array<i64: 1, 256>}, {transform_indices = @transform_5, window_bounds = array<i64: 128, 256>}]} {
    %c0 = arith.constant 0 : index
    %c0_0 = arith.constant 0 : index
    %0 = vector.load %arg2[%c0, %c0_0] : memref<128x32xbf16, #tpu.memory_space<vmem>>, vector<128x32xbf16>
    %c0_1 = arith.constant 0 : index
    %c0_2 = arith.constant 0 : index
    %1 = vector.load %arg4[%c0_1, %c0_2] : memref<32x256xbf16, #tpu.memory_space<vmem>>, vector<32x256xbf16>
    %cst = arith.constant dense<0.000000e+00> : vector<128x256xf32>
    %2 = tpu.matmul %0, %1, %cst {dimension_numbers = #tpu.dot_dimension_numbers<[1], [0], [0], [1], [0, 0, 1, 1], [], []>} : vector<128x32xbf16>, vector<32x256xbf16>, vector<128x256xf32> -> vector<128x256xf32>
    %c0_3 = arith.constant 0 : index
    %c0_4 = arith.constant 0 : index
    %3 = vector.load %arg3[%c0_3, %c0_4] : memref<128x32xbf16, #tpu.memory_space<vmem>>, vector<128x32xbf16>
    %c0_5 = arith.constant 0 : index
    %c0_6 = arith.constant 0 : index
    %4 = vector.load %arg5[%c0_5, %c0_6] : memref<32x256xbf16, #tpu.memory_space<vmem>>, vector<32x256xbf16>
    %cst_7 = arith.constant dense<0.000000e+00> : vector<128x256xf32>
    %5 = tpu.matmul %3, %4, %cst_7 {dimension_numbers = #tpu.dot_dimension_numbers<[1], [0], [0], [1], [0, 0, 1, 1], [], []>} : vector<128x32xbf16>, vector<32x256xbf16>, vector<128x256xf32> -> vector<128x256xf32>
    %6 = arith.addf %2, %5 : vector<128x256xf32>
    %c0_8 = arith.constant 0 : index
    %c0_9 = arith.constant 0 : index
    %7 = vector.load %arg6[%c0_8, %c0_9] : memref<1x256xf32, #tpu.memory_space<vmem>>, vector<1x256xf32>
    %8 = vector.broadcast %7 : vector<1x256xf32> to vector<128x256xf32>
    %9 = arith.addf %6, %8 : vector<128x256xf32>
    %10 = arith.truncf %9 : vector<128x256xf32> to vector<128x256xbf16>
    %c0_10 = arith.constant 0 : index
    %c0_11 = arith.constant 0 : index
    %11 = vector.load %arg7[%c0_10, %c0_11] : memref<128x256xbf16, #tpu.memory_space<vmem>>, vector<128x256xbf16>
    tpu.vector_store %arg7[%c0_10, %c0_11], %10 {strides = array<i32>} : memref<128x256xbf16, #tpu.memory_space<vmem>>, vector<128x256xbf16>,
    return
  }
  func.func @transform_0(%arg0: i32, %arg1: i32) -> (i32, i32) {
    %c0_i32 = arith.constant 0 : i32
    %c0_i32_0 = arith.constant 0 : i32
    return %arg0, %c0_i32 : i32, i32
  }
  func.func @transform_1(%arg0: i32, %arg1: i32) -> (i32, i32) {
    %c0_i32 = arith.constant 0 : i32
    %c0_i32_0 = arith.constant 0 : i32
    return %arg0, %c0_i32 : i32, i32
  }
  func.func @transform_2(%arg0: i32, %arg1: i32) -> (i32, i32) {
    %c0_i32 = arith.constant 0 : i32
    %c0_i32_0 = arith.constant 0 : i32
    return %c0_i32, %arg1 : i32, i32
  }
  func.func @transform_3(%arg0: i32, %arg1: i32) -> (i32, i32) {
    %c0_i32 = arith.constant 0 : i32
    %c0_i32_0 = arith.constant 0 : i32
    return %c0_i32, %arg1 : i32, i32
  }
  func.func @transform_4(%arg0: i32, %arg1: i32) -> (i32, i32) {
    %c0_i32 = arith.constant 0 : i32
    %c0_i32_0 = arith.constant 0 : i32
    return %c0_i32, %arg1 : i32, i32
  }
  func.func @transform_5(%arg0: i32, %arg1: i32) -> (i32, i32) {
    %c0_i32 = arith.constant 0 : i32
    return %arg0, %arg1 : i32, i32
  }
}

module attributes {stable_mosaic.version = 11 : i64} {
  func.func @_head_kernel(%arg0: i32, %arg1: memref<1xi32, #tpu.memory_space<smem>>, %arg2: memref<8x16x32xbf16, #tpu.memory_space<vmem>>, %arg3: memref<8x16x32xbf16, #tpu.memory_space<vmem>>, %arg4: memref<1x32xf32, #tpu.memory_space<vmem>>, %arg5: memref<1x32xf32, #tpu.memory_space<vmem>>, %arg6: memref<1x1xf32, #tpu.memory_space<vmem>>, %arg7: memref<32x32xf32, #tpu.memory_space<vmem>>, %arg8: memref<32x32xf32, #tpu.memory_space<vmem>>, %arg9: memref<1x32xf32, #tpu.memory_space<vmem>>, %arg10: memref<32x4xf32, #tpu.memory_space<vmem>>, %arg11: memref<1x4xf32, #tpu.memory_space<vmem>>, %arg12: memref<16x4xf32, #tpu.memory_space<vmem>>, %arg13: memref<1x16xf32, #tpu.memory_space<vmem>>, %arg14: memref<1x16xf32, #tpu.memory_space<vmem>>, %arg15: memref<16x32xf32, #tpu.memory_space<vmem>>, %arg16: memref<16x32xf32, #tpu.memory_space<vmem>>) attributes {dimension_semantics = [#tpu.dimension_semantics<arbitrary>], iteration_bounds = array<i64: 1>, scalar_prefetch = 1 : i64, scratch_operands = 4 : i64, tpu.core_type = #tpu.core_type<tc>, window_params = [{transform_indices = @transform_0, window_bounds = array<i64: 8, 16, 32>}, {transform_indices = @transform_1, window_bounds = array<i64: 8, 16, 32>}, {pipeline_mode = #tpu.pipeline_mode<synchronous>, transform_indices = @transform_2, window_bounds = array<i64: 1, 32>}, {pipeline_mode = #tpu.pipeline_mode<synchronous>, transform_indices = @transform_3, window_bounds = array<i64: 1, 32>}, {pipeline_mode = #tpu.pipeline_mode<synchronous>, transform_indices = @transform_4, window_bounds = array<i64: 1, 1>}, {pipeline_mode = #tpu.pipeline_mode<synchronous>, transform_indices = @transform_5, window_bounds = array<i64: 32, 32>}, {pipeline_mode = #tpu.pipeline_mode<synchronous>, transform_indices = @transform_6, window_bounds = array<i64: 32, 32>}, {pipeline_mode = #tpu.pipeline_mode<synchronous>, transform_indices = @transform_7, window_bounds = array<i64: 1, 32>}, {pipeline_mode = #tpu.pipeline_mode<synchronous>, transform_indices = @transform_8, window_bounds = array<i64: 32, 4>}, {pipeline_mode = #tpu.pipeline_mode<synchronous>, transform_indices = @transform_9, window_bounds = array<i64: 1, 4>}, {pipeline_mode = #tpu.pipeline_mode<synchronous>, transform_indices = @transform_10, window_bounds = array<i64: 16, 4>}]} {
    %c0 = arith.constant 0 : index
    %0 = memref.load %arg1[%c0] : memref<1xi32, #tpu.memory_space<smem>>
    %c0_i32 = arith.constant 0 : i32
    %1 = arith.cmpi eq, %arg0, %c0_i32 : i32
    %2 = arith.extui %1 : i1 to i32
    %c0_i32_0 = arith.constant 0 : i32
    %3 = arith.cmpi ne, %2, %c0_i32_0 : i32
    scf.if %3 {
      %cst = arith.constant -1.000000e+30 : f32
      %11 = vector.broadcast %cst : f32 to vector<1x16xf32>
      %c0_4 = arith.constant 0 : index
      %c0_5 = arith.constant 0 : index
      %12 = vector.load %arg13[%c0_4, %c0_5] : memref<1x16xf32, #tpu.memory_space<vmem>>, vector<1x16xf32>
      tpu.vector_store %arg13[%c0_4, %c0_5], %11 {strides = array<i32>} : memref<1x16xf32, #tpu.memory_space<vmem>>, vector<1x16xf32>,
      %cst_6 = arith.constant 0.000000e+00 : f32
      %13 = vector.broadcast %cst_6 : f32 to vector<1x16xf32>
      %c0_7 = arith.constant 0 : index
      %c0_8 = arith.constant 0 : index
      %14 = vector.load %arg14[%c0_7, %c0_8] : memref<1x16xf32, #tpu.memory_space<vmem>>, vector<1x16xf32>
      tpu.vector_store %arg14[%c0_7, %c0_8], %13 {strides = array<i32>} : memref<1x16xf32, #tpu.memory_space<vmem>>, vector<1x16xf32>,
      %cst_9 = arith.constant 0.000000e+00 : f32
      %15 = vector.broadcast %cst_9 : f32 to vector<16x32xf32>
      %c0_10 = arith.constant 0 : index
      %c0_11 = arith.constant 0 : index
      %16 = vector.load %arg15[%c0_10, %c0_11] : memref<16x32xf32, #tpu.memory_space<vmem>>, vector<16x32xf32>
      tpu.vector_store %arg15[%c0_10, %c0_11], %15 {strides = array<i32>} : memref<16x32xf32, #tpu.memory_space<vmem>>, vector<16x32xf32>,
      %cst_12 = arith.constant 0.000000e+00 : f32
      %17 = vector.broadcast %cst_12 : f32 to vector<16x32xf32>
      %c0_13 = arith.constant 0 : index
      %c0_14 = arith.constant 0 : index
      %18 = vector.load %arg16[%c0_13, %c0_14] : memref<16x32xf32, #tpu.memory_space<vmem>>, vector<16x32xf32>
      tpu.vector_store %arg16[%c0_13, %c0_14], %17 {strides = array<i32>} : memref<16x32xf32, #tpu.memory_space<vmem>>, vector<16x32xf32>,
    } else {
    }
    %c8_i32 = arith.constant 8 : i32
    %4 = arith.muli %arg0, %c8_i32 : i32
    %5 = arith.cmpi slt, %4, %0 : i32
    %6 = arith.extui %5 : i1 to i32
    %c0_i32_1 = arith.constant 0 : i32
    %7 = arith.cmpi ne, %6, %c0_i32_1 : i32
    scf.if %7 {
      %c0_4 = arith.constant 0 : index
      %c0_5 = arith.constant 0 : index
      %c0_6 = arith.constant 0 : index
      %11 = vector.load %arg2[%c0_4, %c0_5, %c0_6] : memref<8x16x32xbf16, #tpu.memory_space<vmem>>, vector<8x16x32xbf16>
      %12 = arith.extf %11 : vector<8x16x32xbf16> to vector<8x16x32xf32>
      %c0_7 = arith.constant 0 : index
      %c0_8 = arith.constant 0 : index
      %c0_9 = arith.constant 0 : index
      %13 = vector.load %arg3[%c0_7, %c0_8, %c0_9] : memref<8x16x32xbf16, #tpu.memory_space<vmem>>, vector<8x16x32xbf16>
      %14 = arith.extf %13 : vector<8x16x32xbf16> to vector<8x16x32xf32>
      %c0_10 = arith.constant 0 : index
      %c0_11 = arith.constant 0 : index
      %15 = vector.load %arg4[%c0_10, %c0_11] : memref<1x32xf32, #tpu.memory_space<vmem>>, vector<1x32xf32>
      %16 = vector.shape_cast %15 : vector<1x32xf32> to vector<1x1x32xf32>
      %c0_12 = arith.constant 0 : index
      %c0_13 = arith.constant 0 : index
      %17 = vector.load %arg5[%c0_12, %c0_13] : memref<1x32xf32, #tpu.memory_space<vmem>>, vector<1x32xf32>
      %18 = vector.shape_cast %17 : vector<1x32xf32> to vector<1x1x32xf32>
      %19 = vector.broadcast %16 : vector<1x1x32xf32> to vector<8x16x32xf32>
      %20 = arith.mulf %12, %19 : vector<8x16x32xf32>
      %cst = arith.constant dense<0.000000e+00> : vector<8x16xf32>
      %21 = vector.multi_reduction <add>, %20, %cst [2] : vector<8x16x32xf32> to vector<8x16xf32>
      %22 = vector.broadcast %18 : vector<1x1x32xf32> to vector<8x16x32xf32>
      %23 = arith.mulf %14, %22 : vector<8x16x32xf32>
      %cst_14 = arith.constant dense<0.000000e+00> : vector<8x16xf32>
      %24 = vector.multi_reduction <add>, %23, %cst_14 [2] : vector<8x16x32xf32> to vector<8x16xf32>
      %25 = arith.addf %21, %24 : vector<8x16xf32>
      %c0_15 = arith.constant 0 : index
      %c0_16 = arith.constant 0 : index
      %26 = vector.load %arg6[%c0_15, %c0_16] : memref<1x1xf32, #tpu.memory_space<vmem>>, vector<1x1xf32>
      %27 = vector.broadcast %26 : vector<1x1xf32> to vector<8x16xf32>
      %28 = arith.addf %25, %27 : vector<8x16xf32>
      %c8_i32_17 = arith.constant 8 : i32
      %29 = arith.muli %arg0, %c8_i32_17 : i32
      %30 = tpu.iota {dimensions = array<i32: 0>} : vector<8x16xi32>
      %31 = vector.broadcast %29 : i32 to vector<8x16xi32>
      %32 = arith.addi %31, %30 : vector<8x16xi32>
      %33 = vector.broadcast %0 : i32 to vector<8x16xi32>
      %34 = arith.cmpi slt, %32, %33 : vector<8x16xi32>
      %cst_18 = arith.constant -1.000000e+30 : f32
      %35 = vector.broadcast %cst_18 : f32 to vector<8x16xf32>
      %36 = arith.select %34, %28, %35 : vector<8x16xi1>, vector<8x16xf32>
      %c0_19 = arith.constant 0 : index
      %c0_20 = arith.constant 0 : index
      %37 = vector.load %arg13[%c0_19, %c0_20] : memref<1x16xf32, #tpu.memory_space<vmem>>, vector<1x16xf32>
      %cst_21 = arith.constant dense<0xFF800000> : vector<16xf32>
      %38 = vector.multi_reduction <maximumf>, %36, %cst_21 [0] : vector<8x16xf32> to vector<16xf32>
      %39 = vector.shape_cast %38 : vector<16xf32> to vector<1x16xf32>
      %40 = arith.maximumf %37, %39 : vector<1x16xf32>
      %41 = arith.subf %37, %40 : vector<1x16xf32>
      %42 = math.exp %41 : vector<1x16xf32>
      %43 = vector.broadcast %40 : vector<1x16xf32> to vector<8x16xf32>
      %44 = arith.subf %36, %43 : vector<8x16xf32>
      %45 = math.exp %44 : vector<8x16xf32>
      %c0_22 = arith.constant 0 : index
      %c0_23 = arith.constant 0 : index
      %46 = vector.load %arg14[%c0_22, %c0_23] : memref<1x16xf32, #tpu.memory_space<vmem>>, vector<1x16xf32>
      %47 = arith.mulf %42, %46 : vector<1x16xf32>
      %cst_24 = arith.constant dense<0.000000e+00> : vector<16xf32>
      %48 = vector.multi_reduction <add>, %45, %cst_24 [0] : vector<8x16xf32> to vector<16xf32>
      %49 = vector.shape_cast %48 : vector<16xf32> to vector<1x16xf32>
      %50 = arith.addf %47, %49 : vector<1x16xf32>
      %c0_25 = arith.constant 0 : index
      %c0_26 = arith.constant 0 : index
      %51 = vector.load %arg14[%c0_25, %c0_26] : memref<1x16xf32, #tpu.memory_space<vmem>>, vector<1x16xf32>
      tpu.vector_store %arg14[%c0_25, %c0_26], %50 {strides = array<i32>} : memref<1x16xf32, #tpu.memory_space<vmem>>, vector<1x16xf32>,
      %52 = tpu.transpose %42, [1, 0] : vector<1x16xf32> -> vector<16x1xf32>
      %53 = vector.shape_cast %45 : vector<8x16xf32> to vector<8x16x1xf32>
      %c0_27 = arith.constant 0 : index
      %c0_28 = arith.constant 0 : index
      %54 = vector.load %arg15[%c0_27, %c0_28] : memref<16x32xf32, #tpu.memory_space<vmem>>, vector<16x32xf32>
      %55 = vector.broadcast %52 : vector<16x1xf32> to vector<16x32xf32>
      %56 = arith.mulf %55, %54 : vector<16x32xf32>
      %57 = vector.broadcast %53 : vector<8x16x1xf32> to vector<8x16x32xf32>
      %58 = arith.mulf %57, %12 : vector<8x16x32xf32>
      %cst_29 = arith.constant dense<0.000000e+00> : vector<16x32xf32>
      %59 = vector.multi_reduction <add>, %58, %cst_29 [0] : vector<8x16x32xf32> to vector<16x32xf32>
      %60 = arith.addf %56, %59 : vector<16x32xf32>
      %c0_30 = arith.constant 0 : index
      %c0_31 = arith.constant 0 : index
      %61 = vector.load %arg15[%c0_30, %c0_31] : memref<16x32xf32, #tpu.memory_space<vmem>>, vector<16x32xf32>
      tpu.vector_store %arg15[%c0_30, %c0_31], %60 {strides = array<i32>} : memref<16x32xf32, #tpu.memory_space<vmem>>, vector<16x32xf32>,
      %c0_32 = arith.constant 0 : index
      %c0_33 = arith.constant 0 : index
      %62 = vector.load %arg16[%c0_32, %c0_33] : memref<16x32xf32, #tpu.memory_space<vmem>>, vector<16x32xf32>
      %63 = vector.broadcast %52 : vector<16x1xf32> to vector<16x32xf32>
      %64 = arith.mulf %63, %62 : vector<16x32xf32>
      %65 = vector.broadcast %53 : vector<8x16x1xf32> to vector<8x16x32xf32>
      %66 = arith.mulf %65, %14 : vector<8x16x32xf32>
      %cst_34 = arith.constant dense<0.000000e+00> : vector<16x32xf32>
      %67 = vector.multi_reduction <add>, %66, %cst_34 [0] : vector<8x16x32xf32> to vector<16x32xf32>
      %68 = arith.addf %64, %67 : vector<16x32xf32>
      %c0_35 = arith.constant 0 : index
      %c0_36 = arith.constant 0 : index
      %69 = vector.load %arg16[%c0_35, %c0_36] : memref<16x32xf32, #tpu.memory_space<vmem>>, vector<16x32xf32>
      tpu.vector_store %arg16[%c0_35, %c0_36], %68 {strides = array<i32>} : memref<16x32xf32, #tpu.memory_space<vmem>>, vector<16x32xf32>,
      %c0_37 = arith.constant 0 : index
      %c0_38 = arith.constant 0 : index
      %70 = vector.load %arg13[%c0_37, %c0_38] : memref<1x16xf32, #tpu.memory_space<vmem>>, vector<1x16xf32>
      tpu.vector_store %arg13[%c0_37, %c0_38], %40 {strides = array<i32>} : memref<1x16xf32, #tpu.memory_space<vmem>>, vector<1x16xf32>,
    } else {
    }
    %c0_i32_2 = arith.constant 0 : i32
    %8 = arith.cmpi eq, %arg0, %c0_i32_2 : i32
    %9 = arith.extui %8 : i1 to i32
    %c0_i32_3 = arith.constant 0 : i32
    %10 = arith.cmpi ne, %9, %c0_i32_3 : i32
    scf.if %10 {
      %c0_4 = arith.constant 0 : index
      %c0_5 = arith.constant 0 : index
      %11 = vector.load %arg14[%c0_4, %c0_5] : memref<1x16xf32, #tpu.memory_space<vmem>>, vector<1x16xf32>
      %cst = arith.constant 1.000000e+00 : f32
      %12 = vector.broadcast %cst : f32 to vector<1x16xf32>
      %13 = arith.divf %12, %11 : vector<1x16xf32>
      %14 = tpu.transpose %13, [1, 0] : vector<1x16xf32> -> vector<16x1xf32>
      %c0_6 = arith.constant 0 : index
      %c0_7 = arith.constant 0 : index
      %15 = vector.load %arg15[%c0_6, %c0_7] : memref<16x32xf32, #tpu.memory_space<vmem>>, vector<16x32xf32>
      %16 = vector.broadcast %14 : vector<16x1xf32> to vector<16x32xf32>
      %17 = arith.mulf %15, %16 : vector<16x32xf32>
      %c0_8 = arith.constant 0 : index
      %c0_9 = arith.constant 0 : index
      %18 = vector.load %arg16[%c0_8, %c0_9] : memref<16x32xf32, #tpu.memory_space<vmem>>, vector<16x32xf32>
      %19 = vector.broadcast %14 : vector<16x1xf32> to vector<16x32xf32>
      %20 = arith.mulf %18, %19 : vector<16x32xf32>
      %c0_10 = arith.constant 0 : index
      %c0_11 = arith.constant 0 : index
      %21 = vector.load %arg7[%c0_10, %c0_11] : memref<32x32xf32, #tpu.memory_space<vmem>>, vector<32x32xf32>
      %cst_12 = arith.constant dense<0.000000e+00> : vector<16x32xf32>
      %22 = tpu.matmul %17, %21, %cst_12 {dimension_numbers = #tpu.dot_dimension_numbers<[1], [0], [0], [1], [0, 0, 1, 1], [], []>} : vector<16x32xf32>, vector<32x32xf32>, vector<16x32xf32> -> vector<16x32xf32>
      %c0_13 = arith.constant 0 : index
      %c0_14 = arith.constant 0 : index
      %23 = vector.load %arg8[%c0_13, %c0_14] : memref<32x32xf32, #tpu.memory_space<vmem>>, vector<32x32xf32>
      %cst_15 = arith.constant dense<0.000000e+00> : vector<16x32xf32>
      %24 = tpu.matmul %20, %23, %cst_15 {dimension_numbers = #tpu.dot_dimension_numbers<[1], [0], [0], [1], [0, 0, 1, 1], [], []>} : vector<16x32xf32>, vector<32x32xf32>, vector<16x32xf32> -> vector<16x32xf32>
      %25 = arith.addf %22, %24 : vector<16x32xf32>
      %c0_16 = arith.constant 0 : index
      %c0_17 = arith.constant 0 : index
      %26 = vector.load %arg9[%c0_16, %c0_17] : memref<1x32xf32, #tpu.memory_space<vmem>>, vector<1x32xf32>
      %27 = vector.broadcast %26 : vector<1x32xf32> to vector<16x32xf32>
      %28 = arith.addf %25, %27 : vector<16x32xf32>
      %cst_18 = arith.constant 0.000000e+00 : f32
      %29 = vector.broadcast %cst_18 : f32 to vector<16x32xf32>
      %30 = arith.maximumf %28, %29 : vector<16x32xf32>
      %c0_19 = arith.constant 0 : index
      %c0_20 = arith.constant 0 : index
      %31 = vector.load %arg10[%c0_19, %c0_20] : memref<32x4xf32, #tpu.memory_space<vmem>>, vector<32x4xf32>
      %cst_21 = arith.constant dense<0.000000e+00> : vector<16x4xf32>
      %32 = tpu.matmul %30, %31, %cst_21 {dimension_numbers = #tpu.dot_dimension_numbers<[1], [0], [0], [1], [0, 0, 1, 1], [], []>} : vector<16x32xf32>, vector<32x4xf32>, vector<16x4xf32> -> vector<16x4xf32>
      %c0_22 = arith.constant 0 : index
      %c0_23 = arith.constant 0 : index
      %33 = vector.load %arg11[%c0_22, %c0_23] : memref<1x4xf32, #tpu.memory_space<vmem>>, vector<1x4xf32>
      %34 = vector.broadcast %33 : vector<1x4xf32> to vector<16x4xf32>
      %35 = arith.addf %32, %34 : vector<16x4xf32>
      %c0_24 = arith.constant 0 : index
      %c0_25 = arith.constant 0 : index
      %36 = vector.load %arg12[%c0_24, %c0_25] : memref<16x4xf32, #tpu.memory_space<vmem>>, vector<16x4xf32>
      tpu.vector_store %arg12[%c0_24, %c0_25], %35 {strides = array<i32>} : memref<16x4xf32, #tpu.memory_space<vmem>>, vector<16x4xf32>,
    } else {
    }
    return
  }
  func.func @transform_0(%arg0: i32, %arg1: memref<1xi32, #tpu.memory_space<smem>>) -> (i32, i32, i32) {
    %c0_i32 = arith.constant 0 : i32
    %c0_i32_0 = arith.constant 0 : i32
    %c0_i32_1 = arith.constant 0 : i32
    return %arg0, %c0_i32, %c0_i32_0 : i32, i32, i32
  }
  func.func @transform_1(%arg0: i32, %arg1: memref<1xi32, #tpu.memory_space<smem>>) -> (i32, i32, i32) {
    %c0_i32 = arith.constant 0 : i32
    %c0_i32_0 = arith.constant 0 : i32
    %c0_i32_1 = arith.constant 0 : i32
    return %arg0, %c0_i32, %c0_i32_0 : i32, i32, i32
  }
  func.func @transform_2(%arg0: i32, %arg1: memref<1xi32, #tpu.memory_space<smem>>) -> (i32, i32) {
    %c0_i32 = arith.constant 0 : i32
    %c0_i32_0 = arith.constant 0 : i32
    %c0_i32_1 = arith.constant 0 : i32
    return %c0_i32, %c0_i32_0 : i32, i32
  }
  func.func @transform_3(%arg0: i32, %arg1: memref<1xi32, #tpu.memory_space<smem>>) -> (i32, i32) {
    %c0_i32 = arith.constant 0 : i32
    %c0_i32_0 = arith.constant 0 : i32
    %c0_i32_1 = arith.constant 0 : i32
    return %c0_i32, %c0_i32_0 : i32, i32
  }
  func.func @transform_4(%arg0: i32, %arg1: memref<1xi32, #tpu.memory_space<smem>>) -> (i32, i32) {
    %c0_i32 = arith.constant 0 : i32
    %c0_i32_0 = arith.constant 0 : i32
    %c0_i32_1 = arith.constant 0 : i32
    return %c0_i32, %c0_i32_0 : i32, i32
  }
  func.func @transform_5(%arg0: i32, %arg1: memref<1xi32, #tpu.memory_space<smem>>) -> (i32, i32) {
    %c0_i32 = arith.constant 0 : i32
    %c0_i32_0 = arith.constant 0 : i32
    %c0_i32_1 = arith.constant 0 : i32
    return %c0_i32, %c0_i32_0 : i32, i32
  }
  func.func @transform_6(%arg0: i32, %arg1: memref<1xi32, #tpu.memory_space<smem>>) -> (i32, i32) {
    %c0_i32 = arith.constant 0 : i32
    %c0_i32_0 = arith.constant 0 : i32
    %c0_i32_1 = arith.constant 0 : i32
    return %c0_i32, %c0_i32_0 : i32, i32
  }
  func.func @transform_7(%arg0: i32, %arg1: memref<1xi32, #tpu.memory_space<smem>>) -> (i32, i32) {
    %c0_i32 = arith.constant 0 : i32
    %c0_i32_0 = arith.constant 0 : i32
    %c0_i32_1 = arith.constant 0 : i32
    return %c0_i32, %c0_i32_0 : i32, i32
  }
  func.func @transform_8(%arg0: i32, %arg1: memref<1xi32, #tpu.memory_space<smem>>) -> (i32, i32) {
    %c0_i32 = arith.constant 0 : i32
    %c0_i32_0 = arith.constant 0 : i32
    %c0_i32_1 = arith.constant 0 : i32
    return %c0_i32, %c0_i32_0 : i32, i32
  }
  func.func @transform_9(%arg0: i32, %arg1: memref<1xi32, #tpu.memory_space<smem>>) -> (i32, i32) {
    %c0_i32 = arith.constant 0 : i32
    %c0_i32_0 = arith.constant 0 : i32
    %c0_i32_1 = arith.constant 0 : i32
    return %c0_i32, %c0_i32_0 : i32, i32
  }
  func.func @transform_10(%arg0: i32, %arg1: memref<1xi32, #tpu.memory_space<smem>>) -> (i32, i32) {
    %c0_i32 = arith.constant 0 : i32
    %c0_i32_0 = arith.constant 0 : i32
    %c0_i32_1 = arith.constant 0 : i32
    return %c0_i32, %c0_i32_0 : i32, i32
  }
}

</mosaic_0001>

<llo_original>
// kernel: improved_bilstm_forward.5
$region0: #{improved_bilstm_forward.5}
  #allocation0 [shape = 'u32[]', space=smem, size = 0x4, offset = 0x4, fixed_abs, tag = 'smem constant byte address 0x4 - core index']
  #allocation1 [shape = 'u32[144,128]{1,0:T(1,128)}', space=vmem, size = 0x12000, scoped, tag = 'internal scratch']
  %s0 = inlined_call_operand.vmem [shape: bf16[128,32], index: 0, kind: input, shape index: {}]
  %s1 = inlined_call_operand.vmem [shape: bf16[32,256], index: 1, kind: input, shape index: {}]
  %s2 = inlined_call_operand.vmem [shape: f32[1,256], index: 2, kind: input, shape index: {}]
  %s3 = inlined_call_operand.vmem [shape: bf16[128,256], index: 3, kind: output, shape index: {}]
  %s4 = sld [smem:[#allocation0]]
  $region22: #{improved_bilstm_forward.5} parent=0
    _
  %s6 = ssub.s32 1, %s4
  %s7 = scalar_select 0, %s6, %s4
  // Predicated region
  $region2: #{improved_bilstm_forward.5} parent=0 // pred_check
    _
  $region3: #{improved_bilstm_forward.5} parent=0 // pred_check_branch
    %9 = sbr.rel (0) target = $region5
  $region4: #{improved_bilstm_forward.5} parent=0 // pred_region
    _
  $region5: #{improved_bilstm_forward.5} parent=0 // pred_fallthru
    _
  // Predicated region
  $region6: #{improved_bilstm_forward.5} parent=0 // pred_check
    _
  $region7: #{improved_bilstm_forward.5} parent=0 // pred_check_branch
    %11 = sbr.rel (0) target = $region9
  $region8: #{improved_bilstm_forward.5} parent=0 // pred_region
    _
  $region9: #{improved_bilstm_forward.5} parent=0 // pred_fallthru
    _
  // Predicated region
  $region10: #{improved_bilstm_forward.5} parent=0 // pred_check
    _
  $region11: #{improved_bilstm_forward.5} parent=0 // pred_check_branch
    %13 = sbr.rel (0) target = $region13
  $region12: #{improved_bilstm_forward.5} parent=0 // pred_region
    _
  $region13: #{improved_bilstm_forward.5} parent=0 // pred_fallthru
    _
  %v15 = vld [vmem:[%s0] sm:$0xf]
  %v16 = vld [vmem:[%s0 + $0x4] sm:$0xf]
  %v17 = vld [vmem:[%s0 + $0x8] sm:$0xf]
  %v18 = vld [vmem:[%s0 + $0xc] sm:$0xf]
  %v19 = vld [vmem:[%s0 + $0x10] sm:$0xf]
  %v20 = vld [vmem:[%s0 + $0x14] sm:$0xf]
  %v21 = vld [vmem:[%s0 + $0x18] sm:$0xf]
  %v22 = vld [vmem:[%s0 + $0x1c] sm:$0xf]
  %v23 = vld [vmem:[%s0 + $0x20] sm:$0xf]
  %v24 = vld [vmem:[%s0 + $0x24] sm:$0xf]
  %v25 = vld [vmem:[%s0 + $0x28] sm:$0xf]
  %v26 = vld [vmem:[%s0 + $0x2c] sm:$0xf]
  %v27 = vld [vmem:[%s0 + $0x30] sm:$0xf]
  %v28 = vld [vmem:[%s0 + $0x34] sm:$0xf]
  %v29 = vld [vmem:[%s0 + $0x38] sm:$0xf]
  %v30 = vld [vmem:[%s0 + $0x3c] sm:$0xf]
  %v31 = vld [vmem:[%s1] sm:$0xff]
  %v32 = vld [vmem:[%s1 + $0x8] sm:$0xff]
  %v33 = vld [vmem:[%s1 + $0x10] sm:$0xff]
  %v34 = vld [vmem:[%s1 + $0x18] sm:$0xff]
  %v35 = vld [vmem:[%s2] sm:$0x3]
  %v37 = vlaneseq
  %v38 = vshrl.u32 %v37, 7
  %v39 = vsub.s32 0, %v38
  %v40 = vrot.slane %v35, %v39
  %v41 = vlaneseq
  %v42 = vshrl.u32 %v41, 7
  %v43 = vsub.s32 1, %v42
  %v44 = vrot.slane %v35, %v43
  %v63 = vunpack.c.l.b16 %v15
  %v64 = vunpack.c.l.b16 %v16
  %v65 = vunpack.c.l.b16 %v17
  %v66 = vunpack.c.l.b16 %v18
  %v67 = vunpack.c.l.b16 %v19
  %v68 = vunpack.c.l.b16 %v20
  %v69 = vunpack.c.l.b16 %v21
  %v70 = vunpack.c.l.b16 %v22
  %v71 = vunpack.c.l.b16 %v23
  %v72 = vunpack.c.l.b16 %v24
  %v73 = vunpack.c.l.b16 %v25
  %v74 = vunpack.c.l.b16 %v26
  %v75 = vunpack.c.l.b16 %v27
  %v76 = vunpack.c.l.b16 %v28
  %v77 = vunpack.c.l.b16 %v29
  %v78 = vunpack.c.l.b16 %v30
  %v79 = vpack.c.b16 %v64, %v63
  %v80 = vpack.c.b16 %v66, %v65
  %v81 = vpack.c.b16 %v68, %v67
  %v82 = vpack.c.b16 %v70, %v69
  %v83 = vpack.c.b16 %v72, %v71
  %v84 = vpack.c.b16 %v74, %v73
  %v85 = vpack.c.b16 %v76, %v75
  %v86 = vpack.c.b16 %v78, %v77
  %v91 = vunpack.c.l.b16 %v31
  %v92 = vunpack.c.h.b16 %v31
  %v93 = vunpack.c.l.b16 %v32
  %v94 = vunpack.c.h.b16 %v32
  %v95 = vunpack.c.l.b16 %v33
  %v96 = vunpack.c.h.b16 %v33
  %v97 = vunpack.c.l.b16 %v34
  %v98 = vunpack.c.h.b16 %v34
  %v99 = vpack.c.b16 %v93, %v91
  %v100 = vpack.c.b16 %v94, %v92
  %v101 = vpack.c.b16 %v97, %v95
  %v102 = vpack.c.b16 %v98, %v96
  %vm107 = vcmask 261120
  %v109 = vsel %vm107, %v79, 0
  %v112 = vsel %vm107, %v80, 0
  %v115 = vsel %vm107, %v81, 0
  %v118 = vsel %vm107, %v82, 0
  %v121 = vsel %vm107, %v83, 0
  %v124 = vsel %vm107, %v84, 0
  %v127 = vsel %vm107, %v85, 0
  %v130 = vsel %vm107, %v86, 0
  %132 = vmatprep.subr.bf16.mxu0 0
  %133 = vmatpush1.bf16.msra.mxu0 0
  %134 = vmatprep.subr.bf16.mxu0 0
  %135 = vmatpush1.bf16.msra.mxu0 0
  %136 = vmatprep.subr.bf16.mxu0 0
  %137 = vmatpush1.bf16.msra.mxu0 0
  %138 = vmatprep.subr.bf16.mxu0 0
  %139 = vmatpush1.bf16.msra.mxu0 0
  %140 = vmatprep.subr.bf16.mxu0 0
  %141 = vmatpush1.bf16.msra.mxu0 0
  %142 = vmatprep.subr.bf16.mxu0 0
  %143 = vmatpush1.bf16.msra.mxu0 0
  %144 = vmatprep.subr.bf16.mxu0 %v102
  %145 = vmatpush1.bf16.msra.mxu0 %v101
  %146 = vmatprep.subr.bf16.mxu0 %v100
  %147 = vmatpush1.bf16.msra.mxu0 %v99
  %148 = vmatprep.subr.bf16.mxu0 0
  %149 = vmatpush2.bf16.msra.mxu0 0
  %150 = vmatprep.subr.bf16.mxu0 0
  %151 = vmatpush2.bf16.msra.mxu0 0
  %152 = vmatprep.subr.bf16.mxu0 0
  %153 = vmatpush2.bf16.msra.mxu0 0
  %154 = vmatprep.subr.bf16.mxu0 0
  %155 = vmatpush2.bf16.msra.mxu0 0
  %156 = vmatprep.subr.bf16.mxu0 0
  %157 = vmatpush2.bf16.msra.mxu0 0
  %158 = vmatprep.subr.bf16.mxu0 0
  %159 = vmatpush2.bf16.msra.mxu0 0
  %160 = vmatprep.subr.bf16.mxu0 0
  %161 = vmatpush2.bf16.msra.mxu0 0
  %162 = vmatprep.subr.bf16.mxu0 0
  %163 = vmatpush2.bf16.msra.mxu0 0
  %164 = vmatprep.mubr.bf16.mxu0 0
  %165 = vmatmul.mubr.bf16.gmra.mxu0 %v109
  %v166 = vpop.f32.mrf.mxu0
  %v167 = vadd.f32 %v40, %v166
  %v168 = vpop.f32.mrf.mxu0
  %v169 = vadd.f32 %v44, %v168
  %v170 = vpop.f32.mrf.mxu0
  %v171 = vadd.f32 %v40, %v170
  %v172 = vpop.f32.mrf.mxu0
  %v173 = vadd.f32 %v44, %v172
  %174 = vmatprep.mubr.bf16.mxu0 0
  %175 = vmatmul.mubr.bf16.gmra.mxu0 %v112
  %v176 = vpop.f32.mrf.mxu0
  %v177 = vadd.f32 %v40, %v176
  %v178 = vpop.f32.mrf.mxu0
  %v179 = vadd.f32 %v44, %v178
  %v180 = vpop.f32.mrf.mxu0
  %v181 = vadd.f32 %v40, %v180
  %v182 = vpop.f32.mrf.mxu0
  %v183 = vadd.f32 %v44, %v182
  %184 = vmatprep.mubr.bf16.mxu0 0
  %185 = vmatmul.mubr.bf16.gmra.mxu0 %v115
  %v186 = vpop.f32.mrf.mxu0
  %v187 = vadd.f32 %v40, %v186
  %v188 = vpop.f32.mrf.mxu0
  %v189 = vadd.f32 %v44, %v188
  %v190 = vpop.f32.mrf.mxu0
  %v191 = vadd.f32 %v40, %v190
  %v192 = vpop.f32.mrf.mxu0
  %v193 = vadd.f32 %v44, %v192
  %194 = vmatprep.mubr.bf16.mxu0 0
  %195 = vmatmul.mubr.bf16.gmra.mxu0 %v118
  %v196 = vpop.f32.mrf.mxu0
  %v197 = vadd.f32 %v40, %v196
  %v198 = vpop.f32.mrf.mxu0
  %v199 = vadd.f32 %v44, %v198
  %v200 = vpop.f32.mrf.mxu0
  %v201 = vadd.f32 %v40, %v200
  %v202 = vpop.f32.mrf.mxu0
  %v203 = vadd.f32 %v44, %v202
  %204 = vmatprep.mubr.bf16.mxu0 0
  %205 = vmatmul.mubr.bf16.gmra.mxu0 %v121
  %v206 = vpop.f32.mrf.mxu0
  %v207 = vadd.f32 %v40, %v206
  %v208 = vpop.f32.mrf.mxu0
  %v209 = vadd.f32 %v44, %v208
  %v210 = vpop.f32.mrf.mxu0
  %v211 = vadd.f32 %v40, %v210
  %v212 = vpop.f32.mrf.mxu0
  %v213 = vadd.f32 %v44, %v212
  %214 = vmatprep.mubr.bf16.mxu0 0
  %215 = vmatmul.mubr.bf16.gmra.mxu0 %v124
  %v216 = vpop.f32.mrf.mxu0
  %v217 = vadd.f32 %v40, %v216
  %v218 = vpop.f32.mrf.mxu0
  %v219 = vadd.f32 %v44, %v218
  %v220 = vpop.f32.mrf.mxu0
  %v221 = vadd.f32 %v40, %v220
  %v222 = vpop.f32.mrf.mxu0
  %v223 = vadd.f32 %v44, %v222
  %224 = vmatprep.mubr.bf16.mxu0 0
  %225 = vmatmul.mubr.bf16.gmra.mxu0 %v127
  %v226 = vpop.f32.mrf.mxu0
  %v227 = vadd.f32 %v40, %v226
  %v228 = vpop.f32.mrf.mxu0
  %v229 = vadd.f32 %v44, %v228
  %v230 = vpop.f32.mrf.mxu0
  %v231 = vadd.f32 %v40, %v230
  %v232 = vpop.f32.mrf.mxu0
  %v233 = vadd.f32 %v44, %v232
  %234 = vmatprep.mubr.bf16.mxu0 0
  %235 = vmatmul.mubr.bf16.gmra.mxu0 %v130
  %v236 = vpop.f32.mrf.mxu0
  %v237 = vadd.f32 %v40, %v236
  %v238 = vpop.f32.mrf.mxu0
  %v239 = vadd.f32 %v44, %v238
  %v240 = vpop.f32.mrf.mxu0
  %v241 = vadd.f32 %v40, %v240
  %v242 = vpop.f32.mrf.mxu0
  %v243 = vadd.f32 %v44, %v242
  %244 = vdwg.mxu0
  %v245 = vpack.c.bf16 %v171, %v167
  %v246 = vpack.c.bf16 %v173, %v169
  %v247 = vpack.c.bf16 %v181, %v177
  %v248 = vpack.c.bf16 %v183, %v179
  %v249 = vpack.c.bf16 %v191, %v187
  %v250 = vpack.c.bf16 %v193, %v189
  %v251 = vpack.c.bf16 %v201, %v197
  %v252 = vpack.c.bf16 %v203, %v199
  %v253 = vpack.c.bf16 %v211, %v207
  %v254 = vpack.c.bf16 %v213, %v209
  %v255 = vpack.c.bf16 %v221, %v217
  %v256 = vpack.c.bf16 %v223, %v219
  %v257 = vpack.c.bf16 %v231, %v227
  %v258 = vpack.c.bf16 %v233, %v229
  %v259 = vpack.c.bf16 %v241, %v237
  %v260 = vpack.c.bf16 %v243, %v239
  %v277 = vunpack.c.l.b16 %v245
  %v278 = vunpack.c.l.b16 %v246
  %v279 = vunpack.c.h.b16 %v245
  %v280 = vunpack.c.h.b16 %v246
  %v281 = vunpack.c.l.b16 %v247
  %v282 = vunpack.c.l.b16 %v248
  %v283 = vunpack.c.h.b16 %v247
  %v284 = vunpack.c.h.b16 %v248
  %v285 = vunpack.c.l.b16 %v249
  %v286 = vunpack.c.l.b16 %v250
  %v287 = vunpack.c.h.b16 %v249
  %v288 = vunpack.c.h.b16 %v250
  %v289 = vunpack.c.l.b16 %v251
  %v290 = vunpack.c.l.b16 %v252
  %v291 = vunpack.c.h.b16 %v251
  %v292 = vunpack.c.h.b16 %v252
  %v293 = vunpack.c.l.b16 %v253
  %v294 = vunpack.c.l.b16 %v254
  %v295 = vunpack.c.h.b16 %v253
  %v296 = vunpack.c.h.b16 %v254
  %v297 = vunpack.c.l.b16 %v255
  %v298 = vunpack.c.l.b16 %v256
  %v299 = vunpack.c.h.b16 %v255
  %v300 = vunpack.c.h.b16 %v256
  %v301 = vunpack.c.l.b16 %v257
  %v302 = vunpack.c.l.b16 %v258
  %v303 = vunpack.c.h.b16 %v257
  %v304 = vunpack.c.h.b16 %v258
  %v305 = vunpack.c.l.b16 %v259
  %v306 = vunpack.c.l.b16 %v260
  %v307 = vunpack.c.h.b16 %v259
  %v308 = vunpack.c.h.b16 %v260
  %v309 = vpack.c.b16 %v278, %v277
  %v310 = vpack.c.b16 %v280, %v279
  %v311 = vpack.c.b16 %v282, %v281
  %v312 = vpack.c.b16 %v284, %v283
  %v313 = vpack.c.b16 %v286, %v285
  %v314 = vpack.c.b16 %v288, %v287
  %v315 = vpack.c.b16 %v290, %v289
  %v316 = vpack.c.b16 %v292, %v291
  %v317 = vpack.c.b16 %v294, %v293
  %v318 = vpack.c.b16 %v296, %v295
  %v319 = vpack.c.b16 %v298, %v297
  %v320 = vpack.c.b16 %v300, %v299
  %v321 = vpack.c.b16 %v302, %v301
  %v322 = vpack.c.b16 %v304, %v303
  %v323 = vpack.c.b16 %v306, %v305
  %v324 = vpack.c.b16 %v308, %v307
  %341 = vst [vmem:[%s3] sm:$0xff] %v309
  %342 = vst [vmem:[%s3 + $0x8] sm:$0xff] %v310
  %343 = vst [vmem:[%s3 + $0x10] sm:$0xff] %v311
  %344 = vst [vmem:[%s3 + $0x18] sm:$0xff] %v312
  %345 = vst [vmem:[%s3 + $0x20] sm:$0xff] %v313
  %346 = vst [vmem:[%s3 + $0x28] sm:$0xff] %v314
  %347 = vst [vmem:[%s3 + $0x30] sm:$0xff] %v315
  %348 = vst [vmem:[%s3 + $0x38] sm:$0xff] %v316
  %349 = vst [vmem:[%s3 + $0x40] sm:$0xff] %v317
  %350 = vst [vmem:[%s3 + $0x48] sm:$0xff] %v318
  %351 = vst [vmem:[%s3 + $0x50] sm:$0xff] %v319
  %352 = vst [vmem:[%s3 + $0x58] sm:$0xff] %v320
  %353 = vst [vmem:[%s3 + $0x60] sm:$0xff] %v321
  %354 = vst [vmem:[%s3 + $0x68] sm:$0xff] %v322
  %355 = vst [vmem:[%s3 + $0x70] sm:$0xff] %v323
  %356 = vst [vmem:[%s3 + $0x78] sm:$0xff] %v324
  // Predicated region
  $region14: #{improved_bilstm_forward.5} parent=0 // pred_check
    _
  $region15: #{improved_bilstm_forward.5} parent=0 // pred_check_branch
    %358 = sbr.rel (0) target = $region17
  $region16: #{improved_bilstm_forward.5} parent=0 // pred_region
    _
  $region17: #{improved_bilstm_forward.5} parent=0 // pred_fallthru
    _
  // Predicated region
  $region18: #{improved_bilstm_forward.5} parent=0 // pred_check
    _
  $region19: #{improved_bilstm_forward.5} parent=0 // pred_check_branch
    %360 = sbr.rel (0) target = $region21
  $region20: #{improved_bilstm_forward.5} parent=0 // pred_region
    _
  $region21: #{improved_bilstm_forward.5} parent=0 // pred_fallthru
    _

// kernel: improved_bilstm_forward.7
$region0: #{improved_bilstm_forward.7}
  #allocation0 [shape = 'u32[]', space=smem, size = 0x4, offset = 0x4, fixed_abs, tag = 'smem constant byte address 0x4 - core index']
  #allocation1 [shape = 'u32[144,128]{1,0:T(1,128)}', space=vmem, size = 0x12000, scoped, tag = 'internal scratch']
  %s0 = inlined_call_operand.vmem [shape: bf16[128,32], index: 0, kind: input, shape index: {}]
  %s1 = inlined_call_operand.vmem [shape: bf16[128,32], index: 1, kind: input, shape index: {}]
  %s2 = inlined_call_operand.vmem [shape: bf16[32,256], index: 2, kind: input, shape index: {}]
  %s3 = inlined_call_operand.vmem [shape: bf16[32,256], index: 3, kind: input, shape index: {}]
  %s4 = inlined_call_operand.vmem [shape: f32[1,256], index: 4, kind: input, shape index: {}]
  %s5 = inlined_call_operand.vmem [shape: bf16[128,256], index: 5, kind: output, shape index: {}]
  %s6 = sld [smem:[#allocation0]]
  $region30: #{improved_bilstm_forward.7} parent=0
    _
  %s8 = ssub.s32 1, %s6
  %s9 = scalar_select 0, %s8, %s6
  // Predicated region
  $region2: #{improved_bilstm_forward.7} parent=0 // pred_check
    _
  $region3: #{improved_bilstm_forward.7} parent=0 // pred_check_branch
    %11 = sbr.rel (0) target = $region5
  $region4: #{improved_bilstm_forward.7} parent=0 // pred_region
    _
  $region5: #{improved_bilstm_forward.7} parent=0 // pred_fallthru
    _
  // Predicated region
  $region6: #{improved_bilstm_forward.7} parent=0 // pred_check
    _
  $region7: #{improved_bilstm_forward.7} parent=0 // pred_check_branch
    %13 = sbr.rel (0) target = $region9
  $region8: #{improved_bilstm_forward.7} parent=0 // pred_region
    _
  $region9: #{improved_bilstm_forward.7} parent=0 // pred_fallthru
    _
  // Predicated region
  $region10: #{improved_bilstm_forward.7} parent=0 // pred_check
    _
  $region11: #{improved_bilstm_forward.7} parent=0 // pred_check_branch
    %15 = sbr.rel (0) target = $region13
  $region12: #{improved_bilstm_forward.7} parent=0 // pred_region
    _
  $region13: #{improved_bilstm_forward.7} parent=0 // pred_fallthru
    _
  // Predicated region
  $region14: #{improved_bilstm_forward.7} parent=0 // pred_check
    _
  $region15: #{improved_bilstm_forward.7} parent=0 // pred_check_branch
    %17 = sbr.rel (0) target = $region17
  $region16: #{improved_bilstm_forward.7} parent=0 // pred_region
    _
  $region17: #{improved_bilstm_forward.7} parent=0 // pred_fallthru
    _
  // Predicated region
  $region18: #{improved_bilstm_forward.7} parent=0 // pred_check
    _
  $region19: #{improved_bilstm_forward.7} parent=0 // pred_check_branch
    %19 = sbr.rel (0) target = $region21
  $region20: #{improved_bilstm_forward.7} parent=0 // pred_region
    _
  $region21: #{improved_bilstm_forward.7} parent=0 // pred_fallthru
    _
  %v21 = vld [vmem:[%s0] sm:$0xf]
  %v22 = vld [vmem:[%s0 + $0x4] sm:$0xf]
  %v23 = vld [vmem:[%s0 + $0x8] sm:$0xf]
  %v24 = vld [vmem:[%s0 + $0xc] sm:$0xf]
  %v25 = vld [vmem:[%s0 + $0x10] sm:$0xf]
  %v26 = vld [vmem:[%s0 + $0x14] sm:$0xf]
  %v27 = vld [vmem:[%s0 + $0x18] sm:$0xf]
  %v28 = vld [vmem:[%s0 + $0x1c] sm:$0xf]
  %v29 = vld [vmem:[%s0 + $0x20] sm:$0xf]
  %v30 = vld [vmem:[%s0 + $0x24] sm:$0xf]
  %v31 = vld [vmem:[%s0 + $0x28] sm:$0xf]
  %v32 = vld [vmem:[%s0 + $0x2c] sm:$0xf]
  %v33 = vld [vmem:[%s0 + $0x30] sm:$0xf]
  %v34 = vld [vmem:[%s0 + $0x34] sm:$0xf]
  %v35 = vld [vmem:[%s0 + $0x38] sm:$0xf]
  %v36 = vld [vmem:[%s0 + $0x3c] sm:$0xf]
  %v37 = vld [vmem:[%s2] sm:$0xff]
  %v38 = vld [vmem:[%s2 + $0x8] sm:$0xff]
  %v39 = vld [vmem:[%s2 + $0x10] sm:$0xff]
  %v40 = vld [vmem:[%s2 + $0x18] sm:$0xff]
  %v41 = vld [vmem:[%s1] sm:$0xf]
  %v42 = vld [vmem:[%s1 + $0x4] sm:$0xf]
  %v43 = vld [vmem:[%s1 + $0x8] sm:$0xf]
  %v44 = vld [vmem:[%s1 + $0xc] sm:$0xf]
  %v45 = vld [vmem:[%s1 + $0x10] sm:$0xf]
  %v46 = vld [vmem:[%s1 + $0x14] sm:$0xf]
  %v47 = vld [vmem:[%s1 + $0x18] sm:$0xf]
  %v48 = vld [vmem:[%s1 + $0x1c] sm:$0xf]
  %v49 = vld [vmem:[%s1 + $0x20] sm:$0xf]
  %v50 = vld [vmem:[%s1 + $0x24] sm:$0xf]
  %v51 = vld [vmem:[%s1 + $0x28] sm:$0xf]
  %v52 = vld [vmem:[%s1 + $0x2c] sm:$0xf]
  %v53 = vld [vmem:[%s1 + $0x30] sm:$0xf]
  %v54 = vld [vmem:[%s1 + $0x34] sm:$0xf]
  %v55 = vld [vmem:[%s1 + $0x38] sm:$0xf]
  %v56 = vld [vmem:[%s1 + $0x3c] sm:$0xf]
  %v57 = vld [vmem:[%s3] sm:$0xff]
  %v58 = vld [vmem:[%s3 + $0x8] sm:$0xff]
  %v59 = vld [vmem:[%s3 + $0x10] sm:$0xff]
  %v60 = vld [vmem:[%s3 + $0x18] sm:$0xff]
  %v77 = vunpack.c.l.b16 %v41
  %v78 = vunpack.c.l.b16 %v42
  %v79 = vunpack.c.l.b16 %v43
  %v80 = vunpack.c.l.b16 %v44
  %v81 = vunpack.c.l.b16 %v45
  %v82 = vunpack.c.l.b16 %v46
  %v83 = vunpack.c.l.b16 %v47
  %v84 = vunpack.c.l.b16 %v48
  %v85 = vunpack.c.l.b16 %v49
  %v86 = vunpack.c.l.b16 %v50
  %v87 = vunpack.c.l.b16 %v51
  %v88 = vunpack.c.l.b16 %v52
  %v89 = vunpack.c.l.b16 %v53
  %v90 = vunpack.c.l.b16 %v54
  %v91 = vunpack.c.l.b16 %v55
  %v92 = vunpack.c.l.b16 %v56
  %v93 = vpack.c.b16 %v78, %v77
  %v94 = vpack.c.b16 %v80, %v79
  %v95 = vpack.c.b16 %v82, %v81
  %v96 = vpack.c.b16 %v84, %v83
  %v97 = vpack.c.b16 %v86, %v85
  %v98 = vpack.c.b16 %v88, %v87
  %v99 = vpack.c.b16 %v90, %v89
  %v100 = vpack.c.b16 %v92, %v91
  %v105 = vunpack.c.l.b16 %v57
  %v106 = vunpack.c.h.b16 %v57
  %v107 = vunpack.c.l.b16 %v58
  %v108 = vunpack.c.h.b16 %v58
  %v109 = vunpack.c.l.b16 %v59
  %v110 = vunpack.c.h.b16 %v59
  %v111 = vunpack.c.l.b16 %v60
  %v112 = vunpack.c.h.b16 %v60
  %v113 = vpack.c.b16 %v107, %v105
  %v114 = vpack.c.b16 %v108, %v106
  %v115 = vpack.c.b16 %v111, %v109
  %v116 = vpack.c.b16 %v112, %v110
  %vm121 = vcmask 261120
  %v123 = vsel %vm121, %v93, 0
  %v126 = vsel %vm121, %v94, 0
  %v129 = vsel %vm121, %v95, 0
  %v132 = vsel %vm121, %v96, 0
  %v135 = vsel %vm121, %v97, 0
  %v138 = vsel %vm121, %v98, 0
  %v141 = vsel %vm121, %v99, 0
  %v144 = vsel %vm121, %v100, 0
  %146 = vmatprep.subr.bf16.mxu0 0
  %147 = vmatpush1.bf16.msra.mxu0 0
  %148 = vmatprep.subr.bf16.mxu0 0
  %149 = vmatpush1.bf16.msra.mxu0 0
  %150 = vmatprep.subr.bf16.mxu0 0
  %151 = vmatpush1.bf16.msra.mxu0 0
  %152 = vmatprep.subr.bf16.mxu0 0
  %153 = vmatpush1.bf16.msra.mxu0 0
  %154 = vmatprep.subr.bf16.mxu0 0
  %155 = vmatpush1.bf16.msra.mxu0 0
  %156 = vmatprep.subr.bf16.mxu0 0
  %157 = vmatpush1.bf16.msra.mxu0 0
  %158 = vmatprep.subr.bf16.mxu0 %v116
  %159 = vmatpush1.bf16.msra.mxu0 %v115
  %160 = vmatprep.subr.bf16.mxu0 %v114
  %161 = vmatpush1.bf16.msra.mxu0 %v113
  %162 = vmatprep.subr.bf16.mxu0 0
  %163 = vmatpush2.bf16.msra.mxu0 0
  %164 = vmatprep.subr.bf16.mxu0 0
  %165 = vmatpush2.bf16.msra.mxu0 0
  %166 = vmatprep.subr.bf16.mxu0 0
  %167 = vmatpush2.bf16.msra.mxu0 0
  %168 = vmatprep.subr.bf16.mxu0 0
  %169 = vmatpush2.bf16.msra.mxu0 0
  %170 = vmatprep.subr.bf16.mxu0 0
  %171 = vmatpush2.bf16.msra.mxu0 0
  %172 = vmatprep.subr.bf16.mxu0 0
  %173 = vmatpush2.bf16.msra.mxu0 0
  %174 = vmatprep.subr.bf16.mxu0 0
  %175 = vmatpush2.bf16.msra.mxu0 0
  %176 = vmatprep.subr.bf16.mxu0 0
  %177 = vmatpush2.bf16.msra.mxu0 0
  %178 = vmatprep.mubr.bf16.mxu0 0
  %179 = vmatmul.mubr.bf16.gmra.mxu0 %v123
  %v180 = vpop.f32.mrf.mxu0
  %v181 = vadd.f32 0.0, %v180
  %v182 = vpop.f32.mrf.mxu0
  %v183 = vadd.f32 0.0, %v182
  %v184 = vpop.f32.mrf.mxu0
  %v185 = vadd.f32 0.0, %v184
  %v186 = vpop.f32.mrf.mxu0
  %v187 = vadd.f32 0.0, %v186
  %188 = vmatprep.mubr.bf16.mxu0 0
  %189 = vmatmul.mubr.bf16.gmra.mxu0 %v126
  %v190 = vpop.f32.mrf.mxu0
  %v191 = vadd.f32 0.0, %v190
  %v192 = vpop.f32.mrf.mxu0
  %v193 = vadd.f32 0.0, %v192
  %v194 = vpop.f32.mrf.mxu0
  %v195 = vadd.f32 0.0, %v194
  %v196 = vpop.f32.mrf.mxu0
  %v197 = vadd.f32 0.0, %v196
  %198 = vmatprep.mubr.bf16.mxu0 0
  %199 = vmatmul.mubr.bf16.gmra.mxu0 %v129
  %v200 = vpop.f32.mrf.mxu0
  %v201 = vadd.f32 0.0, %v200
  %v202 = vpop.f32.mrf.mxu0
  %v203 = vadd.f32 0.0, %v202
  %v204 = vpop.f32.mrf.mxu0
  %v205 = vadd.f32 0.0, %v204
  %v206 = vpop.f32.mrf.mxu0
  %v207 = vadd.f32 0.0, %v206
  %208 = vmatprep.mubr.bf16.mxu0 0
  %209 = vmatmul.mubr.bf16.gmra.mxu0 %v132
  %v210 = vpop.f32.mrf.mxu0
  %v211 = vadd.f32 0.0, %v210
  %v212 = vpop.f32.mrf.mxu0
  %v213 = vadd.f32 0.0, %v212
  %v214 = vpop.f32.mrf.mxu0
  %v215 = vadd.f32 0.0, %v214
  %v216 = vpop.f32.mrf.mxu0
  %v217 = vadd.f32 0.0, %v216
  %218 = vmatprep.mubr.bf16.mxu0 0
  %219 = vmatmul.mubr.bf16.gmra.mxu0 %v135
  %v220 = vpop.f32.mrf.mxu0
  %v221 = vadd.f32 0.0, %v220
  %v222 = vpop.f32.mrf.mxu0
  %v223 = vadd.f32 0.0, %v222
  %v224 = vpop.f32.mrf.mxu0
  %v225 = vadd.f32 0.0, %v224
  %v226 = vpop.f32.mrf.mxu0
  %v227 = vadd.f32 0.0, %v226
  %228 = vmatprep.mubr.bf16.mxu0 0
  %229 = vmatmul.mubr.bf16.gmra.mxu0 %v138
  %v230 = vpop.f32.mrf.mxu0
  %v231 = vadd.f32 0.0, %v230
  %v232 = vpop.f32.mrf.mxu0
  %v233 = vadd.f32 0.0, %v232
  %v234 = vpop.f32.mrf.mxu0
  %v235 = vadd.f32 0.0, %v234
  %v236 = vpop.f32.mrf.mxu0
  %v237 = vadd.f32 0.0, %v236
  %238 = vmatprep.mubr.bf16.mxu0 0
  %239 = vmatmul.mubr.bf16.gmra.mxu0 %v141
  %v240 = vpop.f32.mrf.mxu0
  %v241 = vadd.f32 0.0, %v240
  %v242 = vpop.f32.mrf.mxu0
  %v243 = vadd.f32 0.0, %v242
  %v244 = vpop.f32.mrf.mxu0
  %v245 = vadd.f32 0.0, %v244
  %v246 = vpop.f32.mrf.mxu0
  %v247 = vadd.f32 0.0, %v246
  %248 = vmatprep.mubr.bf16.mxu0 0
  %249 = vmatmul.mubr.bf16.gmra.mxu0 %v144
  %v250 = vpop.f32.mrf.mxu0
  %v251 = vadd.f32 0.0, %v250
  %v252 = vpop.f32.mrf.mxu0
  %v253 = vadd.f32 0.0, %v252
  %v254 = vpop.f32.mrf.mxu0
  %v255 = vadd.f32 0.0, %v254
  %v256 = vpop.f32.mrf.mxu0
  %v257 = vadd.f32 0.0, %v256
  %258 = vdwg.mxu0
  %v275 = vunpack.c.l.b16 %v21
  %v276 = vunpack.c.l.b16 %v22
  %v277 = vunpack.c.l.b16 %v23
  %v278 = vunpack.c.l.b16 %v24
  %v279 = vunpack.c.l.b16 %v25
  %v280 = vunpack.c.l.b16 %v26
  %v281 = vunpack.c.l.b16 %v27
  %v282 = vunpack.c.l.b16 %v28
  %v283 = vunpack.c.l.b16 %v29
  %v284 = vunpack.c.l.b16 %v30
  %v285 = vunpack.c.l.b16 %v31
  %v286 = vunpack.c.l.b16 %v32
  %v287 = vunpack.c.l.b16 %v33
  %v288 = vunpack.c.l.b16 %v34
  %v289 = vunpack.c.l.b16 %v35
  %v290 = vunpack.c.l.b16 %v36
  %v291 = vpack.c.b16 %v276, %v275
  %v292 = vpack.c.b16 %v278, %v277
  %v293 = vpack.c.b16 %v280, %v279
  %v294 = vpack.c.b16 %v282, %v281
  %v295 = vpack.c.b16 %v284, %v283
  %v296 = vpack.c.b16 %v286, %v285
  %v297 = vpack.c.b16 %v288, %v287
  %v298 = vpack.c.b16 %v290, %v289
  %v303 = vunpack.c.l.b16 %v37
  %v304 = vunpack.c.h.b16 %v37
  %v305 = vunpack.c.l.b16 %v38
  %v306 = vunpack.c.h.b16 %v38
  %v307 = vunpack.c.l.b16 %v39
  %v308 = vunpack.c.h.b16 %v39
  %v309 = vunpack.c.l.b16 %v40
  %v310 = vunpack.c.h.b16 %v40
  %v311 = vpack.c.b16 %v305, %v303
  %v312 = vpack.c.b16 %v306, %v304
  %v313 = vpack.c.b16 %v309, %v307
  %v314 = vpack.c.b16 %v310, %v308
  %v320 = vsel %vm121, %v291, 0
  %v323 = vsel %vm121, %v292, 0
  %v326 = vsel %vm121, %v293, 0
  %v329 = vsel %vm121, %v294, 0
  %v332 = vsel %vm121, %v295, 0
  %v335 = vsel %vm121, %v296, 0
  %v338 = vsel %vm121, %v297, 0
  %v341 = vsel %vm121, %v298, 0
  %343 = vmatprep.subr.bf16.mxu0 0
  %344 = vmatpush1.bf16.msra.mxu0 0
  %345 = vmatprep.subr.bf16.mxu0 0
  %346 = vmatpush1.bf16.msra.mxu0 0
  %347 = vmatprep.subr.bf16.mxu0 0
  %348 = vmatpush1.bf16.msra.mxu0 0
  %349 = vmatprep.subr.bf16.mxu0 0
  %350 = vmatpush1.bf16.msra.mxu0 0
  %351 = vmatprep.subr.bf16.mxu0 0
  %352 = vmatpush1.bf16.msra.mxu0 0
  %353 = vmatprep.subr.bf16.mxu0 0
  %354 = vmatpush1.bf16.msra.mxu0 0
  %355 = vmatprep.subr.bf16.mxu0 %v314
  %356 = vmatpush1.bf16.msra.mxu0 %v313
  %357 = vmatprep.subr.bf16.mxu0 %v312
  %358 = vmatpush1.bf16.msra.mxu0 %v311
  %359 = vmatprep.subr.bf16.mxu0 0
  %360 = vmatpush2.bf16.msra.mxu0 0
  %361 = vmatprep.subr.bf16.mxu0 0
  %362 = vmatpush2.bf16.msra.mxu0 0
  %363 = vmatprep.subr.bf16.mxu0 0
  %364 = vmatpush2.bf16.msra.mxu0 0
  %365 = vmatprep.subr.bf16.mxu0 0
  %366 = vmatpush2.bf16.msra.mxu0 0
  %367 = vmatprep.subr.bf16.mxu0 0
  %368 = vmatpush2.bf16.msra.mxu0 0
  %369 = vmatprep.subr.bf16.mxu0 0
  %370 = vmatpush2.bf16.msra.mxu0 0
  %371 = vmatprep.subr.bf16.mxu0 0
  %372 = vmatpush2.bf16.msra.mxu0 0
  %373 = vmatprep.subr.bf16.mxu0 0
  %374 = vmatpush2.bf16.msra.mxu0 0
  %375 = vmatprep.mubr.bf16.mxu0 0
  %376 = vmatmul.mubr.bf16.gmra.mxu0 %v320
  %v377 = vpop.f32.mrf.mxu0
  %v378 = vadd.f32 %v181, %v377
  %v379 = vpop.f32.mrf.mxu0
  %v380 = vadd.f32 %v183, %v379
  %v381 = vpop.f32.mrf.mxu0
  %v382 = vadd.f32 %v185, %v381
  %v383 = vpop.f32.mrf.mxu0
  %v384 = vadd.f32 %v187, %v383
  %385 = vmatprep.mubr.bf16.mxu0 0
  %386 = vmatmul.mubr.bf16.gmra.mxu0 %v323
  %v387 = vpop.f32.mrf.mxu0
  %v388 = vadd.f32 %v191, %v387
  %v389 = vpop.f32.mrf.mxu0
  %v390 = vadd.f32 %v193, %v389
  %v391 = vpop.f32.mrf.mxu0
  %v392 = vadd.f32 %v195, %v391
  %v393 = vpop.f32.mrf.mxu0
  %v394 = vadd.f32 %v197, %v393
  %395 = vmatprep.mubr.bf16.mxu0 0
  %396 = vmatmul.mubr.bf16.gmra.mxu0 %v326
  %v397 = vpop.f32.mrf.mxu0
  %v398 = vadd.f32 %v201, %v397
  %v399 = vpop.f32.mrf.mxu0
  %v400 = vadd.f32 %v203, %v399
  %v401 = vpop.f32.mrf.mxu0
  %v402 = vadd.f32 %v205, %v401
  %v403 = vpop.f32.mrf.mxu0
  %v404 = vadd.f32 %v207, %v403
  %405 = vmatprep.mubr.bf16.mxu0 0
  %406 = vmatmul.mubr.bf16.gmra.mxu0 %v329
  %v407 = vpop.f32.mrf.mxu0
  %v408 = vadd.f32 %v211, %v407
  %v409 = vpop.f32.mrf.mxu0
  %v410 = vadd.f32 %v213, %v409
  %v411 = vpop.f32.mrf.mxu0
  %v412 = vadd.f32 %v215, %v411
  %v413 = vpop.f32.mrf.mxu0
  %v414 = vadd.f32 %v217, %v413
  %415 = vmatprep.mubr.bf16.mxu0 0
  %416 = vmatmul.mubr.bf16.gmra.mxu0 %v332
  %v417 = vpop.f32.mrf.mxu0
  %v418 = vadd.f32 %v221, %v417
  %v419 = vpop.f32.mrf.mxu0
  %v420 = vadd.f32 %v223, %v419
  %v421 = vpop.f32.mrf.mxu0
  %v422 = vadd.f32 %v225, %v421
  %v423 = vpop.f32.mrf.mxu0
  %v424 = vadd.f32 %v227, %v423
  %425 = vmatprep.mubr.bf16.mxu0 0
  %426 = vmatmul.mubr.bf16.gmra.mxu0 %v335
  %v427 = vpop.f32.mrf.mxu0
  %v428 = vadd.f32 %v231, %v427
  %v429 = vpop.f32.mrf.mxu0
  %v430 = vadd.f32 %v233, %v429
  %v431 = vpop.f32.mrf.mxu0
  %v432 = vadd.f32 %v235, %v431
  %v433 = vpop.f32.mrf.mxu0
  %v434 = vadd.f32 %v237, %v433
  %435 = vmatprep.mubr.bf16.mxu0 0
  %436 = vmatmul.mubr.bf16.gmra.mxu0 %v338
  %v437 = vpop.f32.mrf.mxu0
  %v438 = vadd.f32 %v241, %v437
  %v439 = vpop.f32.mrf.mxu0
  %v440 = vadd.f32 %v243, %v439
  %v441 = vpop.f32.mrf.mxu0
  %v442 = vadd.f32 %v245, %v441
  %v443 = vpop.f32.mrf.mxu0
  %v444 = vadd.f32 %v247, %v443
  %445 = vmatprep.mubr.bf16.mxu0 0
  %446 = vmatmul.mubr.bf16.gmra.mxu0 %v341
  %v447 = vpop.f32.mrf.mxu0
  %v448 = vadd.f32 %v251, %v447
  %v449 = vpop.f32.mrf.mxu0
  %v450 = vadd.f32 %v253, %v449
  %v451 = vpop.f32.mrf.mxu0
  %v452 = vadd.f32 %v255, %v451
  %v453 = vpop.f32.mrf.mxu0
  %v454 = vadd.f32 %v257, %v453
  %455 = vdwg.mxu0
  %v456 = vld [vmem:[%s4] sm:$0x3]
  %v458 = vlaneseq
  %v459 = vshrl.u32 %v458, 7
  %v460 = vsub.s32 0, %v459
  %v461 = vrot.slane %v456, %v460
  %v462 = vlaneseq
  %v463 = vshrl.u32 %v462, 7
  %v464 = vsub.s32 1, %v463
  %v465 = vrot.slane %v456, %v464
  %v468 = vadd.f32 %v378, %v461
  %v469 = vadd.f32 %v380, %v465
  %v470 = vadd.f32 %v382, %v461
  %v471 = vadd.f32 %v384, %v465
  %v472 = vadd.f32 %v388, %v461
  %v473 = vadd.f32 %v390, %v465
  %v474 = vadd.f32 %v392, %v461
  %v475 = vadd.f32 %v394, %v465
  %v476 = vadd.f32 %v398, %v461
  %v477 = vadd.f32 %v400, %v465
  %v478 = vadd.f32 %v402, %v461
  %v479 = vadd.f32 %v404, %v465
  %v480 = vadd.f32 %v408, %v461
  %v481 = vadd.f32 %v410, %v465
  %v482 = vadd.f32 %v412, %v461
  %v483 = vadd.f32 %v414, %v465
  %v484 = vadd.f32 %v418, %v461
  %v485 = vadd.f32 %v420, %v465
  %v486 = vadd.f32 %v422, %v461
  %v487 = vadd.f32 %v424, %v465
  %v488 = vadd.f32 %v428, %v461
  %v489 = vadd.f32 %v430, %v465
  %v490 = vadd.f32 %v432, %v461
  %v491 = vadd.f32 %v434, %v465
  %v492 = vadd.f32 %v438, %v461
  %v493 = vadd.f32 %v440, %v465
  %v494 = vadd.f32 %v442, %v461
  %v495 = vadd.f32 %v444, %v465
  %v496 = vadd.f32 %v448, %v461
  %v497 = vadd.f32 %v450, %v465
  %v498 = vadd.f32 %v452, %v461
  %v499 = vadd.f32 %v454, %v465
  %v500 = vpack.c.bf16 %v470, %v468
  %v501 = vpack.c.bf16 %v471, %v469
  %v502 = vpack.c.bf16 %v474, %v472
  %v503 = vpack.c.bf16 %v475, %v473
  %v504 = vpack.c.bf16 %v478, %v476
  %v505 = vpack.c.bf16 %v479, %v477
  %v506 = vpack.c.bf16 %v482, %v480
  %v507 = vpack.c.bf16 %v483, %v481
  %v508 = vpack.c.bf16 %v486, %v484
  %v509 = vpack.c.bf16 %v487, %v485
  %v510 = vpack.c.bf16 %v490, %v488
  %v511 = vpack.c.bf16 %v491, %v489
  %v512 = vpack.c.bf16 %v494, %v492
  %v513 = vpack.c.bf16 %v495, %v493
  %v514 = vpack.c.bf16 %v498, %v496
  %v515 = vpack.c.bf16 %v499, %v497
  %v532 = vunpack.c.l.b16 %v500
  %v533 = vunpack.c.l.b16 %v501
  %v534 = vunpack.c.h.b16 %v500
  %v535 = vunpack.c.h.b16 %v501
  %v536 = vunpack.c.l.b16 %v502
  %v537 = vunpack.c.l.b16 %v503
  %v538 = vunpack.c.h.b16 %v502
  %v539 = vunpack.c.h.b16 %v503
  %v540 = vunpack.c.l.b16 %v504
  %v541 = vunpack.c.l.b16 %v505
  %v542 = vunpack.c.h.b16 %v504
  %v543 = vunpack.c.h.b16 %v505
  %v544 = vunpack.c.l.b16 %v506
  %v545 = vunpack.c.l.b16 %v507
  %v546 = vunpack.c.h.b16 %v506
  %v547 = vunpack.c.h.b16 %v507
  %v548 = vunpack.c.l.b16 %v508
  %v549 = vunpack.c.l.b16 %v509
  %v550 = vunpack.c.h.b16 %v508
  %v551 = vunpack.c.h.b16 %v509
  %v552 = vunpack.c.l.b16 %v510
  %v553 = vunpack.c.l.b16 %v511
  %v554 = vunpack.c.h.b16 %v510
  %v555 = vunpack.c.h.b16 %v511
  %v556 = vunpack.c.l.b16 %v512
  %v557 = vunpack.c.l.b16 %v513
  %v558 = vunpack.c.h.b16 %v512
  %v559 = vunpack.c.h.b16 %v513
  %v560 = vunpack.c.l.b16 %v514
  %v561 = vunpack.c.l.b16 %v515
  %v562 = vunpack.c.h.b16 %v514
  %v563 = vunpack.c.h.b16 %v515
  %v564 = vpack.c.b16 %v533, %v532
  %v565 = vpack.c.b16 %v535, %v534
  %v566 = vpack.c.b16 %v537, %v536
  %v567 = vpack.c.b16 %v539, %v538
  %v568 = vpack.c.b16 %v541, %v540
  %v569 = vpack.c.b16 %v543, %v542
  %v570 = vpack.c.b16 %v545, %v544
  %v571 = vpack.c.b16 %v547, %v546
  %v572 = vpack.c.b16 %v549, %v548
  %v573 = vpack.c.b16 %v551, %v550
  %v574 = vpack.c.b16 %v553, %v552
  %v575 = vpack.c.b16 %v555, %v554
  %v576 = vpack.c.b16 %v557, %v556
  %v577 = vpack.c.b16 %v559, %v558
  %v578 = vpack.c.b16 %v561, %v560
  %v579 = vpack.c.b16 %v563, %v562
  %596 = vst [vmem:[%s5] sm:$0xff] %v564
  %597 = vst [vmem:[%s5 + $0x8] sm:$0xff] %v565
  %598 = vst [vmem:[%s5 + $0x10] sm:$0xff] %v566
  %599 = vst [vmem:[%s5 + $0x18] sm:$0xff] %v567
  %600 = vst [vmem:[%s5 + $0x20] sm:$0xff] %v568
  %601 = vst [vmem:[%s5 + $0x28] sm:$0xff] %v569
  %602 = vst [vmem:[%s5 + $0x30] sm:$0xff] %v570
  %603 = vst [vmem:[%s5 + $0x38] sm:$0xff] %v571
  %604 = vst [vmem:[%s5 + $0x40] sm:$0xff] %v572
  %605 = vst [vmem:[%s5 + $0x48] sm:$0xff] %v573
  %606 = vst [vmem:[%s5 + $0x50] sm:$0xff] %v574
  %607 = vst [vmem:[%s5 + $0x58] sm:$0xff] %v575
  %608 = vst [vmem:[%s5 + $0x60] sm:$0xff] %v576
  %609 = vst [vmem:[%s5 + $0x68] sm:$0xff] %v577
  %610 = vst [vmem:[%s5 + $0x70] sm:$0xff] %v578
  %611 = vst [vmem:[%s5 + $0x78] sm:$0xff] %v579
  // Predicated region
  $region22: #{improved_bilstm_forward.7} parent=0 // pred_check
    _
  $region23: #{improved_bilstm_forward.7} parent=0 // pred_check_branch
    %613 = sbr.rel (0) target = $region25
  $region24: #{improved_bilstm_forward.7} parent=0 // pred_region
    _
  $region25: #{improved_bilstm_forward.7} parent=0 // pred_fallthru
    _
  // Predicated region
  $region26: #{improved_bilstm_forward.7} parent=0 // pred_check
    _
  $region27: #{improved_bilstm_forward.7} parent=0 // pred_check_branch
    %615 = sbr.rel (0) target = $region29
  $region28: #{improved_bilstm_forward.7} parent=0 // pred_region
    _
  $region29: #{improved_bilstm_forward.7} parent=0 // pred_fallthru
    _

// kernel: improved_bilstm_forward.6
$region0: #{improved_bilstm_forward.6}
  #allocation0 [shape = 'u32[]', space=smem, size = 0x4, offset = 0x4, fixed_abs, tag = 'smem constant byte address 0x4 - core index']
  #allocation1 [shape = 'u32[144,128]{1,0:T(1,128)}', space=vmem, size = 0x12000, scoped, tag = 'internal scratch']
  #allocation2 [shape = 'f32[32,32]{1,0:T(8,128)}', space=vmem, size = 0x4000, scoped, tag = 'scratch operand']
  #allocation3 [shape = 'f32[32,32]{1,0:T(8,128)}', space=vmem, size = 0x4000, scoped, tag = 'scratch operand']
  #allocation4 [shape = 's32[1]{0}', space=sflag, size = 0x4, scoped, tag = 'scoped memory for improved_bilstm_forward.6']
  #allocation5 [shape = 's32[1]{0:T(128)S(6)}', space=smem, size = 0x200, scoped, tag = 'prefetched SMEM operand 0']
  %s0 = inlined_call_operand.<no memory space> [shape: s32[1], index: 0, kind: input, shape index: {}]
  %s1 = inlined_call_operand.vmem [shape: s32[16,1], index: 1, kind: input, shape index: {}]
  %s2 = inlined_call_operand.vmem [shape: bf16[128,256], index: 2, kind: input, shape index: {}, may-alias: {2,3}]
  %s3 = inlined_call_operand.vmem [shape: bf16[128,256], index: 3, kind: input, shape index: {}, may-alias: {2,3}]
  %s4 = inlined_call_operand.vmem [shape: bf16[32,256], index: 4, kind: input, shape index: {}]
  %s5 = inlined_call_operand.vmem [shape: bf16[128,32], index: 5, kind: output, shape index: {0}]
  %s6 = inlined_call_operand.vmem [shape: bf16[128,32], index: 6, kind: output, shape index: {1}]
  %7 = xla_tuple %s5, %s6
  %s8 = sld [smem:[#allocation0]]
  $region151: #{improved_bilstm_forward.6} parent=0
    _
  %s10 = ssub.s32 1, %s8
  %s11 = scalar_select 0, %s10, %s8
  %12 = sst [smem:[#allocation5]] %s0
  $region1: #{improved_bilstm_forward.6} parent=0
    #allocation6 [shape = 'u8[8192]{0}', space=vmem, size = 0x2000, scoped, tag = 'input window, operand 2']
    #allocation7 [shape = 'u8[8192]{0}', space=vmem, size = 0x2000, scoped, tag = 'input window, operand 3']
    loop: start=0, step=1, limit=10
    $region2: #{improved_bilstm_forward.6} parent=1 // loop_pre_header
      _
    $region3: #{improved_bilstm_forward.6} parent=1 // loop_header
      %s14 = sphi 0, %s18
      %p15 = scmp.ge.s32.totalorder %s14, 10
      %s22 = sphi 0, %s22
      %s24 = sphi 0, %s22
      %s25 = sphi 0, %s24
      %s39 = sphi 0, %s25
      %s45 = sphi 0, %s47
      %s48 = sphi 0, %s45
      %s49 = sphi 0, %s48
      %s65 = sphi 0, %s49
      %s81 = sphi 0, %s83
      %s84 = sphi 0, %s81
      %s85 = sphi 0, %s84
      %s101 = sphi 0, %s85
      %s105 = sphi 0, %s105
      %s107 = sphi 0, %s105
      %s108 = sphi 0, %s107
      %s122 = sphi 0, %s108
      %s128 = sphi 0, %s130
      %s131 = sphi 0, %s128
      %s132 = sphi 0, %s131
      %s148 = sphi 0, %s132
      %s164 = sphi 0, %s166
      %s167 = sphi 0, %s164
      %s168 = sphi 0, %s167
      %s184 = sphi 0, %s168
    $region4: #{improved_bilstm_forward.6} parent=1 // loop_header_branch
      %17 = sbr.rel (%p15) target = $region8
    $region5: #{improved_bilstm_forward.6} parent=1 // loop_body
      %s19 = ssub.s32 %s14, 1
      %s20 = ssub.s32 %s14, 2
      %s21 = sadd.s32 %s14, 1
      %s23 = sadd.s32 %s22, 1
      %p26 = scmp.eq.s32.totalorder %s14, 7
      %p27 = scmp.ne.s32.totalorder %s22, %s24
      %p28 = scmp.eq.s32.totalorder %s14, 0
      %p29 = por %p27, %p28
      %p30 = scmp.ne.s32.totalorder %s22, %s24
      %p31 = scmp.eq.s32.totalorder %s19, 7
      %p32 = por %p30, %p31
      %p33 = scmp.ne.s32.totalorder %s24, %s25
      %p34 = scmp.eq.s32.totalorder %s19, 0
      %p35 = por %p33, %p34
      %p36 = scmp.ne.s32.totalorder %s24, %s25
      %p37 = scmp.eq.s32.totalorder %s20, 7
      %p38 = por %p36, %p37
      %p40 = scmp.ne.s32.totalorder %s25, %s39
      %p41 = scmp.eq.s32.totalorder %s20, 0
      %p42 = por %p40, %p41
      %s43 = ssub.s32 %s14, %s21
      %p44 = scmp.eq.s32.totalorder %s43, 0
      %s46 = sadd.s32 %s45, 1
      %s47 = scalar_select %p44, %s45, %s46
      %p50 = pneg %p44
      %p51 = scmp.eq.s32.totalorder %s14, 7
      %p52 = por %p50, %p51
      %p53 = scmp.ne.s32.totalorder %s45, %s48
      %p54 = scmp.eq.s32.totalorder %s14, 0
      %p55 = por %p53, %p54
      %p56 = scmp.ne.s32.totalorder %s45, %s48
      %p57 = scmp.eq.s32.totalorder %s19, 7
      %p58 = por %p56, %p57
      %p59 = scmp.ne.s32.totalorder %s48, %s49
      %p60 = scmp.eq.s32.totalorder %s19, 0
      %p61 = por %p59, %p60
      %p62 = scmp.ne.s32.totalorder %s48, %s49
      %p63 = scmp.eq.s32.totalorder %s20, 7
      %p64 = por %p62, %p63
      %p66 = scmp.ne.s32.totalorder %s49, %s65
      %p67 = scmp.eq.s32.totalorder %s20, 0
      %p68 = por %p66, %p67
      %s69 = sld [smem:[#allocation5]]
      %s70 = ssub.s32 %s69, 1
      %s71 = ssub.s32 %s70, %s14
      %p72 = scmp.ge.s32.totalorder %s71, 0
      %s73 = scalar_select %p72, %s71, %s14
      %s74 = sld [smem:[#allocation5]]
      %s75 = ssub.s32 %s74, 1
      %s76 = ssub.s32 %s75, %s21
      %p77 = scmp.ge.s32.totalorder %s76, 0
      %s78 = scalar_select %p77, %s76, %s21
      %s79 = ssub.s32 %s73, %s78
      %p80 = scmp.eq.s32.totalorder %s79, 0
      %s82 = sadd.s32 %s81, 1
      %s83 = scalar_select %p80, %s81, %s82
      %p86 = pneg %p80
      %p87 = scmp.eq.s32.totalorder %s14, 7
      %p88 = por %p86, %p87
      %p89 = scmp.ne.s32.totalorder %s81, %s84
      %p90 = scmp.eq.s32.totalorder %s14, 0
      %p91 = por %p89, %p90
      %p92 = scmp.ne.s32.totalorder %s81, %s84
      %p93 = scmp.eq.s32.totalorder %s19, 7
      %p94 = por %p92, %p93
      %p95 = scmp.ne.s32.totalorder %s84, %s85
      %p96 = scmp.eq.s32.totalorder %s19, 0
      %p97 = por %p95, %p96
      %p98 = scmp.ne.s32.totalorder %s84, %s85
      %p99 = scmp.eq.s32.totalorder %s20, 7
      %p100 = por %p98, %p99
      %p102 = scmp.ne.s32.totalorder %s85, %s101
      %p103 = scmp.eq.s32.totalorder %s20, 0
      %p104 = por %p102, %p103
      %s106 = sadd.s32 %s105, 1
      %p109 = scmp.eq.s32.totalorder %s14, 7
      %p110 = scmp.ne.s32.totalorder %s105, %s107
      %p111 = scmp.eq.s32.totalorder %s14, 0
      %p112 = por %p110, %p111
      %p113 = scmp.ne.s32.totalorder %s105, %s107
      %p114 = scmp.eq.s32.totalorder %s19, 7
      %p115 = por %p113, %p114
      %p116 = scmp.ne.s32.totalorder %s107, %s108
      %p117 = scmp.eq.s32.totalorder %s19, 0
      %p118 = por %p116, %p117
      %p119 = scmp.ne.s32.totalorder %s107, %s108
      %p120 = scmp.eq.s32.totalorder %s20, 7
      %p121 = por %p119, %p120
      %p123 = scmp.ne.s32.totalorder %s108, %s122
      %p124 = scmp.eq.s32.totalorder %s20, 0
      %p125 = por %p123, %p124
      %s126 = ssub.s32 %s14, %s21
      %p127 = scmp.eq.s32.totalorder %s126, 0
      %s129 = sadd.s32 %s128, 1
      %s130 = scalar_select %p127, %s128, %s129
      %p133 = pneg %p127
      %p134 = scmp.eq.s32.totalorder %s14, 7
      %p135 = por %p133, %p134
      %p136 = scmp.ne.s32.totalorder %s128, %s131
      %p137 = scmp.eq.s32.totalorder %s14, 0
      %p138 = por %p136, %p137
      %p139 = scmp.ne.s32.totalorder %s128, %s131
      %p140 = scmp.eq.s32.totalorder %s19, 7
      %p141 = por %p139, %p140
      %p142 = scmp.ne.s32.totalorder %s131, %s132
      %p143 = scmp.eq.s32.totalorder %s19, 0
      %p144 = por %p142, %p143
      %p145 = scmp.ne.s32.totalorder %s131, %s132
      %p146 = scmp.eq.s32.totalorder %s20, 7
      %p147 = por %p145, %p146
      %p149 = scmp.ne.s32.totalorder %s132, %s148
      %p150 = scmp.eq.s32.totalorder %s20, 0
      %p151 = por %p149, %p150
      %s152 = sld [smem:[#allocation5]]
      %s153 = ssub.s32 %s152, 1
      %s154 = ssub.s32 %s153, %s14
      %p155 = scmp.ge.s32.totalorder %s154, 0
      %s156 = scalar_select %p155, %s154, %s14
      %s157 = sld [smem:[#allocation5]]
      %s158 = ssub.s32 %s157, 1
      %s159 = ssub.s32 %s158, %s21
      %p160 = scmp.ge.s32.totalorder %s159, 0
      %s161 = scalar_select %p160, %s159, %s21
      %s162 = ssub.s32 %s156, %s161
      %p163 = scmp.eq.s32.totalorder %s162, 0
      %s165 = sadd.s32 %s164, 1
      %s166 = scalar_select %p163, %s164, %s165
      %p169 = pneg %p163
      %p170 = scmp.eq.s32.totalorder %s14, 7
      %p171 = por %p169, %p170
      %p172 = scmp.ne.s32.totalorder %s164, %s167
      %p173 = scmp.eq.s32.totalorder %s14, 0
      %p174 = por %p172, %p173
      %p175 = scmp.ne.s32.totalorder %s164, %s167
      %p176 = scmp.eq.s32.totalorder %s19, 7
      %p177 = por %p175, %p176
      %p178 = scmp.ne.s32.totalorder %s167, %s168
      %p179 = scmp.eq.s32.totalorder %s19, 0
      %p180 = por %p178, %p179
      %p181 = scmp.ne.s32.totalorder %s167, %s168
      %p182 = scmp.eq.s32.totalorder %s20, 7
      %p183 = por %p181, %p182
      %p185 = scmp.ne.s32.totalorder %s168, %s184
      %p186 = scmp.eq.s32.totalorder %s20, 0
      %p187 = por %p185, %p186
      %p188 = scmp.le.s32.totalorder 1, %s14
      %p189 = scmp.lt.s32.totalorder %s14, 9
      %p190 = pnand %p188, %p189
      %p191 = pneg %p190
      // Predicated region
      $region9: #{improved_bilstm_forward.6} parent=5 // pred_check
        _
      $region10: #{improved_bilstm_forward.6} parent=5 // pred_check_branch
        %193 = sbr.rel (%p190) target = $region12
      $region11: #{improved_bilstm_forward.6} parent=5 // pred_region
        %s194 = ssub.s32 %s14, 1
        // Predicated region
        $region13: #{improved_bilstm_forward.6} parent=11 // pred_check
          %p195 = pneg %p35
        $region14: #{improved_bilstm_forward.6} parent=11 // pred_check_branch
          %197 = sbr.rel (%p195) target = $region16
        $region15: #{improved_bilstm_forward.6} parent=11 // pred_region
          _
        $region16: #{improved_bilstm_forward.6} parent=11 // pred_fallthru
          _
        // Predicated region
        $region17: #{improved_bilstm_forward.6} parent=11 // pred_check
          %p198 = pneg %p118
        $region18: #{improved_bilstm_forward.6} parent=11 // pred_check_branch
          %200 = sbr.rel (%p198) target = $region20
        $region19: #{improved_bilstm_forward.6} parent=11 // pred_region
          _
        $region20: #{improved_bilstm_forward.6} parent=11 // pred_fallthru
          _
      $region12: #{improved_bilstm_forward.6} parent=5 // pred_fallthru
        _
      %p201 = scmp.lt.s32.totalorder %s14, 8
      // Predicated region
      $region21: #{improved_bilstm_forward.6} parent=5 // pred_check
        %p202 = pneg %p201
      $region22: #{improved_bilstm_forward.6} parent=5 // pred_check_branch
        %204 = sbr.rel (%p202) target = $region24
      $region23: #{improved_bilstm_forward.6} parent=5 // pred_region
        // Predicated region
        $region25: #{improved_bilstm_forward.6} parent=23 // pred_check
          %p205 = pneg %p55
        $region26: #{improved_bilstm_forward.6} parent=23 // pred_check_branch
          %207 = sbr.rel (%p205) target = $region28
        $region27: #{improved_bilstm_forward.6} parent=23 // pred_region
          %s208 = sand.u32 %s45, 1
          %s209 = sand.u32 %s45, 1
          %s210 = smul.addr %s209, 8
          %s211 = scalar_lea.vmem [#allocation6], %s210
          %s212 = smul.u32 2, %s14
          %s213 = smul.addr %s212, 2
          %s214 = smul.addr %s213, 4
          %s215 = scalar_lea.vmem %s2, %s214
          // Predicated region
          $region29: #{improved_bilstm_forward.6} parent=27 // pred_check
            _
          $region30: #{improved_bilstm_forward.6} parent=27 // pred_check_branch
            %217 = sbr.rel (0) target = $region32
          $region31: #{improved_bilstm_forward.6} parent=27 // pred_region
            // Predicated region
            $region33: #{improved_bilstm_forward.6} parent=31 // pred_check
              _
            $region34: #{improved_bilstm_forward.6} parent=31 // pred_check_branch
              %219 = sbr.rel target = $region36
            $region35: #{improved_bilstm_forward.6} parent=31 // pred_region
              // Predicated region
              $region48: #{improved_bilstm_forward.6} parent=35 // pred_check
                _
              $region49: #{improved_bilstm_forward.6} parent=35 // pred_check_branch
                %237 = sbr.rel (0) target = $region51
              $region50: #{improved_bilstm_forward.6} parent=35 // pred_region
                loop: start=0, step=1, limit=1
                $region52: #{improved_bilstm_forward.6} parent=50 // loop_pre_header
                  _
                $region53: #{improved_bilstm_forward.6} parent=50 // loop_header
                  %s239 = sphi 0, %s243
                  %p240 = scmp.ge.s32.totalorder %s239, 1
                  %s244 = sphi %s215, %s215
                  %s245 = sphi %s211, %s211
                $region54: #{improved_bilstm_forward.6} parent=50 // loop_header_branch
                  %242 = sbr.rel (%p240) target = $region58
                $region55: #{improved_bilstm_forward.6} parent=50 // loop_body
                  _
                $region56: #{improved_bilstm_forward.6} parent=50 // loop_footer
                  %s243 = sadd.s32 1, %s239
                $region57: #{improved_bilstm_forward.6} parent=50 // loop_footer_branch
                  %238 = sbr.rel target = $region53
                $region58: #{improved_bilstm_forward.6} parent=50 // loop_exit
                  _
                %s247 = ssub.s32 16, 1
                loop: start=0, step=1, limit=1
                $region59: #{improved_bilstm_forward.6} parent=50 // loop_pre_header
                  _
                $region60: #{improved_bilstm_forward.6} parent=50 // loop_header
                  %s249 = sphi 0, %s253
                  %p250 = scmp.ge.s32.totalorder %s249, 1
                  %s254 = sphi %s215, %s215
                  %s255 = sphi %s211, %s211
                $region61: #{improved_bilstm_forward.6} parent=50 // loop_header_branch
                  %252 = sbr.rel (%p250) target = $region65
                $region62: #{improved_bilstm_forward.6} parent=50 // loop_body
                  %v256 = vld [vmem:[%s254] sm:%s247]
                  %257 = vst [vmem:[%s255] sm:%s247] %v256
                  %v258 = vld [vmem:[%s254 + $0x8] sm:%s247]
                  %259 = vst [vmem:[%s255 + $0x4] sm:%s247] %v258
                $region63: #{improved_bilstm_forward.6} parent=50 // loop_footer
                  %s253 = sadd.s32 1, %s249
                $region64: #{improved_bilstm_forward.6} parent=50 // loop_footer_branch
                  %248 = sbr.rel target = $region60
                $region65: #{improved_bilstm_forward.6} parent=50 // loop_exit
                  _
              $region51: #{improved_bilstm_forward.6} parent=35 // pred_fallthru
                _
            $region36: #{improved_bilstm_forward.6} parent=31 // pred_fallthru
              _
            // Predicated region
            $region37: #{improved_bilstm_forward.6} parent=31 // pred_check
              _
            $region38: #{improved_bilstm_forward.6} parent=31 // pred_check_branch
              %221 = sbr.rel (0) target = $region40
            $region39: #{improved_bilstm_forward.6} parent=31 // pred_region
              %s223 = ssub.s32 16, 1
              loop: start=0, step=1, limit=1
              $region41: #{improved_bilstm_forward.6} parent=39 // loop_pre_header
                _
              $region42: #{improved_bilstm_forward.6} parent=39 // loop_header
                %s225 = sphi 0, %s229
                %p226 = scmp.ge.s32.totalorder %s225, 1
                %s230 = sphi %s215, %s215
                %s231 = sphi %s211, %s211
              $region43: #{improved_bilstm_forward.6} parent=39 // loop_header_branch
                %228 = sbr.rel (%p226) target = $region47
              $region44: #{improved_bilstm_forward.6} parent=39 // loop_body
                %v232 = vld [vmem:[%s230] sm:%s223]
                %233 = vst [vmem:[%s231] sm:%s223] %v232
                %v234 = vld [vmem:[%s230 + $0x8] sm:%s223]
                %235 = vst [vmem:[%s231 + $0x4] sm:%s223] %v234
              $region45: #{improved_bilstm_forward.6} parent=39 // loop_footer
                %s229 = sadd.s32 1, %s225
              $region46: #{improved_bilstm_forward.6} parent=39 // loop_footer_branch
                %224 = sbr.rel target = $region42
              $region47: #{improved_bilstm_forward.6} parent=39 // loop_exit
                _
            $region40: #{improved_bilstm_forward.6} parent=31 // pred_fallthru
              _
          $region32: #{improved_bilstm_forward.6} parent=27 // pred_fallthru
            _
          %260 = vnop
        $region28: #{improved_bilstm_forward.6} parent=23 // pred_fallthru
          _
        // Predicated region
        $region66: #{improved_bilstm_forward.6} parent=23 // pred_check
          %p261 = pneg %p91
        $region67: #{improved_bilstm_forward.6} parent=23 // pred_check_branch
          %263 = sbr.rel (%p261) target = $region69
        $region68: #{improved_bilstm_forward.6} parent=23 // pred_region
          %s264 = sand.u32 %s81, 1
          %s265 = sand.u32 %s81, 1
          %s266 = smul.addr %s265, 8
          %s267 = scalar_lea.vmem [#allocation7], %s266
          %s268 = sld [smem:[#allocation5]]
          %s269 = ssub.s32 %s268, 1
          %s270 = ssub.s32 %s269, %s14
          %p271 = scmp.ge.s32.totalorder %s270, 0
          %s272 = scalar_select %p271, %s270, %s14
          %s273 = smul.u32 2, %s272
          %s274 = smul.addr %s273, 2
          %s275 = sadd.s32 1, %s274
          %s276 = smul.addr %s275, 4
          %s277 = scalar_lea.vmem %s3, %s276
          // Predicated region
          $region70: #{improved_bilstm_forward.6} parent=68 // pred_check
            _
          $region71: #{improved_bilstm_forward.6} parent=68 // pred_check_branch
            %279 = sbr.rel (0) target = $region73
          $region72: #{improved_bilstm_forward.6} parent=68 // pred_region
            // Predicated region
            $region74: #{improved_bilstm_forward.6} parent=72 // pred_check
              _
            $region75: #{improved_bilstm_forward.6} parent=72 // pred_check_branch
              %281 = sbr.rel target = $region77
            $region76: #{improved_bilstm_forward.6} parent=72 // pred_region
              // Predicated region
              $region89: #{improved_bilstm_forward.6} parent=76 // pred_check
                _
              $region90: #{improved_bilstm_forward.6} parent=76 // pred_check_branch
                %299 = sbr.rel (0) target = $region92
              $region91: #{improved_bilstm_forward.6} parent=76 // pred_region
                loop: start=0, step=1, limit=1
                $region93: #{improved_bilstm_forward.6} parent=91 // loop_pre_header
                  _
                $region94: #{improved_bilstm_forward.6} parent=91 // loop_header
                  %s301 = sphi 0, %s305
                  %p302 = scmp.ge.s32.totalorder %s301, 1
                  %s306 = sphi %s277, %s277
                  %s307 = sphi %s267, %s267
                $region95: #{improved_bilstm_forward.6} parent=91 // loop_header_branch
                  %304 = sbr.rel (%p302) target = $region99
                $region96: #{improved_bilstm_forward.6} parent=91 // loop_body
                  _
                $region97: #{improved_bilstm_forward.6} parent=91 // loop_footer
                  %s305 = sadd.s32 1, %s301
                $region98: #{improved_bilstm_forward.6} parent=91 // loop_footer_branch
                  %300 = sbr.rel target = $region94
                $region99: #{improved_bilstm_forward.6} parent=91 // loop_exit
                  _
                %s309 = ssub.s32 16, 1
                loop: start=0, step=1, limit=1
                $region100: #{improved_bilstm_forward.6} parent=91 // loop_pre_header
                  _
                $region101: #{improved_bilstm_forward.6} parent=91 // loop_header
                  %s311 = sphi 0, %s315
                  %p312 = scmp.ge.s32.totalorder %s311, 1
                  %s316 = sphi %s277, %s277
                  %s317 = sphi %s267, %s267
                $region102: #{improved_bilstm_forward.6} parent=91 // loop_header_branch
                  %314 = sbr.rel (%p312) target = $region106
                $region103: #{improved_bilstm_forward.6} parent=91 // loop_body
                  %v318 = vld [vmem:[%s316] sm:%s309]
                  %319 = vst [vmem:[%s317] sm:%s309] %v318
                  %v320 = vld [vmem:[%s316 + $0x8] sm:%s309]
                  %321 = vst [vmem:[%s317 + $0x4] sm:%s309] %v320
                $region104: #{improved_bilstm_forward.6} parent=91 // loop_footer
                  %s315 = sadd.s32 1, %s311
                $region105: #{improved_bilstm_forward.6} parent=91 // loop_footer_branch
                  %310 = sbr.rel target = $region101
                $region106: #{improved_bilstm_forward.6} parent=91 // loop_exit
                  _
              $region92: #{improved_bilstm_forward.6} parent=76 // pred_fallthru
                _
            $region77: #{improved_bilstm_forward.6} parent=72 // pred_fallthru
              _
            // Predicated region
            $region78: #{improved_bilstm_forward.6} parent=72 // pred_check
              _
            $region79: #{improved_bilstm_forward.6} parent=72 // pred_check_branch
              %283 = sbr.rel (0) target = $region81
            $region80: #{improved_bilstm_forward.6} parent=72 // pred_region
              %s285 = ssub.s32 16, 1
              loop: start=0, step=1, limit=1
              $region82: #{improved_bilstm_forward.6} parent=80 // loop_pre_header
                _
              $region83: #{improved_bilstm_forward.6} parent=80 // loop_header
                %s287 = sphi 0, %s291
                %p288 = scmp.ge.s32.totalorder %s287, 1
                %s292 = sphi %s277, %s277
                %s293 = sphi %s267, %s267
              $region84: #{improved_bilstm_forward.6} parent=80 // loop_header_branch
                %290 = sbr.rel (%p288) target = $region88
              $region85: #{improved_bilstm_forward.6} parent=80 // loop_body
                %v294 = vld [vmem:[%s292] sm:%s285]
                %295 = vst [vmem:[%s293] sm:%s285] %v294
                %v296 = vld [vmem:[%s292 + $0x8] sm:%s285]
                %297 = vst [vmem:[%s293 + $0x4] sm:%s285] %v296
              $region86: #{improved_bilstm_forward.6} parent=80 // loop_footer
                %s291 = sadd.s32 1, %s287
              $region87: #{improved_bilstm_forward.6} parent=80 // loop_footer_branch
                %286 = sbr.rel target = $region83
              $region88: #{improved_bilstm_forward.6} parent=80 // loop_exit
                _
            $region81: #{improved_bilstm_forward.6} parent=72 // pred_fallthru
              _
          $region73: #{improved_bilstm_forward.6} parent=68 // pred_fallthru
            _
          %322 = vnop
        $region69: #{improved_bilstm_forward.6} parent=23 // pred_fallthru
          _
      $region24: #{improved_bilstm_forward.6} parent=5 // pred_fallthru
        _
      %p323 = scmp.le.s32.totalorder 1, %s14
      %p324 = scmp.lt.s32.totalorder %s14, 9
      %p325 = pnand %p323, %p324
      %p326 = pneg %p325
      // Predicated region
      $region107: #{improved_bilstm_forward.6} parent=5 // pred_check
        _
      $region108: #{improved_bilstm_forward.6} parent=5 // pred_check_branch
        %328 = sbr.rel (%p325) target = $region110
      $region109: #{improved_bilstm_forward.6} parent=5 // pred_region
        %s329 = ssub.s32 %s14, 1
        %s330 = sand.u32 %s48, 1
        %s331 = sand.u32 %s48, 1
        %s332 = smul.addr %s331, 8
        %s333 = scalar_lea.vmem [#allocation6], %s332
        // Predicated region
        $region111: #{improved_bilstm_forward.6} parent=109 // pred_check
          %p334 = pneg %p61
        $region112: #{improved_bilstm_forward.6} parent=109 // pred_check_branch
          %336 = sbr.rel (%p334) target = $region114
        $region113: #{improved_bilstm_forward.6} parent=109 // pred_region
          _
        $region114: #{improved_bilstm_forward.6} parent=109 // pred_fallthru
          _
        %s337 = sand.u32 %s84, 1
        %s338 = sand.u32 %s84, 1
        %s339 = smul.addr %s338, 8
        %s340 = scalar_lea.vmem [#allocation7], %s339
        // Predicated region
        $region115: #{improved_bilstm_forward.6} parent=109 // pred_check
          %p341 = pneg %p97
        $region116: #{improved_bilstm_forward.6} parent=109 // pred_check_branch
          %343 = sbr.rel (%p341) target = $region118
        $region117: #{improved_bilstm_forward.6} parent=109 // pred_region
          _
        $region118: #{improved_bilstm_forward.6} parent=109 // pred_fallthru
          _
        %p344 = pneg %p35
        %p345 = pneg %p32
        %s346 = sand.u32 %s48, 1
        %s347 = sand.u32 %s48, 1
        %s348 = smul.addr %s347, 8
        %s349 = scalar_lea.vmem [#allocation6], %s348
        %p350 = pneg %p61
        %p351 = pneg %p58
        %s352 = sand.u32 %s84, 1
        %s353 = sand.u32 %s84, 1
        %s354 = smul.addr %s353, 8
        %s355 = scalar_lea.vmem [#allocation7], %s354
        %p356 = pneg %p97
        %p357 = pneg %p94
        %p358 = pneg %p118
        %p359 = pneg %p115
        %p360 = pneg %p144
        %p361 = pneg %p141
        %s362 = smul.u32 2, %s19
        %p363 = scmp.lt.s32.totalorder %s362, 15
        %s364 = scalar_select %p363, %s362, 15
        %s365 = smul.addr %s364, 4
        %s366 = scalar_lea.vmem %s5, %s365
        %p367 = pneg %p180
        %p368 = pneg %p177
        %s369 = sld [smem:[#allocation5]]
        %s370 = ssub.s32 %s369, 1
        %s371 = ssub.s32 %s370, %s19
        %p372 = scmp.ge.s32.totalorder %s371, 0
        %s373 = scalar_select %p372, %s371, %s19
        %s374 = smul.u32 2, %s373
        %p375 = scmp.lt.s32.totalorder %s374, 15
        %s376 = scalar_select %p375, %s374, 15
        %s377 = smul.addr %s376, 4
        %s378 = scalar_lea.vmem %s6, %s377
        %s379 = smul.u32 2, %s19
        %s380 = sld [smem:[#allocation5]]
        %s381 = ssub.s32 %s380, 1
        %s382 = ssub.s32 %s381, %s19
        %p383 = scmp.ge.s32.totalorder %s382, 0
        %s384 = scalar_select %p383, %s382, %s19
        %s385 = smul.u32 2, %s384
        %s386 = smul.u32 2, %s19
        %p387 = scmp.lt.s32.totalorder %s386, 15
        %s388 = scalar_select %p387, %s386, 15
        %s389 = smul.addr %s388, 4
        %s390 = scalar_lea.vmem %s5, %s389
        %s391 = smul.u32 2, %s19
        %s392 = sld [smem:[#allocation5]]
        %s393 = ssub.s32 %s392, 1
        %s394 = ssub.s32 %s393, %s19
        %p395 = scmp.ge.s32.totalorder %s394, 0
        %s396 = scalar_select %p395, %s394, %s19
        %s397 = smul.u32 2, %s396
        %p398 = scmp.lt.s32.totalorder %s397, 15
        %s399 = scalar_select %p398, %s397, 15
        %s400 = smul.addr %s399, 4
        %s401 = scalar_lea.vmem %s6, %s400
        %s402 = sld [smem:[#allocation5]]
        %s403 = ssub.s32 %s402, 1
        %s404 = ssub.s32 %s403, %s19
        %p405 = scmp.ge.s32.totalorder %s404, 0
        %s406 = scalar_select %p405, %s404, %s19
        %s407 = smul.u32 2, %s406
        %s409 = sld [smem:[#allocation5]]
        %p410 = scmp.eq.s32.totalorder %s19, 0
        // Predicated region
        $region119: #{improved_bilstm_forward.6} parent=109 // pred_check
          %p411 = pneg %p410
        $region120: #{improved_bilstm_forward.6} parent=109 // pred_check_branch
          %413 = sbr.rel (%p411) target = $region122
        $region121: #{improved_bilstm_forward.6} parent=109 // pred_region
          %vm414 = vcmask 261120
          %415 = vst.msk [vmem:[#allocation2] sm:$0xff] %vm414, 0.0
          %416 = vst.msk [vmem:[#allocation2 + $0x8] sm:$0xff] %vm414, 0.0
          %417 = vst.msk [vmem:[#allocation2 + $0x10] sm:$0xff] %vm414, 0.0
          %418 = vst.msk [vmem:[#allocation2 + $0x18] sm:$0xff] %vm414, 0.0
          %419 = vst.msk [vmem:[#allocation3] sm:$0xff] %vm414, 0.0
          %420 = vst.msk [vmem:[#allocation3 + $0x8] sm:$0xff] %vm414, 0.0
          %421 = vst.msk [vmem:[#allocation3 + $0x10] sm:$0xff] %vm414, 0.0
          %422 = vst.msk [vmem:[#allocation3 + $0x18] sm:$0xff] %vm414, 0.0
        $region122: #{improved_bilstm_forward.6} parent=109 // pred_fallthru
          _
        %p423 = scmp.lt.s32.totalorder %s19, %s409
        // Predicated region
        $region123: #{improved_bilstm_forward.6} parent=109 // pred_check
          %p424 = pneg %p423
        $region124: #{improved_bilstm_forward.6} parent=109 // pred_check_branch
          %426 = sbr.rel (%p424) target = $region126
        $region125: #{improved_bilstm_forward.6} parent=109 // pred_region
          %v427 = vld [vmem:[%s1] sm:$0xff]
          %v428 = vld [vmem:[%s1 + $0x8] sm:$0xff]
          %v429 = vld [vmem:[#allocation2] sm:$0xff]
          %v430 = vld [vmem:[#allocation2 + $0x8] sm:$0xff]
          %v431 = vld [vmem:[#allocation2 + $0x10] sm:$0xff]
          %v432 = vld [vmem:[#allocation2 + $0x18] sm:$0xff]
          %v433 = vld [vmem:[#allocation3] sm:$0xff]
          %v434 = vld [vmem:[#allocation3 + $0x8] sm:$0xff]
          %v435 = vld [vmem:[#allocation3 + $0x10] sm:$0xff]
          %v436 = vld [vmem:[#allocation3 + $0x18] sm:$0xff]
          %v437 = vpack.c.bf16 %v430, %v429
          %v438 = vpack.c.bf16 %v432, %v431
          %v439 = vld [vmem:[%s4] sm:$0xff]
          %v440 = vld [vmem:[%s4 + $0x8] sm:$0xff]
          %v441 = vld [vmem:[%s4 + $0x10] sm:$0xff]
          %v442 = vld [vmem:[%s4 + $0x18] sm:$0xff]
          %v447 = vunpack.c.l.b16 %v439
          %v448 = vunpack.c.h.b16 %v439
          %v449 = vunpack.c.l.b16 %v440
          %v450 = vunpack.c.h.b16 %v440
          %v451 = vunpack.c.l.b16 %v441
          %v452 = vunpack.c.h.b16 %v441
          %v453 = vunpack.c.l.b16 %v442
          %v454 = vunpack.c.h.b16 %v442
          %v455 = vpack.c.b16 %v449, %v447
          %v456 = vpack.c.b16 %v450, %v448
          %v457 = vpack.c.b16 %v453, %v451
          %v458 = vpack.c.b16 %v454, %v452
          %vm463 = vcmask 261120
          %v465 = vsel %vm463, %v437, 0
          %v468 = vsel %vm463, %v438, 0
          %470 = vmatprep.subr.bf16.mxu0 0
          %471 = vmatpush1.bf16.msra.mxu0 0
          %472 = vmatprep.subr.bf16.mxu0 0
          %473 = vmatpush1.bf16.msra.mxu0 0
          %474 = vmatprep.subr.bf16.mxu0 0
          %475 = vmatpush1.bf16.msra.mxu0 0
          %476 = vmatprep.subr.bf16.mxu0 0
          %477 = vmatpush1.bf16.msra.mxu0 0
          %478 = vmatprep.subr.bf16.mxu0 0
          %479 = vmatpush1.bf16.msra.mxu0 0
          %480 = vmatprep.subr.bf16.mxu0 0
          %481 = vmatpush1.bf16.msra.mxu0 0
          %482 = vmatprep.subr.bf16.mxu0 %v458
          %483 = vmatpush1.bf16.msra.mxu0 %v457
          %484 = vmatprep.subr.bf16.mxu0 %v456
          %485 = vmatpush1.bf16.msra.mxu0 %v455
          %486 = vmatprep.subr.bf16.mxu0 0
          %487 = vmatpush2.bf16.msra.mxu0 0
          %488 = vmatprep.subr.bf16.mxu0 0
          %489 = vmatpush2.bf16.msra.mxu0 0
          %490 = vmatprep.subr.bf16.mxu0 0
          %491 = vmatpush2.bf16.msra.mxu0 0
          %492 = vmatprep.subr.bf16.mxu0 0
          %493 = vmatpush2.bf16.msra.mxu0 0
          %494 = vmatprep.subr.bf16.mxu0 0
          %495 = vmatpush2.bf16.msra.mxu0 0
          %496 = vmatprep.subr.bf16.mxu0 0
          %497 = vmatpush2.bf16.msra.mxu0 0
          %498 = vmatprep.subr.bf16.mxu0 0
          %499 = vmatpush2.bf16.msra.mxu0 0
          %500 = vmatprep.subr.bf16.mxu0 0
          %501 = vmatpush2.bf16.msra.mxu0 0
          %502 = vmatprep.mubr.bf16.mxu0 0
          %503 = vmatmul.mubr.bf16.gmra.mxu0 %v465
          %v504 = vpop.f32.mrf.mxu0
          %v505 = vadd.f32 0.0, %v504
          %v506 = vpop.f32.mrf.mxu0
          %v507 = vpop.f32.mrf.mxu0
          %v508 = vadd.f32 0.0, %v507
          %v509 = vpop.f32.mrf.mxu0
          %510 = vmatprep.mubr.bf16.mxu0 0
          %511 = vmatmul.mubr.bf16.gmra.mxu0 %v468
          %v512 = vpop.f32.mrf.mxu0
          %v513 = vpop.f32.mrf.mxu0
          %v514 = vadd.f32 0.0, %v513
          %v515 = vpop.f32.mrf.mxu0
          %v516 = vpop.f32.mrf.mxu0
          %v517 = vadd.f32 0.0, %v516
          %518 = vdwg.mxu0
          %v519 = vld [vmem:[%s333] sm:$0xf]
          %v520 = vld [vmem:[%s333 + $0x4] sm:$0xf]
          %v521 = vunpack.c.l.bf16 %v519
          %v522 = vunpack.c.l.bf16 %v520
          %v523 = vadd.f32 %v521, %v505
          %v524 = vadd.f32 %v522, %v508
          %v525 = vld [vmem:[%s340] sm:$0xf]
          %v526 = vld [vmem:[%s340 + $0x4] sm:$0xf]
          %v527 = vunpack.c.l.bf16 %v525
          %v528 = vunpack.c.l.bf16 %v526
          %v529 = vadd.f32 %v527, %v514
          %v530 = vadd.f32 %v528, %v517
          %v531 = vxor.u32 %v523, 2147483648
          %v532 = vxor.u32 %v524, 2147483648
          %v533 = vxor.u32 %v529, 2147483648
          %v534 = vxor.u32 %v530, 2147483648
          %v535 = vmul.f32 %v531, 1.442695
          %v536 = vpow.pop %v535
          %v537 = vmul.f32 %v532, 1.442695
          %v538 = vpow.pop %v537
          %v539 = vmul.f32 %v533, 1.442695
          %v540 = vpow.pop %v539
          %v541 = vmul.f32 %v534, 1.442695
          %v542 = vpow.pop %v541
          %v543 = vadd.f32 %v536, 1.0
          %v544 = vadd.f32 %v538, 1.0
          %v545 = vadd.f32 %v540, 1.0
          %v546 = vadd.f32 %v542, 1.0
          %v547 = vrcp.pop %v543
          %v548 = vmul.f32 1.0, %v547
          %v549 = vrcp.pop %v544
          %v550 = vmul.f32 1.0, %v549
          %v551 = vrcp.pop %v545
          %v552 = vmul.f32 1.0, %v551
          %v553 = vrcp.pop %v546
          %v554 = vmul.f32 1.0, %v553
          %v555 = vtanh.pop %v523
          %v556 = vtanh.pop %v524
          %v557 = vtanh.pop %v529
          %v558 = vtanh.pop %v530
          %563 = vrot.lane.b32.xlu0 %v433, 32
          %v564 = vpop.permute.xlu0 %563
          %565 = vrot.lane.b32.xlu0 %v434, 32
          %v566 = vpop.permute.xlu0 %565
          %567 = vrot.lane.b32.xlu0 %v435, 32
          %v568 = vpop.permute.xlu0 %567
          %569 = vrot.lane.b32.xlu0 %v436, 32
          %v570 = vpop.permute.xlu0 %569
          %v575 = vmul.f32 %v548, %v564
          %v576 = vmul.f32 %v550, %v566
          %v577 = vmul.f32 %v552, %v568
          %v578 = vmul.f32 %v554, %v570
          %583 = vrot.lane.b32.xlu0 %v555, 64
          %v584 = vpop.permute.xlu0 %583
          %585 = vrot.lane.b32.xlu0 %v556, 64
          %v586 = vpop.permute.xlu0 %585
          %587 = vrot.lane.b32.xlu0 %v557, 64
          %v588 = vpop.permute.xlu0 %587
          %589 = vrot.lane.b32.xlu0 %v558, 64
          %v590 = vpop.permute.xlu0 %589
          %v595 = vmul.f32 %v548, %v584
          %v596 = vmul.f32 %v550, %v586
          %v597 = vmul.f32 %v552, %v588
          %v598 = vmul.f32 %v554, %v590
          %603 = vrot.lane.b32.xlu0 %v595, 32
          %v604 = vpop.permute.xlu0 %603
          %605 = vrot.lane.b32.xlu0 %v596, 32
          %v606 = vpop.permute.xlu0 %605
          %607 = vrot.lane.b32.xlu0 %v597, 32
          %v608 = vpop.permute.xlu0 %607
          %609 = vrot.lane.b32.xlu0 %v598, 32
          %v610 = vpop.permute.xlu0 %609
          %v615 = vadd.f32 %v575, %v604
          %v616 = vadd.f32 %v576, %v606
          %v617 = vadd.f32 %v577, %v608
          %v618 = vadd.f32 %v578, %v610
          %v619 = vtanh.pop %v615
          %v620 = vtanh.pop %v616
          %v621 = vtanh.pop %v617
          %v622 = vtanh.pop %v618
          %627 = vrot.lane.b32.xlu0 %v619, 64
          %v628 = vpop.permute.xlu0 %627
          %629 = vrot.lane.b32.xlu0 %v620, 64
          %v630 = vpop.permute.xlu0 %629
          %631 = vrot.lane.b32.xlu0 %v621, 64
          %v632 = vpop.permute.xlu0 %631
          %633 = vrot.lane.b32.xlu0 %v622, 64
          %v634 = vpop.permute.xlu0 %633
          %v639 = vmul.f32 %v548, %v628
          %v640 = vmul.f32 %v550, %v630
          %v641 = vmul.f32 %v552, %v632
          %v642 = vmul.f32 %v554, %v634
          %s643 = ssub.s32 %s409, 1
          %s644 = ssub.s32 %s643, %s19
          %v645 = vstv %s19
          %vm646 = vcmp.lt.s32.totalorder %v645, %v427
          %vm647 = vcmp.lt.s32.totalorder %v645, %v428
          %v648 = vstv %s644
          %vm649 = vcmp.lt.s32.totalorder %v648, %v427
          %vm650 = vcmp.lt.s32.totalorder %v648, %v428
          %v651 = vsel %vm646, 1, 0
          %v652 = vsel %vm647, 1, 0
          %v653 = vsel %vm649, 1, 0
          %v654 = vsel %vm650, 1, 0
          %655 = vset.pattern.permute.xlu0 0
          %656 = vperm.xlu0 %655, %v651
          %v657 = vpop.permute.xlu0 %656
          %658 = vset.pattern.permute.xlu0 0
          %659 = vperm.xlu0 %658, %v652
          %v660 = vpop.permute.xlu0 %659
          %661 = vset.pattern.permute.xlu0 0
          %662 = vperm.xlu0 %661, %v653
          %v663 = vpop.permute.xlu0 %662
          %664 = vset.pattern.permute.xlu0 0
          %665 = vperm.xlu0 %664, %v654
          %v666 = vpop.permute.xlu0 %665
          %vm667 = vcmp.eq.s32.totalorder %v657, 1
          %vm668 = vcmp.eq.s32.totalorder %v660, 1
          %vm669 = vcmp.eq.s32.totalorder %v663, 1
          %vm670 = vcmp.eq.s32.totalorder %v666, 1
          %675 = vrot.lane.b32.xlu0 %v429, 96
          %v676 = vpop.permute.xlu0 %675
          %677 = vrot.lane.b32.xlu0 %v430, 96
          %v678 = vpop.permute.xlu0 %677
          %679 = vrot.lane.b32.xlu0 %v431, 96
          %v680 = vpop.permute.xlu0 %679
          %681 = vrot.lane.b32.xlu0 %v432, 96
          %v682 = vpop.permute.xlu0 %681
          %v687 = vsel %vm667, %v639, %v676
          %v688 = vsel %vm668, %v640, %v678
          %v689 = vsel %vm669, %v641, %v680
          %v690 = vsel %vm670, %v642, %v682
          %695 = vrot.lane.b32.xlu0 %v687, 32
          %v696 = vpop.permute.xlu0 %695
          %697 = vrot.lane.b32.xlu0 %v688, 32
          %v698 = vpop.permute.xlu0 %697
          %699 = vrot.lane.b32.xlu0 %v689, 32
          %v700 = vpop.permute.xlu0 %699
          %701 = vrot.lane.b32.xlu0 %v690, 32
          %v702 = vpop.permute.xlu0 %701
          %707 = vst.msk [vmem:[#allocation2] sm:$0xff] %vm463, %v696
          %708 = vst.msk [vmem:[#allocation2 + $0x8] sm:$0xff] %vm463, %v698
          %709 = vst.msk [vmem:[#allocation2 + $0x10] sm:$0xff] %vm463, %v700
          %710 = vst.msk [vmem:[#allocation2 + $0x18] sm:$0xff] %vm463, %v702
          %v711 = vsel %vm667, %v615, %v564
          %v712 = vsel %vm668, %v616, %v566
          %v713 = vsel %vm669, %v617, %v568
          %v714 = vsel %vm670, %v618, %v570
          %719 = vrot.lane.b32.xlu0 %v711, 96
          %v720 = vpop.permute.xlu0 %719
          %721 = vrot.lane.b32.xlu0 %v712, 96
          %v722 = vpop.permute.xlu0 %721
          %723 = vrot.lane.b32.xlu0 %v713, 96
          %v724 = vpop.permute.xlu0 %723
          %725 = vrot.lane.b32.xlu0 %v714, 96
          %v726 = vpop.permute.xlu0 %725
          %731 = vst.msk [vmem:[#allocation3] sm:$0xff] %vm463, %v720
          %732 = vst.msk [vmem:[#allocation3 + $0x8] sm:$0xff] %vm463, %v722
          %733 = vst.msk [vmem:[#allocation3 + $0x10] sm:$0xff] %vm463, %v724
          %734 = vst.msk [vmem:[#allocation3 + $0x18] sm:$0xff] %vm463, %v726
          %v735 = vsel %vm667, %v639, 0.0
          %v736 = vsel %vm668, %v640, 0.0
          %v737 = vpack.c.bf16 %v736, %v735
          %v739 = vunpack.c.l.b16 %v737
          %v740 = vunpack.c.h.b16 %v737
          %v741 = vpack.c.b16 %v739, %v739
          %v742 = vpack.c.b16 %v740, %v740
          %743 = vrot.lane.b32.xlu0 %v741, 32
          %v744 = vpop.permute.xlu0 %743
          %745 = vrot.lane.b32.xlu0 %v742, 32
          %v746 = vpop.permute.xlu0 %745
          %vm749 = vcmask 257024
          %750 = vst.msk [vmem:[%s390] sm:$0xf] %vm749, %v744
          %751 = vst.msk [vmem:[%s390 + $0x4] sm:$0xf] %vm749, %v746
          %v752 = vsel %vm669, %v641, 0.0
          %v753 = vsel %vm670, %v642, 0.0
          %v754 = vpack.c.bf16 %v753, %v752
          %v756 = vunpack.c.l.b16 %v754
          %v757 = vunpack.c.h.b16 %v754
          %v758 = vpack.c.b16 %v756, %v756
          %v759 = vpack.c.b16 %v757, %v757
          %760 = vrot.lane.b32.xlu0 %v758, 32
          %v761 = vpop.permute.xlu0 %760
          %762 = vrot.lane.b32.xlu0 %v759, 32
          %v763 = vpop.permute.xlu0 %762
          %766 = vst.msk [vmem:[%s401] sm:$0xf] %vm749, %v761
          %767 = vst.msk [vmem:[%s401 + $0x4] sm:$0xf] %vm749, %v763
        $region126: #{improved_bilstm_forward.6} parent=109 // pred_fallthru
          _
        %p768 = scmp.ge.s32.totalorder %s19, %s409
        // Predicated region
        $region127: #{improved_bilstm_forward.6} parent=109 // pred_check
          %p769 = pneg %p768
        $region128: #{improved_bilstm_forward.6} parent=109 // pred_check_branch
          %771 = sbr.rel (%p769) target = $region130
        $region129: #{improved_bilstm_forward.6} parent=109 // pred_region
          %vm772 = vcmask 257024
          %773 = vst.msk [vmem:[%s390] sm:$0xf] %vm772, 0
          %774 = vst.msk [vmem:[%s390 + $0x4] sm:$0xf] %vm772, 0
          %775 = vst.msk [vmem:[%s401] sm:$0xf] %vm772, 0
          %776 = vst.msk [vmem:[%s401 + $0x4] sm:$0xf] %vm772, 0
        $region130: #{improved_bilstm_forward.6} parent=109 // pred_fallthru
          _
        %s777 = smul.u32 2, %s19
        %p778 = scmp.lt.s32.totalorder %s777, 15
        %s779 = scalar_select %p778, %s777, 15
        %s780 = smul.addr %s779, 4
        %s781 = scalar_lea.vmem %s5, %s780
        %s782 = sld [smem:[#allocation5]]
        %s783 = ssub.s32 %s782, 1
        %s784 = ssub.s32 %s783, %s19
        %p785 = scmp.ge.s32.totalorder %s784, 0
        %s786 = scalar_select %p785, %s784, %s19
        %s787 = smul.u32 2, %s786
        %p788 = scmp.lt.s32.totalorder %s787, 15
        %s789 = scalar_select %p788, %s787, 15
        %s790 = smul.addr %s789, 4
        %s791 = scalar_lea.vmem %s6, %s790
        // Predicated region
        $region131: #{improved_bilstm_forward.6} parent=109 // pred_check
          %p792 = pneg %p141
        $region132: #{improved_bilstm_forward.6} parent=109 // pred_check_branch
          %794 = sbr.rel (%p792) target = $region134
        $region133: #{improved_bilstm_forward.6} parent=109 // pred_region
          %s795 = smul.u32 2, %s19
        $region134: #{improved_bilstm_forward.6} parent=109 // pred_fallthru
          _
        // Predicated region
        $region135: #{improved_bilstm_forward.6} parent=109 // pred_check
          %p796 = pneg %p177
        $region136: #{improved_bilstm_forward.6} parent=109 // pred_check_branch
          %798 = sbr.rel (%p796) target = $region138
        $region137: #{improved_bilstm_forward.6} parent=109 // pred_region
          %s799 = sld [smem:[#allocation5]]
          %s800 = ssub.s32 %s799, 1
          %s801 = ssub.s32 %s800, %s19
          %p802 = scmp.ge.s32.totalorder %s801, 0
          %s803 = scalar_select %p802, %s801, %s19
          %s804 = smul.u32 2, %s803
        $region138: #{improved_bilstm_forward.6} parent=109 // pred_fallthru
          _
      $region110: #{improved_bilstm_forward.6} parent=5 // pred_fallthru
        _
      %p805 = scmp.le.s32.totalorder 2, %s14
      // Predicated region
      $region139: #{improved_bilstm_forward.6} parent=5 // pred_check
        %p806 = pneg %p805
      $region140: #{improved_bilstm_forward.6} parent=5 // pred_check_branch
        %808 = sbr.rel (%p806) target = $region142
      $region141: #{improved_bilstm_forward.6} parent=5 // pred_region
        %s809 = ssub.s32 %s14, 2
        // Predicated region
        $region143: #{improved_bilstm_forward.6} parent=141 // pred_check
          %p810 = pneg %p147
        $region144: #{improved_bilstm_forward.6} parent=141 // pred_check_branch
          %812 = sbr.rel (%p810) target = $region146
        $region145: #{improved_bilstm_forward.6} parent=141 // pred_region
          %s813 = smul.u32 2, %s20
          %p814 = scmp.lt.s32.totalorder %s813, 15
          %s815 = scalar_select %p814, %s813, 15
          %s816 = smul.addr %s815, 4
          %s817 = scalar_lea.vmem %s5, %s816
        $region146: #{improved_bilstm_forward.6} parent=141 // pred_fallthru
          _
        // Predicated region
        $region147: #{improved_bilstm_forward.6} parent=141 // pred_check
          %p818 = pneg %p183
        $region148: #{improved_bilstm_forward.6} parent=141 // pred_check_branch
          %820 = sbr.rel (%p818) target = $region150
        $region149: #{improved_bilstm_forward.6} parent=141 // pred_region
          %s821 = sld [smem:[#allocation5]]
          %s822 = ssub.s32 %s821, 1
          %s823 = ssub.s32 %s822, %s20
          %p824 = scmp.ge.s32.totalorder %s823, 0
          %s825 = scalar_select %p824, %s823, %s20
          %s826 = smul.u32 2, %s825
          %p827 = scmp.lt.s32.totalorder %s826, 15
          %s828 = scalar_select %p827, %s826, 15
          %s829 = smul.addr %s828, 4
          %s830 = scalar_lea.vmem %s6, %s829
        $region150: #{improved_bilstm_forward.6} parent=141 // pred_fallthru
          _
      $region142: #{improved_bilstm_forward.6} parent=5 // pred_fallthru
        _
    $region6: #{improved_bilstm_forward.6} parent=1 // loop_footer
      %s18 = sadd.s32 1, %s14
    $region7: #{improved_bilstm_forward.6} parent=1 // loop_footer_branch
      %13 = sbr.rel target = $region3
    $region8: #{improved_bilstm_forward.6} parent=1 // loop_exit
      _

// kernel: improved_bilstm_forward.9
$region0: #{improved_bilstm_forward.9}
  #allocation0 [shape = 'u32[]', space=smem, size = 0x4, offset = 0x4, fixed_abs, tag = 'smem constant byte address 0x4 - core index']
  #allocation1 [shape = 'u32[144,128]{1,0:T(1,128)}', space=vmem, size = 0x12000, scoped, tag = 'internal scratch']
  #allocation2 [shape = 'f32[1,16]{1,0:T(1,128)}', space=vmem, size = 0x200, scoped, tag = 'scratch operand']
  #allocation3 [shape = 'f32[1,16]{1,0:T(1,128)}', space=vmem, size = 0x200, scoped, tag = 'scratch operand']
  #allocation4 [shape = 'f32[16,32]{1,0:T(8,128)}', space=vmem, size = 0x2000, scoped, tag = 'scratch operand']
  #allocation5 [shape = 'f32[16,32]{1,0:T(8,128)}', space=vmem, size = 0x2000, scoped, tag = 'scratch operand']
  #allocation6 [shape = 's32[1]{0}', space=sflag, size = 0x4, scoped, tag = 'scoped memory for improved_bilstm_forward.9']
  #allocation7 [shape = 's32[1]{0:T(128)S(6)}', space=smem, size = 0x200, scoped, tag = 'prefetched SMEM operand 0']
  #allocation8 [shape = 'f32[1,1]{1,0:T(1,128)S(1)}', space=vmem, size = 0x200, scoped, tag = 'scoped memory for improved_bilstm_forward.9']
  %s0 = inlined_call_operand.<no memory space> [shape: s32[1], index: 0, kind: input, shape index: {}]
  %s1 = inlined_call_operand.vmem [shape: bf16[8,16,32], index: 1, kind: input, shape index: {}]
  %s2 = inlined_call_operand.vmem [shape: bf16[8,16,32], index: 2, kind: input, shape index: {}]
  %s3 = inlined_call_operand.vmem [shape: f32[1,32], index: 3, kind: input, shape index: {}]
  %s4 = inlined_call_operand.vmem [shape: f32[1,32], index: 4, kind: input, shape index: {}]
  %s5 = inlined_call_operand.<no memory space> [shape: f32[1,1], index: 5, kind: input, shape index: {}]
  %s6 = inlined_call_operand.vmem [shape: f32[32,32], index: 6, kind: input, shape index: {}]
  %s7 = inlined_call_operand.vmem [shape: f32[32,32], index: 7, kind: input, shape index: {}]
  %s8 = inlined_call_operand.vmem [shape: f32[1,32], index: 8, kind: input, shape index: {}]
  %s9 = inlined_call_operand.vmem [shape: f32[32,4], index: 9, kind: input, shape index: {}]
  %s10 = inlined_call_operand.vmem [shape: f32[1,4], index: 10, kind: input, shape index: {}]
  %s11 = inlined_call_operand.vmem [shape: f32[16,4], index: 11, kind: output, shape index: {}]
  %s12 = sld [smem:[#allocation0]]
  $region62: #{improved_bilstm_forward.9} parent=0
    _
  %s14 = ssub.s32 1, %s12
  %s15 = scalar_select 0, %s14, %s12
  %16 = sst [smem:[#allocation7]] %s0
  %v17 = vstv %s5
  %18 = vst [vmem:[#allocation8] sm:$0x1] %v17
  // Predicated region
  $region2: #{improved_bilstm_forward.9} parent=0 // pred_check
    _
  $region3: #{improved_bilstm_forward.9} parent=0 // pred_check_branch
    %20 = sbr.rel (0) target = $region5
  $region4: #{improved_bilstm_forward.9} parent=0 // pred_region
    _
  $region5: #{improved_bilstm_forward.9} parent=0 // pred_fallthru
    _
  // Predicated region
  $region6: #{improved_bilstm_forward.9} parent=0 // pred_check
    _
  $region7: #{improved_bilstm_forward.9} parent=0 // pred_check_branch
    %22 = sbr.rel (0) target = $region9
  $region8: #{improved_bilstm_forward.9} parent=0 // pred_region
    _
  $region9: #{improved_bilstm_forward.9} parent=0 // pred_fallthru
    _
  // Predicated region
  $region10: #{improved_bilstm_forward.9} parent=0 // pred_check
    _
  $region11: #{improved_bilstm_forward.9} parent=0 // pred_check_branch
    %24 = sbr.rel (0) target = $region13
  $region12: #{improved_bilstm_forward.9} parent=0 // pred_region
    _
  $region13: #{improved_bilstm_forward.9} parent=0 // pred_fallthru
    _
  // Predicated region
  $region14: #{improved_bilstm_forward.9} parent=0 // pred_check
    _
  $region15: #{improved_bilstm_forward.9} parent=0 // pred_check_branch
    %26 = sbr.rel (0) target = $region17
  $region16: #{improved_bilstm_forward.9} parent=0 // pred_region
    _
  $region17: #{improved_bilstm_forward.9} parent=0 // pred_fallthru
    _
  // Predicated region
  $region18: #{improved_bilstm_forward.9} parent=0 // pred_check
    _
  $region19: #{improved_bilstm_forward.9} parent=0 // pred_check_branch
    %28 = sbr.rel (0) target = $region21
  $region20: #{improved_bilstm_forward.9} parent=0 // pred_region
    _
  $region21: #{improved_bilstm_forward.9} parent=0 // pred_fallthru
    _
  // Predicated region
  $region22: #{improved_bilstm_forward.9} parent=0 // pred_check
    _
  $region23: #{improved_bilstm_forward.9} parent=0 // pred_check_branch
    %30 = sbr.rel (0) target = $region25
  $region24: #{improved_bilstm_forward.9} parent=0 // pred_region
    _
  $region25: #{improved_bilstm_forward.9} parent=0 // pred_fallthru
    _
  // Predicated region
  $region26: #{improved_bilstm_forward.9} parent=0 // pred_check
    _
  $region27: #{improved_bilstm_forward.9} parent=0 // pred_check_branch
    %32 = sbr.rel (0) target = $region29
  $region28: #{improved_bilstm_forward.9} parent=0 // pred_region
    _
  $region29: #{improved_bilstm_forward.9} parent=0 // pred_fallthru
    _
  // Predicated region
  $region30: #{improved_bilstm_forward.9} parent=0 // pred_check
    _
  $region31: #{improved_bilstm_forward.9} parent=0 // pred_check_branch
    %34 = sbr.rel (0) target = $region33
  $region32: #{improved_bilstm_forward.9} parent=0 // pred_region
    _
  $region33: #{improved_bilstm_forward.9} parent=0 // pred_fallthru
    _
  // Predicated region
  $region34: #{improved_bilstm_forward.9} parent=0 // pred_check
    _
  $region35: #{improved_bilstm_forward.9} parent=0 // pred_check_branch
    %36 = sbr.rel (0) target = $region37
  $region36: #{improved_bilstm_forward.9} parent=0 // pred_region
    _
  $region37: #{improved_bilstm_forward.9} parent=0 // pred_fallthru
    _
  // Predicated region
  $region38: #{improved_bilstm_forward.9} parent=0 // pred_check
    _
  $region39: #{improved_bilstm_forward.9} parent=0 // pred_check_branch
    %38 = sbr.rel (0) target = $region41
  $region40: #{improved_bilstm_forward.9} parent=0 // pred_region
    _
  $region41: #{improved_bilstm_forward.9} parent=0 // pred_fallthru
    _
  %s39 = sld [smem:[#allocation7]]
  %p40 = scmp.eq.s32.totalorder 0, 0
  // Predicated region
  $region42: #{improved_bilstm_forward.9} parent=0 // pred_check
    %p41 = pneg %p40
  $region43: #{improved_bilstm_forward.9} parent=0 // pred_check_branch
    %43 = sbr.rel (%p41) target = $region45
  $region44: #{improved_bilstm_forward.9} parent=0 // pred_region
    %vm44 = vcmask 122880
    %45 = vst.msk [vmem:[#allocation2] sm:$0x1] %vm44, -1e+30
    %46 = vst.msk [vmem:[#allocation3] sm:$0x1] %vm44, 0.0
    %vm47 = vcmask 261120
    %48 = vst.msk [vmem:[#allocation4] sm:$0xff] %vm47, 0.0
    %49 = vst.msk [vmem:[#allocation4 + $0x8] sm:$0xff] %vm47, 0.0
    %50 = vst.msk [vmem:[#allocation5] sm:$0xff] %vm47, 0.0
    %51 = vst.msk [vmem:[#allocation5 + $0x8] sm:$0xff] %vm47, 0.0
  $region45: #{improved_bilstm_forward.9} parent=0 // pred_fallthru
    _
  %s52 = smul.u32 0, 8
  %p53 = scmp.lt.s32.totalorder %s52, %s39
  // Predicated region
  $region46: #{improved_bilstm_forward.9} parent=0 // pred_check
    %p54 = pneg %p53
  $region47: #{improved_bilstm_forward.9} parent=0 // pred_check_branch
    %56 = sbr.rel (%p54) target = $region49
  $region48: #{improved_bilstm_forward.9} parent=0 // pred_region
    %v57 = vld [vmem:[%s1] sm:$0xf]
    %v58 = vld [vmem:[%s1 + $0x4] sm:$0xf]
    %v59 = vld [vmem:[%s1 + $0x8] sm:$0xf]
    %v60 = vld [vmem:[%s1 + $0xc] sm:$0xf]
    %v61 = vld [vmem:[%s1 + $0x10] sm:$0xf]
    %v62 = vld [vmem:[%s1 + $0x14] sm:$0xf]
    %v63 = vld [vmem:[%s1 + $0x18] sm:$0xf]
    %v64 = vld [vmem:[%s1 + $0x1c] sm:$0xf]
    %v65 = vld [vmem:[%s1 + $0x20] sm:$0xf]
    %v66 = vld [vmem:[%s1 + $0x24] sm:$0xf]
    %v67 = vld [vmem:[%s1 + $0x28] sm:$0xf]
    %v68 = vld [vmem:[%s1 + $0x2c] sm:$0xf]
    %v69 = vld [vmem:[%s1 + $0x30] sm:$0xf]
    %v70 = vld [vmem:[%s1 + $0x34] sm:$0xf]
    %v71 = vld [vmem:[%s1 + $0x38] sm:$0xf]
    %v72 = vld [vmem:[%s1 + $0x3c] sm:$0xf]
    %v73 = vunpack.c.l.bf16 %v57
    %v74 = vunpack.c.l.bf16 %v58
    %v75 = vunpack.c.l.bf16 %v59
    %v76 = vunpack.c.l.bf16 %v60
    %v77 = vunpack.c.l.bf16 %v61
    %v78 = vunpack.c.l.bf16 %v62
    %v79 = vunpack.c.l.bf16 %v63
    %v80 = vunpack.c.l.bf16 %v64
    %v81 = vunpack.c.l.bf16 %v65
    %v82 = vunpack.c.l.bf16 %v66
    %v83 = vunpack.c.l.bf16 %v67
    %v84 = vunpack.c.l.bf16 %v68
    %v85 = vunpack.c.l.bf16 %v69
    %v86 = vunpack.c.l.bf16 %v70
    %v87 = vunpack.c.l.bf16 %v71
    %v88 = vunpack.c.l.bf16 %v72
    %v89 = vld [vmem:[%s2] sm:$0xf]
    %v90 = vld [vmem:[%s2 + $0x4] sm:$0xf]
    %v91 = vld [vmem:[%s2 + $0x8] sm:$0xf]
    %v92 = vld [vmem:[%s2 + $0xc] sm:$0xf]
    %v93 = vld [vmem:[%s2 + $0x10] sm:$0xf]
    %v94 = vld [vmem:[%s2 + $0x14] sm:$0xf]
    %v95 = vld [vmem:[%s2 + $0x18] sm:$0xf]
    %v96 = vld [vmem:[%s2 + $0x1c] sm:$0xf]
    %v97 = vld [vmem:[%s2 + $0x20] sm:$0xf]
    %v98 = vld [vmem:[%s2 + $0x24] sm:$0xf]
    %v99 = vld [vmem:[%s2 + $0x28] sm:$0xf]
    %v100 = vld [vmem:[%s2 + $0x2c] sm:$0xf]
    %v101 = vld [vmem:[%s2 + $0x30] sm:$0xf]
    %v102 = vld [vmem:[%s2 + $0x34] sm:$0xf]
    %v103 = vld [vmem:[%s2 + $0x38] sm:$0xf]
    %v104 = vld [vmem:[%s2 + $0x3c] sm:$0xf]
    %v105 = vunpack.c.l.bf16 %v89
    %v106 = vunpack.c.l.bf16 %v90
    %v107 = vunpack.c.l.bf16 %v91
    %v108 = vunpack.c.l.bf16 %v92
    %v109 = vunpack.c.l.bf16 %v93
    %v110 = vunpack.c.l.bf16 %v94
    %v111 = vunpack.c.l.bf16 %v95
    %v112 = vunpack.c.l.bf16 %v96
    %v113 = vunpack.c.l.bf16 %v97
    %v114 = vunpack.c.l.bf16 %v98
    %v115 = vunpack.c.l.bf16 %v99
    %v116 = vunpack.c.l.bf16 %v100
    %v117 = vunpack.c.l.bf16 %v101
    %v118 = vunpack.c.l.bf16 %v102
    %v119 = vunpack.c.l.bf16 %v103
    %v120 = vunpack.c.l.bf16 %v104
    %v121 = vld [vmem:[%s3] sm:$0x1]
    %v122 = vld [vmem:[%s4] sm:$0x1]
    %v124 = vlaneseq
    %v125 = vshrl.u32 %v124, 7
    %v126 = vsub.s32 0, %v125
    %v127 = vrot.slane %v121, %v126
    %v129 = vmul.f32 %v73, %v127
    %v130 = vmul.f32 %v74, %v127
    %v131 = vmul.f32 %v75, %v127
    %v132 = vmul.f32 %v76, %v127
    %v133 = vmul.f32 %v77, %v127
    %v134 = vmul.f32 %v78, %v127
    %v135 = vmul.f32 %v79, %v127
    %v136 = vmul.f32 %v80, %v127
    %v137 = vmul.f32 %v81, %v127
    %v138 = vmul.f32 %v82, %v127
    %v139 = vmul.f32 %v83, %v127
    %v140 = vmul.f32 %v84, %v127
    %v141 = vmul.f32 %v85, %v127
    %v142 = vmul.f32 %v86, %v127
    %v143 = vmul.f32 %v87, %v127
    %v144 = vmul.f32 %v88, %v127
    %vm145 = vcmask 261120
    %v146 = vsel %vm145, %v129, 0.0
    %147 = vadd.xlane.f32.xlu0 %v146
    %v148 = vpop.xlane.xlu0 %147
    %v149 = vsel %vm145, %v130, 0.0
    %150 = vadd.xlane.f32.xlu0 %v149
    %v151 = vpop.xlane.xlu0 %150
    %v152 = vsel %vm145, %v131, 0.0
    %153 = vadd.xlane.f32.xlu0 %v152
    %v154 = vpop.xlane.xlu0 %153
    %v155 = vsel %vm145, %v132, 0.0
    %156 = vadd.xlane.f32.xlu0 %v155
    %v157 = vpop.xlane.xlu0 %156
    %v158 = vsel %vm145, %v133, 0.0
    %159 = vadd.xlane.f32.xlu0 %v158
    %v160 = vpop.xlane.xlu0 %159
    %v161 = vsel %vm145, %v134, 0.0
    %162 = vadd.xlane.f32.xlu0 %v161
    %v163 = vpop.xlane.xlu0 %162
    %v164 = vsel %vm145, %v135, 0.0
    %165 = vadd.xlane.f32.xlu0 %v164
    %v166 = vpop.xlane.xlu0 %165
    %v167 = vsel %vm145, %v136, 0.0
    %168 = vadd.xlane.f32.xlu0 %v167
    %v169 = vpop.xlane.xlu0 %168
    %v170 = vsel %vm145, %v137, 0.0
    %171 = vadd.xlane.f32.xlu0 %v170
    %v172 = vpop.xlane.xlu0 %171
    %v173 = vsel %vm145, %v138, 0.0
    %174 = vadd.xlane.f32.xlu0 %v173
    %v175 = vpop.xlane.xlu0 %174
    %v176 = vsel %vm145, %v139, 0.0
    %177 = vadd.xlane.f32.xlu0 %v176
    %v178 = vpop.xlane.xlu0 %177
    %v179 = vsel %vm145, %v140, 0.0
    %180 = vadd.xlane.f32.xlu0 %v179
    %v181 = vpop.xlane.xlu0 %180
    %v182 = vsel %vm145, %v141, 0.0
    %183 = vadd.xlane.f32.xlu0 %v182
    %v184 = vpop.xlane.xlu0 %183
    %v185 = vsel %vm145, %v142, 0.0
    %186 = vadd.xlane.f32.xlu0 %v185
    %v187 = vpop.xlane.xlu0 %186
    %v188 = vsel %vm145, %v143, 0.0
    %189 = vadd.xlane.f32.xlu0 %v188
    %v190 = vpop.xlane.xlu0 %189
    %v191 = vsel %vm145, %v144, 0.0
    %192 = vadd.xlane.f32.xlu0 %v191
    %v193 = vpop.xlane.xlu0 %192
    %v195 = vlaneseq
    %v196 = vshrl.u32 %v195, 7
    %v197 = vsub.s32 0, %v196
    %v198 = vrot.slane %v122, %v197
    %v200 = vmul.f32 %v105, %v198
    %v201 = vmul.f32 %v106, %v198
    %v202 = vmul.f32 %v107, %v198
    %v203 = vmul.f32 %v108, %v198
    %v204 = vmul.f32 %v109, %v198
    %v205 = vmul.f32 %v110, %v198
    %v206 = vmul.f32 %v111, %v198
    %v207 = vmul.f32 %v112, %v198
    %v208 = vmul.f32 %v113, %v198
    %v209 = vmul.f32 %v114, %v198
    %v210 = vmul.f32 %v115, %v198
    %v211 = vmul.f32 %v116, %v198
    %v212 = vmul.f32 %v117, %v198
    %v213 = vmul.f32 %v118, %v198
    %v214 = vmul.f32 %v119, %v198
    %v215 = vmul.f32 %v120, %v198
    %v216 = vsel %vm145, %v200, 0.0
    %217 = vadd.xlane.f32.xlu0 %v216
    %v218 = vpop.xlane.xlu0 %217
    %v219 = vsel %vm145, %v201, 0.0
    %220 = vadd.xlane.f32.xlu0 %v219
    %v221 = vpop.xlane.xlu0 %220
    %v222 = vsel %vm145, %v202, 0.0
    %223 = vadd.xlane.f32.xlu0 %v222
    %v224 = vpop.xlane.xlu0 %223
    %v225 = vsel %vm145, %v203, 0.0
    %226 = vadd.xlane.f32.xlu0 %v225
    %v227 = vpop.xlane.xlu0 %226
    %v228 = vsel %vm145, %v204, 0.0
    %229 = vadd.xlane.f32.xlu0 %v228
    %v230 = vpop.xlane.xlu0 %229
    %v231 = vsel %vm145, %v205, 0.0
    %232 = vadd.xlane.f32.xlu0 %v231
    %v233 = vpop.xlane.xlu0 %232
    %v234 = vsel %vm145, %v206, 0.0
    %235 = vadd.xlane.f32.xlu0 %v234
    %v236 = vpop.xlane.xlu0 %235
    %v237 = vsel %vm145, %v207, 0.0
    %238 = vadd.xlane.f32.xlu0 %v237
    %v239 = vpop.xlane.xlu0 %238
    %v240 = vsel %vm145, %v208, 0.0
    %241 = vadd.xlane.f32.xlu0 %v240
    %v242 = vpop.xlane.xlu0 %241
    %v243 = vsel %vm145, %v209, 0.0
    %244 = vadd.xlane.f32.xlu0 %v243
    %v245 = vpop.xlane.xlu0 %244
    %v246 = vsel %vm145, %v210, 0.0
    %247 = vadd.xlane.f32.xlu0 %v246
    %v248 = vpop.xlane.xlu0 %247
    %v249 = vsel %vm145, %v211, 0.0
    %250 = vadd.xlane.f32.xlu0 %v249
    %v251 = vpop.xlane.xlu0 %250
    %v252 = vsel %vm145, %v212, 0.0
    %253 = vadd.xlane.f32.xlu0 %v252
    %v254 = vpop.xlane.xlu0 %253
    %v255 = vsel %vm145, %v213, 0.0
    %256 = vadd.xlane.f32.xlu0 %v255
    %v257 = vpop.xlane.xlu0 %256
    %v258 = vsel %vm145, %v214, 0.0
    %259 = vadd.xlane.f32.xlu0 %v258
    %v260 = vpop.xlane.xlu0 %259
    %v261 = vsel %vm145, %v215, 0.0
    %262 = vadd.xlane.f32.xlu0 %v261
    %v263 = vpop.xlane.xlu0 %262
    %v264 = vadd.f32 %v148, %v218
    %v265 = vadd.f32 %v151, %v221
    %v266 = vadd.f32 %v154, %v224
    %v267 = vadd.f32 %v157, %v227
    %v268 = vadd.f32 %v160, %v230
    %v269 = vadd.f32 %v163, %v233
    %v270 = vadd.f32 %v166, %v236
    %v271 = vadd.f32 %v169, %v239
    %v272 = vadd.f32 %v172, %v242
    %v273 = vadd.f32 %v175, %v245
    %v274 = vadd.f32 %v178, %v248
    %v275 = vadd.f32 %v181, %v251
    %v276 = vadd.f32 %v184, %v254
    %v277 = vadd.f32 %v187, %v257
    %v278 = vadd.f32 %v190, %v260
    %v279 = vadd.f32 %v193, %v263
    %v280 = vld [vmem:[#allocation8] sm:$0x1]
    %v282 = vlaneseq
    %v283 = vshrl.u32 %v282, 7
    %v284 = vsub.s32 0, %v283
    %v285 = vrot.slane %v280, %v284
    %286 = vset.pattern.permute.xlu0 0
    %287 = vperm.xlu0 %286, %v285
    %v288 = vpop.permute.xlu0 %287
    %v290 = vadd.f32 %v264, %v288
    %v291 = vadd.f32 %v265, %v288
    %v292 = vadd.f32 %v266, %v288
    %v293 = vadd.f32 %v267, %v288
    %v294 = vadd.f32 %v268, %v288
    %v295 = vadd.f32 %v269, %v288
    %v296 = vadd.f32 %v270, %v288
    %v297 = vadd.f32 %v271, %v288
    %v298 = vadd.f32 %v272, %v288
    %v299 = vadd.f32 %v273, %v288
    %v300 = vadd.f32 %v274, %v288
    %v301 = vadd.f32 %v275, %v288
    %v302 = vadd.f32 %v276, %v288
    %v303 = vadd.f32 %v277, %v288
    %v304 = vadd.f32 %v278, %v288
    %v305 = vadd.f32 %v279, %v288
    %v306 = vlaneseq
    %v307 = vshrl.u32 %v306, 7
    %v308 = vstv %s52
    %v309 = vadd.s32 %v308, %v307
    %v310 = vstv %s39
    %vm311 = vcmp.lt.s32.totalorder %v309, %v310
    %v328 = vlaneseq
    %v329 = vand.u32 %v328, 127
    %v330 = vlaneseq
    %v331 = vshrl.u32 %v330, 7
    %v332 = vsub.s32 %v329, %v331
    %v333 = vrot.slane %v290, %v332
    %v334 = vadd.s32 %v329, 4294967288
    %v335 = vlaneseq
    %v336 = vshrl.u32 %v335, 7
    %v337 = vsub.s32 %v334, %v336
    %v338 = vrot.slane %v291, %v337
    %vm339 = vcmask 130112
    %v340 = vsel %vm339, %v338, %v333
    %v341 = vlaneseq
    %v342 = vshrl.u32 %v341, 7
    %v343 = vsub.s32 %v329, %v342
    %v344 = vrot.slane %v292, %v343
    %v345 = vlaneseq
    %v346 = vshrl.u32 %v345, 7
    %v347 = vsub.s32 %v334, %v346
    %v348 = vrot.slane %v293, %v347
    %v349 = vsel %vm339, %v348, %v344
    %v350 = vlaneseq
    %v351 = vshrl.u32 %v350, 7
    %v352 = vsub.s32 %v329, %v351
    %v353 = vrot.slane %v294, %v352
    %v354 = vlaneseq
    %v355 = vshrl.u32 %v354, 7
    %v356 = vsub.s32 %v334, %v355
    %v357 = vrot.slane %v295, %v356
    %v358 = vsel %vm339, %v357, %v353
    %v359 = vlaneseq
    %v360 = vshrl.u32 %v359, 7
    %v361 = vsub.s32 %v329, %v360
    %v362 = vrot.slane %v296, %v361
    %v363 = vlaneseq
    %v364 = vshrl.u32 %v363, 7
    %v365 = vsub.s32 %v334, %v364
    %v366 = vrot.slane %v297, %v365
    %v367 = vsel %vm339, %v366, %v362
    %v368 = vlaneseq
    %v369 = vshrl.u32 %v368, 7
    %v370 = vsub.s32 %v329, %v369
    %v371 = vrot.slane %v298, %v370
    %v372 = vlaneseq
    %v373 = vshrl.u32 %v372, 7
    %v374 = vsub.s32 %v334, %v373
    %v375 = vrot.slane %v299, %v374
    %v376 = vsel %vm339, %v375, %v371
    %v377 = vlaneseq
    %v378 = vshrl.u32 %v377, 7
    %v379 = vsub.s32 %v329, %v378
    %v380 = vrot.slane %v300, %v379
    %v381 = vlaneseq
    %v382 = vshrl.u32 %v381, 7
    %v383 = vsub.s32 %v334, %v382
    %v384 = vrot.slane %v301, %v383
    %v385 = vsel %vm339, %v384, %v380
    %v386 = vlaneseq
    %v387 = vshrl.u32 %v386, 7
    %v388 = vsub.s32 %v329, %v387
    %v389 = vrot.slane %v302, %v388
    %v390 = vlaneseq
    %v391 = vshrl.u32 %v390, 7
    %v392 = vsub.s32 %v334, %v391
    %v393 = vrot.slane %v303, %v392
    %v394 = vsel %vm339, %v393, %v389
    %v395 = vlaneseq
    %v396 = vshrl.u32 %v395, 7
    %v397 = vsub.s32 %v329, %v396
    %v398 = vrot.slane %v304, %v397
    %v399 = vlaneseq
    %v400 = vshrl.u32 %v399, 7
    %v401 = vsub.s32 %v334, %v400
    %v402 = vrot.slane %v305, %v401
    %v403 = vsel %vm339, %v402, %v398
    %vm404 = vcmask 1041409
    %v405 = vsel %vm404, %v349, %v340
    %vm406 = vcmask 1042434
    %v407 = vsel %vm406, %v358, %v405
    %vm408 = vcmask 1043459
    %v409 = vsel %vm408, %v367, %v407
    %vm410 = vcmask 1044484
    %v411 = vsel %vm410, %v376, %v409
    %vm412 = vcmask 1045509
    %v413 = vsel %vm412, %v385, %v411
    %vm414 = vcmask 1046534
    %v415 = vsel %vm414, %v394, %v413
    %vm416 = vcmask 1047559
    %v417 = vsel %vm416, %v403, %v415
    %v419 = vsel %vm311, %v417, -1e+30
    %v420 = vld [vmem:[#allocation2] sm:$0x1]
    %vm421 = vcmask 130048
    %v422 = vsel %vm421, %v419, -inf
    %v423 = vrot.slane %v422, 4
    %v424 = vmax.f32 %v422, %v423
    %v425 = vrot.slane %v424, 2
    %v426 = vmax.f32 %v424, %v425
    %v427 = vrot.slane %v426, 1
    %v428 = vmax.f32 %v426, %v427
    %v429 = vmax.f32 %v420, %v428
    %v430 = vsub.f32 %v420, %v429
    %v431 = vmul.f32 %v430, 1.442695
    %v432 = vpow.pop %v431
    %v434 = vlaneseq
    %v435 = vshrl.u32 %v434, 7
    %v436 = vsub.s32 0, %v435
    %v437 = vrot.slane %v429, %v436
    %v439 = vsub.f32 %v419, %v437
    %v440 = vmul.f32 %v439, 1.442695
    %v441 = vpow.pop %v440
    %v442 = vld [vmem:[#allocation3] sm:$0x1]
    %v443 = vmul.f32 %v432, %v442
    %v444 = vsel %vm421, %v441, 0.0
    %v445 = vrot.slane %v444, 4
    %v446 = vadd.f32 %v444, %v445
    %v447 = vrot.slane %v446, 2
    %v448 = vadd.f32 %v446, %v447
    %v449 = vrot.slane %v448, 1
    %v450 = vadd.f32 %v448, %v449
    %v451 = vadd.f32 %v443, %v450
    %vm452 = vcmask 122880
    %453 = vst.msk [vmem:[#allocation3] sm:$0x1] %vm452, %v451
    %454 = vxpose.xlu0.b32.start [1/16] %v432, 128
    %455 = vxpose.xlu0.b32.cont [2/16] 0.0, 128
    %456 = vxpose.xlu0.b32.cont [3/16] 0.0, 128
    %457 = vxpose.xlu0.b32.cont [4/16] 0.0, 128
    %458 = vxpose.xlu0.b32.cont [5/16] 0.0, 128
    %459 = vxpose.xlu0.b32.cont [6/16] 0.0, 128
    %460 = vxpose.xlu0.b32.cont [7/16] 0.0, 128
    %461 = vxpose.xlu0.b32.cont [8/16] 0.0, 128
    %462 = vxpose.xlu0.b32.cont [9/16] 0.0, 128
    %463 = vxpose.xlu0.b32.cont [10/16] 0.0, 128
    %464 = vxpose.xlu0.b32.cont [11/16] 0.0, 128
    %465 = vxpose.xlu0.b32.cont [12/16] 0.0, 128
    %466 = vxpose.xlu0.b32.cont [13/16] 0.0, 128
    %467 = vxpose.xlu0.b32.cont [14/16] 0.0, 128
    %468 = vxpose.xlu0.b32.cont [15/16] 0.0, 128
    %469 = vxpose.xlu0.b32.end [16/16] 0.0, 128
    %v470 = vpop.trf.xlu0
    %v471 = vpop.trf.xlu0
    %v472 = vpop.trf.xlu0
    %v473 = vpop.trf.xlu0
    %v474 = vpop.trf.xlu0
    %v475 = vpop.trf.xlu0
    %v476 = vpop.trf.xlu0
    %v477 = vpop.trf.xlu0
    %v478 = vpop.trf.xlu0
    %v479 = vpop.trf.xlu0
    %v480 = vpop.trf.xlu0
    %v481 = vpop.trf.xlu0
    %v482 = vpop.trf.xlu0
    %v483 = vpop.trf.xlu0
    %v484 = vpop.trf.xlu0
    %v485 = vpop.trf.xlu0
    %v486 = vlaneseq
    %v487 = vshrl.u32 %v486, 7
    %v488 = vsub.s32 0, %v487
    %v489 = vrot.slane %v441, %v488
    %491 = vbcast.lane.b32.xlu0 %v489, 256
    %v492 = vpop.permute.xlu0 %491
    %s494 = sor.u32 256, 8
    %495 = vbcast.lane.b32.xlu0 %v489, %s494
    %v496 = vpop.permute.xlu0 %495
    %v497 = vlaneseq
    %v498 = vshrl.u32 %v497, 7
    %v499 = vsub.s32 1, %v498
    %v500 = vrot.slane %v441, %v499
    %502 = vbcast.lane.b32.xlu0 %v500, 256
    %v503 = vpop.permute.xlu0 %502
    %s505 = sor.u32 256, 8
    %506 = vbcast.lane.b32.xlu0 %v500, %s505
    %v507 = vpop.permute.xlu0 %506
    %v508 = vlaneseq
    %v509 = vshrl.u32 %v508, 7
    %v510 = vsub.s32 2, %v509
    %v511 = vrot.slane %v441, %v510
    %513 = vbcast.lane.b32.xlu0 %v511, 256
    %v514 = vpop.permute.xlu0 %513
    %s516 = sor.u32 256, 8
    %517 = vbcast.lane.b32.xlu0 %v511, %s516
    %v518 = vpop.permute.xlu0 %517
    %v519 = vlaneseq
    %v520 = vshrl.u32 %v519, 7
    %v521 = vsub.s32 3, %v520
    %v522 = vrot.slane %v441, %v521
    %524 = vbcast.lane.b32.xlu0 %v522, 256
    %v525 = vpop.permute.xlu0 %524
    %s527 = sor.u32 256, 8
    %528 = vbcast.lane.b32.xlu0 %v522, %s527
    %v529 = vpop.permute.xlu0 %528
    %v530 = vlaneseq
    %v531 = vshrl.u32 %v530, 7
    %v532 = vsub.s32 4, %v531
    %v533 = vrot.slane %v441, %v532
    %535 = vbcast.lane.b32.xlu0 %v533, 256
    %v536 = vpop.permute.xlu0 %535
    %s538 = sor.u32 256, 8
    %539 = vbcast.lane.b32.xlu0 %v533, %s538
    %v540 = vpop.permute.xlu0 %539
    %v541 = vlaneseq
    %v542 = vshrl.u32 %v541, 7
    %v543 = vsub.s32 5, %v542
    %v544 = vrot.slane %v441, %v543
    %546 = vbcast.lane.b32.xlu0 %v544, 256
    %v547 = vpop.permute.xlu0 %546
    %s549 = sor.u32 256, 8
    %550 = vbcast.lane.b32.xlu0 %v544, %s549
    %v551 = vpop.permute.xlu0 %550
    %v552 = vlaneseq
    %v553 = vshrl.u32 %v552, 7
    %v554 = vsub.s32 6, %v553
    %v555 = vrot.slane %v441, %v554
    %557 = vbcast.lane.b32.xlu0 %v555, 256
    %v558 = vpop.permute.xlu0 %557
    %s560 = sor.u32 256, 8
    %561 = vbcast.lane.b32.xlu0 %v555, %s560
    %v562 = vpop.permute.xlu0 %561
    %v563 = vlaneseq
    %v564 = vshrl.u32 %v563, 7
    %v565 = vsub.s32 7, %v564
    %v566 = vrot.slane %v441, %v565
    %568 = vbcast.lane.b32.xlu0 %v566, 256
    %v569 = vpop.permute.xlu0 %568
    %s571 = sor.u32 256, 8
    %572 = vbcast.lane.b32.xlu0 %v566, %s571
    %v573 = vpop.permute.xlu0 %572
    %v574 = vld [vmem:[#allocation4] sm:$0xff]
    %v575 = vld [vmem:[#allocation4 + $0x8] sm:$0xff]
    %577 = vset.pattern.permute.xlu0 0
    %578 = vperm.xlu0 %577, %v470
    %v579 = vpop.permute.xlu0 %578
    %582 = vset.pattern.permute.xlu0 0
    %583 = vperm.xlu0 %582, %v471
    %v584 = vpop.permute.xlu0 %583
    %v586 = vmul.f32 %v579, %v574
    %v587 = vmul.f32 %v584, %v575
    %v588 = vmul.f32 %v492, %v73
    %v589 = vmul.f32 %v496, %v74
    %v590 = vmul.f32 %v503, %v75
    %v591 = vmul.f32 %v507, %v76
    %v592 = vmul.f32 %v514, %v77
    %v593 = vmul.f32 %v518, %v78
    %v594 = vmul.f32 %v525, %v79
    %v595 = vmul.f32 %v529, %v80
    %v596 = vmul.f32 %v536, %v81
    %v597 = vmul.f32 %v540, %v82
    %v598 = vmul.f32 %v547, %v83
    %v599 = vmul.f32 %v551, %v84
    %v600 = vmul.f32 %v558, %v85
    %v601 = vmul.f32 %v562, %v86
    %v602 = vmul.f32 %v569, %v87
    %v603 = vmul.f32 %v573, %v88
    %v604 = vsel %vm145, %v588, 0.0
    %v605 = vsel %vm145, %v590, 0.0
    %v606 = vadd.f32 %v604, %v605
    %v607 = vsel %vm145, %v592, 0.0
    %v608 = vadd.f32 %v606, %v607
    %v609 = vsel %vm145, %v594, 0.0
    %v610 = vadd.f32 %v608, %v609
    %v611 = vsel %vm145, %v596, 0.0
    %v612 = vadd.f32 %v610, %v611
    %v613 = vsel %vm145, %v598, 0.0
    %v614 = vadd.f32 %v612, %v613
    %v615 = vsel %vm145, %v600, 0.0
    %v616 = vadd.f32 %v614, %v615
    %v617 = vsel %vm145, %v602, 0.0
    %v618 = vadd.f32 %v616, %v617
    %v619 = vsel %vm145, %v589, 0.0
    %v620 = vsel %vm145, %v591, 0.0
    %v621 = vadd.f32 %v619, %v620
    %v622 = vsel %vm145, %v593, 0.0
    %v623 = vadd.f32 %v621, %v622
    %v624 = vsel %vm145, %v595, 0.0
    %v625 = vadd.f32 %v623, %v624
    %v626 = vsel %vm145, %v597, 0.0
    %v627 = vadd.f32 %v625, %v626
    %v628 = vsel %vm145, %v599, 0.0
    %v629 = vadd.f32 %v627, %v628
    %v630 = vsel %vm145, %v601, 0.0
    %v631 = vadd.f32 %v629, %v630
    %v632 = vsel %vm145, %v603, 0.0
    %v633 = vadd.f32 %v631, %v632
    %v634 = vadd.f32 %v586, %v618
    %v635 = vadd.f32 %v587, %v633
    %636 = vst.msk [vmem:[#allocation4] sm:$0xff] %vm145, %v634
    %637 = vst.msk [vmem:[#allocation4 + $0x8] sm:$0xff] %vm145, %v635
    %v638 = vld [vmem:[#allocation5] sm:$0xff]
    %v639 = vld [vmem:[#allocation5 + $0x8] sm:$0xff]
    %v640 = vmul.f32 %v579, %v638
    %v641 = vmul.f32 %v584, %v639
    %v642 = vmul.f32 %v492, %v105
    %v643 = vmul.f32 %v496, %v106
    %v644 = vmul.f32 %v503, %v107
    %v645 = vmul.f32 %v507, %v108
    %v646 = vmul.f32 %v514, %v109
    %v647 = vmul.f32 %v518, %v110
    %v648 = vmul.f32 %v525, %v111
    %v649 = vmul.f32 %v529, %v112
    %v650 = vmul.f32 %v536, %v113
    %v651 = vmul.f32 %v540, %v114
    %v652 = vmul.f32 %v547, %v115
    %v653 = vmul.f32 %v551, %v116
    %v654 = vmul.f32 %v558, %v117
    %v655 = vmul.f32 %v562, %v118
    %v656 = vmul.f32 %v569, %v119
    %v657 = vmul.f32 %v573, %v120
    %v658 = vsel %vm145, %v642, 0.0
    %v659 = vsel %vm145, %v644, 0.0
    %v660 = vadd.f32 %v658, %v659
    %v661 = vsel %vm145, %v646, 0.0
    %v662 = vadd.f32 %v660, %v661
    %v663 = vsel %vm145, %v648, 0.0
    %v664 = vadd.f32 %v662, %v663
    %v665 = vsel %vm145, %v650, 0.0
    %v666 = vadd.f32 %v664, %v665
    %v667 = vsel %vm145, %v652, 0.0
    %v668 = vadd.f32 %v666, %v667
    %v669 = vsel %vm145, %v654, 0.0
    %v670 = vadd.f32 %v668, %v669
    %v671 = vsel %vm145, %v656, 0.0
    %v672 = vadd.f32 %v670, %v671
    %v673 = vsel %vm145, %v643, 0.0
    %v674 = vsel %vm145, %v645, 0.0
    %v675 = vadd.f32 %v673, %v674
    %v676 = vsel %vm145, %v647, 0.0
    %v677 = vadd.f32 %v675, %v676
    %v678 = vsel %vm145, %v649, 0.0
    %v679 = vadd.f32 %v677, %v678
    %v680 = vsel %vm145, %v651, 0.0
    %v681 = vadd.f32 %v679, %v680
    %v682 = vsel %vm145, %v653, 0.0
    %v683 = vadd.f32 %v681, %v682
    %v684 = vsel %vm145, %v655, 0.0
    %v685 = vadd.f32 %v683, %v684
    %v686 = vsel %vm145, %v657, 0.0
    %v687 = vadd.f32 %v685, %v686
    %v688 = vadd.f32 %v640, %v672
    %v689 = vadd.f32 %v641, %v687
    %690 = vst.msk [vmem:[#allocation5] sm:$0xff] %vm145, %v688
    %691 = vst.msk [vmem:[#allocation5 + $0x8] sm:$0xff] %vm145, %v689
    %692 = vst.msk [vmem:[#allocation2] sm:$0x1] %vm452, %v429
  $region49: #{improved_bilstm_forward.9} parent=0 // pred_fallthru
    _
  // Predicated region
  $region50: #{improved_bilstm_forward.9} parent=0 // pred_check
    %p693 = pneg %p40
  $region51: #{improved_bilstm_forward.9} parent=0 // pred_check_branch
    %695 = sbr.rel (%p693) target = $region53
  $region52: #{improved_bilstm_forward.9} parent=0 // pred_region
    %v696 = vld [vmem:[#allocation3] sm:$0x1]
    %v697 = vrcp.pop %v696
    %v698 = vmul.f32 1.0, %v697
    %699 = vxpose.xlu0.b32.start [1/16] %v698, 128
    %700 = vxpose.xlu0.b32.cont [2/16] 0.0, 128
    %701 = vxpose.xlu0.b32.cont [3/16] 0.0, 128
    %702 = vxpose.xlu0.b32.cont [4/16] 0.0, 128
    %703 = vxpose.xlu0.b32.cont [5/16] 0.0, 128
    %704 = vxpose.xlu0.b32.cont [6/16] 0.0, 128
    %705 = vxpose.xlu0.b32.cont [7/16] 0.0, 128
    %706 = vxpose.xlu0.b32.cont [8/16] 0.0, 128
    %707 = vxpose.xlu0.b32.cont [9/16] 0.0, 128
    %708 = vxpose.xlu0.b32.cont [10/16] 0.0, 128
    %709 = vxpose.xlu0.b32.cont [11/16] 0.0, 128
    %710 = vxpose.xlu0.b32.cont [12/16] 0.0, 128
    %711 = vxpose.xlu0.b32.cont [13/16] 0.0, 128
    %712 = vxpose.xlu0.b32.cont [14/16] 0.0, 128
    %713 = vxpose.xlu0.b32.cont [15/16] 0.0, 128
    %714 = vxpose.xlu0.b32.end [16/16] 0.0, 128
    %v715 = vpop.trf.xlu0
    %v716 = vpop.trf.xlu0
    %v717 = vpop.trf.xlu0
    %v718 = vpop.trf.xlu0
    %v719 = vpop.trf.xlu0
    %v720 = vpop.trf.xlu0
    %v721 = vpop.trf.xlu0
    %v722 = vpop.trf.xlu0
    %v723 = vpop.trf.xlu0
    %v724 = vpop.trf.xlu0
    %v725 = vpop.trf.xlu0
    %v726 = vpop.trf.xlu0
    %v727 = vpop.trf.xlu0
    %v728 = vpop.trf.xlu0
    %v729 = vpop.trf.xlu0
    %v730 = vpop.trf.xlu0
    %v731 = vld [vmem:[#allocation4] sm:$0xff]
    %v732 = vld [vmem:[#allocation4 + $0x8] sm:$0xff]
    %734 = vset.pattern.permute.xlu0 0
    %735 = vperm.xlu0 %734, %v715
    %v736 = vpop.permute.xlu0 %735
    %739 = vset.pattern.permute.xlu0 0
    %740 = vperm.xlu0 %739, %v716
    %v741 = vpop.permute.xlu0 %740
    %v743 = vmul.f32 %v731, %v736
    %v744 = vmul.f32 %v732, %v741
    %v745 = vld [vmem:[#allocation5] sm:$0xff]
    %v746 = vld [vmem:[#allocation5 + $0x8] sm:$0xff]
    %v747 = vmul.f32 %v745, %v736
    %v748 = vmul.f32 %v746, %v741
    %v749 = vld [vmem:[%s6] sm:$0xff]
    %v750 = vld [vmem:[%s6 + $0x8] sm:$0xff]
    %v751 = vld [vmem:[%s6 + $0x10] sm:$0xff]
    %v752 = vld [vmem:[%s6 + $0x18] sm:$0xff]
    %v753 = vld [vmem:[%s7] sm:$0xff]
    %v754 = vld [vmem:[%s7 + $0x8] sm:$0xff]
    %v755 = vld [vmem:[%s7 + $0x10] sm:$0xff]
    %v756 = vld [vmem:[%s7 + $0x18] sm:$0xff]
    %vm757 = vcmask 261120
    %v759 = vsel %vm757, %v747, 0
    %v762 = vsel %vm757, %v748, 0
    %764 = vmatprep.subr.mxu0 0.0
    %765 = vmatpush1.msra.mxu0 0.0
    %766 = vmatprep.subr.mxu0 0.0
    %767 = vmatpush1.msra.mxu0 0.0
    %768 = vmatprep.subr.mxu0 0.0
    %769 = vmatpush1.msra.mxu0 0.0
    %770 = vmatprep.subr.mxu0 0.0
    %771 = vmatpush1.msra.mxu0 0.0
    %772 = vmatprep.subr.mxu0 0.0
    %773 = vmatpush1.msra.mxu0 0.0
    %774 = vmatprep.subr.mxu0 0.0
    %775 = vmatpush1.msra.mxu0 0.0
    %776 = vmatprep.subr.mxu0 0.0
    %777 = vmatpush1.msra.mxu0 0.0
    %778 = vmatprep.subr.mxu0 0.0
    %779 = vmatpush1.msra.mxu0 0.0
    %780 = vmatprep.subr.mxu0 0.0
    %781 = vmatpush1.msra.mxu0 0.0
    %782 = vmatprep.subr.mxu0 0.0
    %783 = vmatpush1.msra.mxu0 0.0
    %784 = vmatprep.subr.mxu0 0.0
    %785 = vmatpush1.msra.mxu0 0.0
    %786 = vmatprep.subr.mxu0 0.0
    %787 = vmatpush1.msra.mxu0 0.0
    %788 = vmatprep.subr.mxu0 0.0
    %789 = vmatpush1.msra.mxu0 %v756
    %790 = vmatprep.subr.mxu0 0.0
    %791 = vmatpush1.msra.mxu0 %v755
    %792 = vmatprep.subr.mxu0 0.0
    %793 = vmatpush1.msra.mxu0 %v754
    %794 = vmatprep.subr.mxu0 0.0
    %795 = vmatpush1.msra.mxu0 %v753
    %796 = vmatprep.subr.mxu0 0.0
    %797 = vmatpush2.msra.mxu0 0.0
    %798 = vmatprep.subr.mxu0 0.0
    %799 = vmatpush2.msra.mxu0 0.0
    %800 = vmatprep.subr.mxu0 0.0
    %801 = vmatpush2.msra.mxu0 0.0
    %802 = vmatprep.subr.mxu0 0.0
    %803 = vmatpush2.msra.mxu0 0.0
    %804 = vmatprep.subr.mxu0 0.0
    %805 = vmatpush2.msra.mxu0 0.0
    %806 = vmatprep.subr.mxu0 0.0
    %807 = vmatpush2.msra.mxu0 0.0
    %808 = vmatprep.subr.mxu0 0.0
    %809 = vmatpush2.msra.mxu0 0.0
    %810 = vmatprep.subr.mxu0 0.0
    %811 = vmatpush2.msra.mxu0 0.0
    %812 = vmatprep.subr.mxu0 0.0
    %813 = vmatpush2.msra.mxu0 0.0
    %814 = vmatprep.subr.mxu0 0.0
    %815 = vmatpush2.msra.mxu0 0.0
    %816 = vmatprep.subr.mxu0 0.0
    %817 = vmatpush2.msra.mxu0 0.0
    %818 = vmatprep.subr.mxu0 0.0
    %819 = vmatpush2.msra.mxu0 0.0
    %820 = vmatprep.subr.mxu0 0.0
    %821 = vmatpush2.msra.mxu0 0.0
    %822 = vmatprep.subr.mxu0 0.0
    %823 = vmatpush2.msra.mxu0 0.0
    %824 = vmatprep.subr.mxu0 0.0
    %825 = vmatpush2.msra.mxu0 0.0
    %826 = vmatprep.subr.mxu0 0.0
    %827 = vmatpush2.msra.mxu0 0.0
    %828 = vmatprep.mubr.f32.mxu0 0.0
    %829 = vmatmul.mubr.f32.gmra.mxu0 %v759
    %v830 = vpop.f32.mrf.mxu0
    %v831 = vadd.f32 0.0, %v830
    %v832 = vpop.f32.mrf.mxu0
    %833 = vmatprep.mubr.f32.mxu0 0.0
    %834 = vmatmul.mubr.f32.gmra.mxu0 %v762
    %v835 = vpop.f32.mrf.mxu0
    %v836 = vadd.f32 0.0, %v835
    %v837 = vpop.f32.mrf.mxu0
    %838 = vdwg.mxu0
    %v840 = vsel %vm757, %v743, 0
    %v843 = vsel %vm757, %v744, 0
    %845 = vmatprep.subr.mxu0 0.0
    %846 = vmatpush1.msra.mxu0 0.0
    %847 = vmatprep.subr.mxu0 0.0
    %848 = vmatpush1.msra.mxu0 0.0
    %849 = vmatprep.subr.mxu0 0.0
    %850 = vmatpush1.msra.mxu0 0.0
    %851 = vmatprep.subr.mxu0 0.0
    %852 = vmatpush1.msra.mxu0 0.0
    %853 = vmatprep.subr.mxu0 0.0
    %854 = vmatpush1.msra.mxu0 0.0
    %855 = vmatprep.subr.mxu0 0.0
    %856 = vmatpush1.msra.mxu0 0.0
    %857 = vmatprep.subr.mxu0 0.0
    %858 = vmatpush1.msra.mxu0 0.0
    %859 = vmatprep.subr.mxu0 0.0
    %860 = vmatpush1.msra.mxu0 0.0
    %861 = vmatprep.subr.mxu0 0.0
    %862 = vmatpush1.msra.mxu0 0.0
    %863 = vmatprep.subr.mxu0 0.0
    %864 = vmatpush1.msra.mxu0 0.0
    %865 = vmatprep.subr.mxu0 0.0
    %866 = vmatpush1.msra.mxu0 0.0
    %867 = vmatprep.subr.mxu0 0.0
    %868 = vmatpush1.msra.mxu0 0.0
    %869 = vmatprep.subr.mxu0 0.0
    %870 = vmatpush1.msra.mxu0 %v752
    %871 = vmatprep.subr.mxu0 0.0
    %872 = vmatpush1.msra.mxu0 %v751
    %873 = vmatprep.subr.mxu0 0.0
    %874 = vmatpush1.msra.mxu0 %v750
    %875 = vmatprep.subr.mxu0 0.0
    %876 = vmatpush1.msra.mxu0 %v749
    %877 = vmatprep.subr.mxu0 0.0
    %878 = vmatpush2.msra.mxu0 0.0
    %879 = vmatprep.subr.mxu0 0.0
    %880 = vmatpush2.msra.mxu0 0.0
    %881 = vmatprep.subr.mxu0 0.0
    %882 = vmatpush2.msra.mxu0 0.0
    %883 = vmatprep.subr.mxu0 0.0
    %884 = vmatpush2.msra.mxu0 0.0
    %885 = vmatprep.subr.mxu0 0.0
    %886 = vmatpush2.msra.mxu0 0.0
    %887 = vmatprep.subr.mxu0 0.0
    %888 = vmatpush2.msra.mxu0 0.0
    %889 = vmatprep.subr.mxu0 0.0
    %890 = vmatpush2.msra.mxu0 0.0
    %891 = vmatprep.subr.mxu0 0.0
    %892 = vmatpush2.msra.mxu0 0.0
    %893 = vmatprep.subr.mxu0 0.0
    %894 = vmatpush2.msra.mxu0 0.0
    %895 = vmatprep.subr.mxu0 0.0
    %896 = vmatpush2.msra.mxu0 0.0
    %897 = vmatprep.subr.mxu0 0.0
    %898 = vmatpush2.msra.mxu0 0.0
    %899 = vmatprep.subr.mxu0 0.0
    %900 = vmatpush2.msra.mxu0 0.0
    %901 = vmatprep.subr.mxu0 0.0
    %902 = vmatpush2.msra.mxu0 0.0
    %903 = vmatprep.subr.mxu0 0.0
    %904 = vmatpush2.msra.mxu0 0.0
    %905 = vmatprep.subr.mxu0 0.0
    %906 = vmatpush2.msra.mxu0 0.0
    %907 = vmatprep.subr.mxu0 0.0
    %908 = vmatpush2.msra.mxu0 0.0
    %909 = vmatprep.mubr.f32.mxu0 0.0
    %910 = vmatmul.mubr.f32.gmra.mxu0 %v840
    %v911 = vpop.f32.mrf.mxu0
    %v912 = vadd.f32 %v831, %v911
    %v913 = vpop.f32.mrf.mxu0
    %914 = vmatprep.mubr.f32.mxu0 0.0
    %915 = vmatmul.mubr.f32.gmra.mxu0 %v843
    %v916 = vpop.f32.mrf.mxu0
    %v917 = vadd.f32 %v836, %v916
    %v918 = vpop.f32.mrf.mxu0
    %919 = vdwg.mxu0
    %v920 = vld [vmem:[%s8] sm:$0x1]
    %v922 = vlaneseq
    %v923 = vshrl.u32 %v922, 7
    %v924 = vsub.s32 0, %v923
    %v925 = vrot.slane %v920, %v924
    %v927 = vadd.f32 %v912, %v925
    %v928 = vadd.f32 %v917, %v925
    %v929 = vmax.f32 %v927, 0.0
    %v930 = vmax.f32 %v928, 0.0
    %v931 = vld [vmem:[%s9] sm:$0xff]
    %v932 = vld [vmem:[%s9 + $0x8] sm:$0xff]
    %v933 = vld [vmem:[%s9 + $0x10] sm:$0xff]
    %v934 = vld [vmem:[%s9 + $0x18] sm:$0xff]
    %v935 = vld [vmem:[%s10] sm:$0x1]
    %v937 = vlaneseq
    %v938 = vshrl.u32 %v937, 7
    %v939 = vsub.s32 0, %v938
    %v940 = vrot.slane %v935, %v939
    %v943 = vsel %vm757, %v929, 0
    %v946 = vsel %vm757, %v930, 0
    %948 = vmatprep.subr.mxu0 0.0
    %949 = vmatpush1.msra.mxu0 0.0
    %950 = vmatprep.subr.mxu0 0.0
    %951 = vmatpush1.msra.mxu0 0.0
    %952 = vmatprep.subr.mxu0 0.0
    %953 = vmatpush1.msra.mxu0 0.0
    %954 = vmatprep.subr.mxu0 0.0
    %955 = vmatpush1.msra.mxu0 0.0
    %956 = vmatprep.subr.mxu0 0.0
    %957 = vmatpush1.msra.mxu0 0.0
    %958 = vmatprep.subr.mxu0 0.0
    %959 = vmatpush1.msra.mxu0 0.0
    %960 = vmatprep.subr.mxu0 0.0
    %961 = vmatpush1.msra.mxu0 0.0
    %962 = vmatprep.subr.mxu0 0.0
    %963 = vmatpush1.msra.mxu0 0.0
    %964 = vmatprep.subr.mxu0 0.0
    %965 = vmatpush1.msra.mxu0 0.0
    %966 = vmatprep.subr.mxu0 0.0
    %967 = vmatpush1.msra.mxu0 0.0
    %968 = vmatprep.subr.mxu0 0.0
    %969 = vmatpush1.msra.mxu0 0.0
    %970 = vmatprep.subr.mxu0 0.0
    %971 = vmatpush1.msra.mxu0 0.0
    %972 = vmatprep.subr.mxu0 0.0
    %973 = vmatpush1.msra.mxu0 %v934
    %974 = vmatprep.subr.mxu0 0.0
    %975 = vmatpush1.msra.mxu0 %v933
    %976 = vmatprep.subr.mxu0 0.0
    %977 = vmatpush1.msra.mxu0 %v932
    %978 = vmatprep.subr.mxu0 0.0
    %979 = vmatpush1.msra.mxu0 %v931
    %980 = vmatprep.subr.mxu0 0.0
    %981 = vmatpush2.msra.mxu0 0.0
    %982 = vmatprep.subr.mxu0 0.0
    %983 = vmatpush2.msra.mxu0 0.0
    %984 = vmatprep.subr.mxu0 0.0
    %985 = vmatpush2.msra.mxu0 0.0
    %986 = vmatprep.subr.mxu0 0.0
    %987 = vmatpush2.msra.mxu0 0.0
    %988 = vmatprep.subr.mxu0 0.0
    %989 = vmatpush2.msra.mxu0 0.0
    %990 = vmatprep.subr.mxu0 0.0
    %991 = vmatpush2.msra.mxu0 0.0
    %992 = vmatprep.subr.mxu0 0.0
    %993 = vmatpush2.msra.mxu0 0.0
    %994 = vmatprep.subr.mxu0 0.0
    %995 = vmatpush2.msra.mxu0 0.0
    %996 = vmatprep.subr.mxu0 0.0
    %997 = vmatpush2.msra.mxu0 0.0
    %998 = vmatprep.subr.mxu0 0.0
    %999 = vmatpush2.msra.mxu0 0.0
    %1000 = vmatprep.subr.mxu0 0.0
    %1001 = vmatpush2.msra.mxu0 0.0
    %1002 = vmatprep.subr.mxu0 0.0
    %1003 = vmatpush2.msra.mxu0 0.0
    %1004 = vmatprep.subr.mxu0 0.0
    %1005 = vmatpush2.msra.mxu0 0.0
    %1006 = vmatprep.subr.mxu0 0.0
    %1007 = vmatpush2.msra.mxu0 0.0
    %1008 = vmatprep.subr.mxu0 0.0
    %1009 = vmatpush2.msra.mxu0 0.0
    %1010 = vmatprep.subr.mxu0 0.0
    %1011 = vmatpush2.msra.mxu0 0.0
    %1012 = vmatprep.mubr.f32.mxu0 0.0
    %1013 = vmatmul.mubr.f32.gmra.mxu0 %v943
    %v1014 = vpop.f32.mrf.mxu0
    %v1015 = vadd.f32 %v940, %v1014
    %v1016 = vpop.f32.mrf.mxu0
    %1017 = vmatprep.mubr.f32.mxu0 0.0
    %1018 = vmatmul.mubr.f32.gmra.mxu0 %v946
    %v1019 = vpop.f32.mrf.mxu0
    %v1020 = vadd.f32 %v940, %v1019
    %v1021 = vpop.f32.mrf.mxu0
    %1022 = vdwg.mxu0
    %vm1023 = vcmask 31744
    %1024 = vst.msk [vmem:[%s11] sm:$0xff] %vm1023, %v1015
    %1025 = vst.msk [vmem:[%s11 + $0x8] sm:$0xff] %vm1023, %v1020
  $region53: #{improved_bilstm_forward.9} parent=0 // pred_fallthru
    _
  // Predicated region
  $region54: #{improved_bilstm_forward.9} parent=0 // pred_check
    _
  $region55: #{improved_bilstm_forward.9} parent=0 // pred_check_branch
    %1027 = sbr.rel (0) target = $region57
  $region56: #{improved_bilstm_forward.9} parent=0 // pred_region
    _
  $region57: #{improved_bilstm_forward.9} parent=0 // pred_fallthru
    _
  // Predicated region
  $region58: #{improved_bilstm_forward.9} parent=0 // pred_check
    _
  $region59: #{improved_bilstm_forward.9} parent=0 // pred_check_branch
    %1029 = sbr.rel (0) target = $region61
  $region60: #{improved_bilstm_forward.9} parent=0 // pred_region
    _
  $region61: #{improved_bilstm_forward.9} parent=0 // pred_fallthru
    _

</llo_original>
